<compile_context>
chip_gen: v7x
topology: tpu7x:2x2x1
jax: 0.10.0
libtpu: 0.0.40
codegen_flags: <defaults>
</compile_context>

<pallas_src>
import functools

import jax
import jax.numpy as jnp
from jax.experimental import pallas as pl
from jax.experimental.pallas import tpu as pltpu


# --------------------------------------------------------------------------
# in-kernel helpers
# --------------------------------------------------------------------------
def _conv_taps(xext, w2d, K, out_t):
    """1-D conv as K accumulated MXU dots.

    xext: (Cin, out_t + K - 1) extended window, w2d: (Cout, K*Cin).
    Returns (Cout, out_t) in f32.
    """
    cin = xext.shape[0]
    acc = None
    for k in range(K):
        wk = w2d[:, k * cin:(k + 1) * cin]                       # (Cout, Cin)
        part = jnp.dot(wk, xext[:, k:k + out_t].astype(wk.dtype),
                       preferred_element_type=jnp.float32)
        acc = part if acc is None else acc + part
    return acc


def _accumulate_stats(st_ref, acc, t):
    """Accumulate per-channel (sum, sum_sq) into the VMEM-resident (1, C, 2)
    output block; HBM writeback happens only when the batch row changes."""
    s1 = jnp.sum(acc, axis=-1, keepdims=True)                    # (C, 1)
    s2 = jnp.sum(acc * acc, axis=-1, keepdims=True)              # (C, 1)
    st = jnp.concatenate([s1, s2], axis=-1)[None]                # (1, C, 2)

    @pl.when(t == 0)
    def _():
        st_ref[...] = st

    @pl.when(t > 0)
    def _():
        st_ref[...] = st_ref[...] + st


def _halo_cols(h_ref, whole_row):
    if whole_row:
        return h_ref[0, pl.program_id(1)]                        # (C, hw)
    return h_ref[0, 0]


# --------------------------------------------------------------------------
# kernels
# --------------------------------------------------------------------------
def _stats1_kernel(*refs, K, tile_t, l_pad, r_pad, halo_whole_row):
    """Pass A: conv1 + bias over one (Cin, tile_t) tile; emit BN1 partial
    stats only.  y1 is never written to HBM."""
    if l_pad + r_pad:
        x_ref, h_ref, w_ref, b_ref, st_ref = refs
    else:
        x_ref, w_ref, b_ref, st_ref = refs
        h_ref = None
    t = pl.program_id(1)

    xt = x_ref[0]                                                # (Cin, tile_t)
    if h_ref is not None:
        h = _halo_cols(h_ref, halo_whole_row)                    # (Cin, 2*(K-1))
        parts = []
        if l_pad:
            parts.append(h[:, l_pad:2 * l_pad])                  # inner left
        parts.append(xt)
        if r_pad:
            parts.append(h[:, 2 * l_pad:2 * l_pad + r_pad])      # inner right
        xt = jnp.concatenate(parts, axis=-1)                     # (Cin, tile_t+K-1)

    acc = _conv_taps(xt, w_ref[...], K, tile_t)
    acc = acc + b_ref[...].astype(jnp.float32)
    _accumulate_stats(st_ref, acc, t)


def _fused_kernel(*refs, K, tile_t, l_pad, r_pad, halo_whole_row):
    """Pass B: recompute conv1 on the extended window, bn1 + relu + residual,
    conv2 + bias2, write the y2 tile and BN2 partial stats.

    c1 (and y1) never touch HBM."""
    if l_pad + r_pad:
        (x_ref, h_ref, sc_ref, sh_ref, w1_ref, b1_ref, w2_ref, b2_ref,
         y_ref, st_ref) = refs
    else:
        (x_ref, sc_ref, sh_ref, w1_ref, b1_ref, w2_ref, b2_ref,
         y_ref, st_ref) = refs
        h_ref = None
    t = pl.program_id(1)
    n_t = pl.num_programs(1)
    pad = l_pad + r_pad
    W = tile_t + pad                                             # conv2 input width

    xt = x_ref[0]                                                # (Cin, tile_t)
    if h_ref is not None:
        h = _halo_cols(h_ref, halo_whole_row)                    # (Cin, 2*pad)
        parts = []
        if l_pad:
            parts.append(h[:, :2 * l_pad])
        parts.append(xt)
        if r_pad:
            parts.append(h[:, 2 * l_pad:])
        x_ext = jnp.concatenate(parts, axis=-1)                  # (Cin, tile_t+2*pad)
    else:
        x_ext = xt

    # conv1 + bias over W positions (the tile plus conv2's halo positions).
    acc1 = _conv_taps(x_ext, w1_ref[...], K, W)
    acc1 = acc1 + b1_ref[...].astype(jnp.float32)
    # bn1 (global affine) + relu + residual, in f32.
    if pad:
        xres = x_ext[:, l_pad:l_pad + W].astype(jnp.float32)
    else:
        xres = x_ext.astype(jnp.float32)
    c1 = jnp.maximum(acc1 * sc_ref[...] + sh_ref[...], 0.0) + xres   # (Cin, W)

    # conv2's SAME padding reflects c1 itself at the sequence edges: on the
    # edge tiles, replace the halo columns with the reflected interior columns.
    if pad:
        if l_pad:
            lsrc = jnp.concatenate(
                [c1[:, 2 * l_pad - i:2 * l_pad - i + 1] for i in range(l_pad)],
                axis=-1)
            c1_l = jnp.where(t == 0, lsrc, c1[:, :l_pad])
        if r_pad:
            rsrc = jnp.concatenate(
                [c1[:, tile_t + l_pad - 2 - j:tile_t + l_pad - 1 - j]
                 for j in range(r_pad)], axis=-1)
            c1_r = jnp.where(t == n_t - 1, rsrc, c1[:, l_pad + tile_t:])
        parts = []
        if l_pad:
            parts.append(c1_l)
        parts.append(c1[:, l_pad:l_pad + tile_t])
        if r_pad:
            parts.append(c1_r)
        c1 = jnp.concatenate(parts, axis=-1)                     # (Cin, W)

    acc2 = _conv_taps(c1, w2_ref[...], K, tile_t)
    acc2 = acc2 + b2_ref[...].astype(jnp.float32)
    y_ref[...] = acc2[None].astype(y_ref.dtype)
    _accumulate_stats(st_ref, acc2, t)


def _bn_relu_kernel(y_ref, sc_ref, sh_ref, o_ref):
    """Pass C: final bn2 (affine) + relu."""
    y = y_ref[0].astype(jnp.float32)
    o = jnp.maximum(y * sc_ref[...] + sh_ref[...], 0.0)
    o_ref[...] = o[None].astype(o_ref.dtype)


# --------------------------------------------------------------------------
# host-side glue
# --------------------------------------------------------------------------
def _pick_tile(T, per_col_bytes, budget_bytes, max_tile):
    """Largest lane-aligned divisor of T whose per-step footprint fits."""
    cands = [c for c in (4096, 3072, 2048, 1536, 1024, 768, 512, 384, 256, 128)
             if c <= max_tile and c <= T and T % c == 0]
    for c in cands:
        if c * per_col_bytes <= budget_bytes:
            return c
    if cands:
        return cands[-1]
    # TODO(synk): pad T to a multiple of 128 instead of one ragged tile.
    return T


def _build_halo(a, tile_t, n_t, lw, rw):
    """Reflected halo columns per T-tile: (N, C, T) -> (N, n_t, C, lw + rw).

    This *is* ReflectionPad1d — only these few columns are materialized,
    never a full padded copy of the activation."""
    T = a.shape[-1]
    starts = jnp.arange(n_t) * tile_t
    idx_l = starts[:, None] - lw + jnp.arange(lw)[None, :]
    idx_r = starts[:, None] + tile_t + jnp.arange(rw)[None, :]
    idx = jnp.concatenate([idx_l, idx_r], axis=-1)               # (n_t, lw+rw)
    idx = jnp.where(idx < 0, -idx, idx)                          # left reflect
    idx = jnp.where(idx > T - 1, 2 * (T - 1) - idx, idx)         # right reflect
    h = a[:, :, idx]                                             # (N, C, n_t, lw+rw)
    return jnp.transpose(h, (0, 2, 1, 3))


def _halo_spec(n_t, C, hw, whole_row):
    if whole_row:
        # t-constant block index: DMA'd once per batch row, sliced in-kernel.
        return pl.BlockSpec((1, n_t, C, hw), lambda n, t: (n, 0, 0, 0))
    return pl.BlockSpec((1, 1, C, hw), lambda n, t: (n, t, 0, 0))


def _const_spec(shape, nbytes):
    """Grid-constant block; single-buffer it once it gets big (saves VMEM)."""
    kwargs = {}
    if nbytes > (2 << 20):
        kwargs["pipeline_mode"] = pl.Buffered(1)
    return pl.BlockSpec(shape, lambda n, t: (0,) * len(shape), **kwargs)


def _compiler_params(semantics, est_vmem_bytes):
    limit = int(min(max(2 * est_vmem_bytes + (4 << 20), 32 << 20), 64 << 20))
    return pltpu.CompilerParams(dimension_semantics=semantics,
                                vmem_limit_bytes=limit)


def _bn_affine(stats, gamma, beta, count, eps):
    """(N, C, 2) partial sums -> per-channel affine (scale, shift) for y*s+t.

    TODO(synk): single-pass E[x^2]-mean^2 in f32; switch to shifted sums if
    activations develop a large common-mode offset (catastrophic cancellation).
    """
    s = jnp.sum(stats.astype(jnp.float32), axis=0)               # (C, 2)
    mean = s[:, 0] / count
    var = jnp.maximum(s[:, 1] / count - mean * mean, 0.0)        # biased (train)
    inv = jax.lax.rsqrt(var + eps)
    scale = gamma.astype(jnp.float32) * inv
    shift = beta.astype(jnp.float32) - mean * scale
    return scale[:, None], shift[:, None]                        # (C, 1) each


def _stats_pass(x, halo, w2d, b, *, K, tile_t, n_t, l_pad, r_pad,
                halo_whole_row, est_vmem):
    N, Cin, T = x.shape
    C = w2d.shape[0]
    isz = int(x.dtype.itemsize)
    kern = functools.partial(_stats1_kernel, K=K, tile_t=tile_t,
                             l_pad=l_pad, r_pad=r_pad,
                             halo_whole_row=halo_whole_row)
    in_specs = [pl.BlockSpec((1, Cin, tile_t), lambda n, t: (n, 0, t))]
    args = [x]
    if halo is not None:
        in_specs.append(_halo_spec(n_t, Cin, halo.shape[-1], halo_whole_row))
        args.append(halo)
    in_specs += [_const_spec((C, K * Cin), w2d.size * isz),
                 _const_spec((C, 1), C * isz)]
    args += [w2d, b.reshape(C, 1)]
    flops = 2 * N * T * K * Cin * C
    halo_sz = halo.size if halo is not None else 0
    bytes_accessed = isz * (x.size + halo_sz + w2d.size + C) + 4 * N * C * 2
    return pl.pallas_call(
        kern,
        grid=(N, n_t),
        in_specs=in_specs,
        out_specs=pl.BlockSpec((1, C, 2), lambda n, t: (n, 0, 0)),
        out_shape=jax.ShapeDtypeStruct((N, C, 2), jnp.float32),
        compiler_params=_compiler_params(("parallel", "arbitrary"), est_vmem),
        cost_estimate=pl.CostEstimate(flops=int(flops), transcendentals=0,
                                      bytes_accessed=int(bytes_accessed)),
    )(*args)


def _fused_pass(x, halo, sc1, sh1, w1_2d, b1, w2_2d, b2, *, K, tile_t, n_t,
                l_pad, r_pad, halo_whole_row, est_vmem):
    N, Cin, T = x.shape
    Cout = w2_2d.shape[0]
    isz = int(x.dtype.itemsize)
    kern = functools.partial(_fused_kernel, K=K, tile_t=tile_t,
                             l_pad=l_pad, r_pad=r_pad,
                             halo_whole_row=halo_whole_row)
    in_specs = [pl.BlockSpec((1, Cin, tile_t), lambda n, t: (n, 0, t))]
    args = [x]
    if halo is not None:
        in_specs.append(_halo_spec(n_t, Cin, halo.shape[-1], halo_whole_row))
        args.append(halo)
    in_specs += [_const_spec((Cin, 1), 4 * Cin),
                 _const_spec((Cin, 1), 4 * Cin),
                 _const_spec((Cin, K * Cin), w1_2d.size * isz),
                 _const_spec((Cin, 1), Cin * isz),
                 _const_spec((Cout, K * Cin), w2_2d.size * isz),
                 _const_spec((Cout, 1), Cout * isz)]
    args += [sc1, sh1, w1_2d, b1.reshape(Cin, 1), w2_2d, b2.reshape(Cout, 1)]
    out_shape = (jax.ShapeDtypeStruct((N, Cout, T), x.dtype),
                 jax.ShapeDtypeStruct((N, Cout, 2), jnp.float32))
    out_specs = (pl.BlockSpec((1, Cout, tile_t), lambda n, t: (n, 0, t)),
                 pl.BlockSpec((1, Cout, 2), lambda n, t: (n, 0, 0)))
    flops = 2 * N * T * K * Cin * (Cin + Cout) + 6 * N * T * Cin
    halo_sz = halo.size if halo is not None else 0
    bytes_accessed = isz * (x.size + halo_sz + w1_2d.size + w2_2d.size
                            + N * Cout * T) + 4 * (N * Cout * 2 + 2 * Cin)
    return pl.pallas_call(
        kern,
        grid=(N, n_t),
        in_specs=in_specs,
        out_specs=out_specs,
        out_shape=out_shape,
        compiler_params=_compiler_params(("parallel", "arbitrary"), est_vmem),
        cost_estimate=pl.CostEstimate(flops=int(flops), transcendentals=0,
                                      bytes_accessed=int(bytes_accessed)),
    )(*args)


def _bn_relu_pass(y, sc, sh, out_dtype, *, budget_bytes=20 << 20):
    N, C, T = y.shape
    isz = int(y.dtype.itemsize)
    per_col = 4 * C * isz + 4 * C            # double-buffered in/out + f32 temp
    tile = _pick_tile(T, per_col, budget_bytes, 8192)
    if T % tile:
        tile = T
    n_t = T // tile
    vec = _const_spec((C, 1), 4 * C)
    est_vmem = tile * per_col + 8 * C
    return pl.pallas_call(
        _bn_relu_kernel,
        grid=(N, n_t),
        in_specs=[pl.BlockSpec((1, C, tile), lambda n, t: (n, 0, t)), vec, vec],
        out_specs=pl.BlockSpec((1, C, tile), lambda n, t: (n, 0, t)),
        out_shape=jax.ShapeDtypeStruct((N, C, T), out_dtype),
        input_output_aliases={0: 0},         # reuse y2's HBM buffer in place
        compiler_params=_compiler_params(("parallel", "parallel"), est_vmem),
        cost_estimate=pl.CostEstimate(flops=3 * N * C * T, transcendentals=0,
                                      bytes_accessed=2 * isz * N * C * T),
    )(y, sc, sh)


def res_convblock(x, params, *, eps=1e-5, tile_t=None):
    """Res_ConvBlock forward.  x: (N, Cin, T) (PyTorch layout) -> (N, Cout, T).

    Weight convention (matches the pure-JAX reference below):
      w1: (K, Cin, Cin), w2: (K, Cin, Cout) with w[k, i, o] on tap k.
    """
    N, Cin, T = x.shape
    w1, b1, g1, be1 = params["w1"], params["b1"], params["g1"], params["beta1"]
    w2, b2, g2, be2 = params["w2"], params["b2"], params["g2"], params["beta2"]
    K = w1.shape[0]
    Cout = w2.shape[2]
    l_pad = (K - 1) // 2
    r_pad = (K - 1) - l_pad
    isz = int(x.dtype.itemsize)

    # Per-lane-column footprint of pass B (double-buffered x/y2 tiles plus the
    # f32 extended-window temporaries) -> adaptive tile_t + VMEM limit.
    per_col = (3 * Cin + 2 * Cout) * isz + 4 * (3 * Cin + 2 * Cout)
    tt = tile_t if tile_t is not None else _pick_tile(T, per_col, 20 << 20, 2048)
    assert T % tt == 0, (T, tt)
    n_t = T // tt
    count = N * T

    weight_bytes = (w1.size + w2.size) * isz
    est_vmem = tt * per_col + weight_bytes + (64 << 10)

    # (K, Cin, C) -> (C, K*Cin): per-tap weight blocks sliced in-kernel.
    w1_2d = jnp.transpose(w1, (2, 0, 1)).reshape(Cin, K * Cin)
    w2_2d = jnp.transpose(w2, (2, 0, 1)).reshape(Cout, K * Cin)

    # Reflected halo columns, 2*(K-1) per tile: pass A uses the inner K-1,
    # pass B the full width (it recomputes conv1 for conv2's halo positions).
    halo = None
    halo_whole_row = True
    if K > 1:
        halo = _build_halo(x, tt, n_t, 2 * l_pad, 2 * r_pad)
        halo_whole_row = (halo.size // N) * isz <= (2 << 20)
        est_vmem += ((halo.size // N if halo_whole_row
                      else Cin * 2 * (K - 1)) * isz * 2)

    # Pass A: BN1 statistics of conv1(x)+b1 (stats only; y1 never hits HBM).
    st1 = _stats_pass(x, halo, w1_2d, b1, K=K, tile_t=tt, n_t=n_t,
                      l_pad=l_pad, r_pad=r_pad,
                      halo_whole_row=halo_whole_row, est_vmem=est_vmem)
    sc1, sh1 = _bn_affine(st1, g1, be1, count, eps)

    # Pass B: recompute conv1 -> bn1 -> relu -> +x -> conv2 + b2, BN2 stats.
    y2, st2 = _fused_pass(x, halo, sc1, sh1, w1_2d, b1, w2_2d, b2,
                          K=K, tile_t=tt, n_t=n_t, l_pad=l_pad, r_pad=r_pad,
                          halo_whole_row=halo_whole_row, est_vmem=est_vmem)
    sc2, sh2 = _bn_affine(st2, g2, be2, count, eps)

    # Pass C: bn2 + relu (larger tiles, output aliased onto y2's buffer).
    return _bn_relu_pass(y2, sc2, sh2, x.dtype)


# --------------------------------------------------------------------------
# pure-JAX reference (same math)
# --------------------------------------------------------------------------
def _ref_layer(x, w, b, gamma, beta, eps=1e-5):
    K = w.shape[0]
    lp = (K - 1) // 2
    rp = (K - 1) - lp
    xpad = jnp.pad(x, ((0, 0), (0, 0), (lp, rp)), mode="reflect")
    T = x.shape[-1]
    acc = sum(jnp.einsum("io,nit->not", w[k], xpad[:, :, k:k + T])
              for k in range(K)) + b[None, :, None]
    mean = jnp.mean(acc, axis=(0, 2), keepdims=True)
    var = jnp.mean((acc - mean) ** 2, axis=(0, 2), keepdims=True)
    y = (acc - mean) / jnp.sqrt(var + eps) * gamma[None, :, None] \
        + beta[None, :, None]
    return jnp.maximum(y, 0.0)


def res_convblock_ref(x, p, eps=1e-5):
    c1 = _ref_layer(x, p["w1"], p["b1"], p["g1"], p["beta1"], eps) + x
    return _ref_layer(c1, p["w2"], p["b2"], p["g2"], p["beta2"], eps)


# --------------------------------------------------------------------------
if __name__ == "__main__":
    N, Cin, Cout, T, K = 2, 4, 8, 1024, 3

    key = jax.random.PRNGKey(0)
    kx, kw1, kb1, kw2, kb2, kg1, kg2, kt1, kt2 = jax.random.split(key, 9)

    x = jax.random.normal(kx, (N, Cin, T), dtype=jnp.float32)
    s = 1.0 / (Cin * K) ** 0.5
    params = {
        "w1": jax.random.uniform(kw1, (K, Cin, Cin), jnp.float32, -s, s),
        "b1": jax.random.uniform(kb1, (Cin,), jnp.float32, -s, s),
        "g1": jax.random.uniform(kg1, (Cin,), jnp.float32, 0.5, 1.5),
        "beta1": jax.random.uniform(kt1, (Cin,), jnp.float32, -0.2, 0.2),
        "w2": jax.random.uniform(kw2, (K, Cin, Cout), jnp.float32, -s, s),
        "b2": jax.random.uniform(kb2, (Cout,), jnp.float32, -s, s),
        "g2": jax.random.uniform(kg2, (Cout,), jnp.float32, 0.5, 1.5),
        "beta2": jax.random.uniform(kt2, (Cout,), jnp.float32, -0.2, 0.2),
    }

    ref = jax.block_until_ready(res_convblock_ref(x, params))

    # Default (adaptive tile_t => single tile per row at this small T).
    out = jax.block_until_ready(jax.jit(res_convblock)(x, params))
    assert out.shape == (N, Cout, T), out.shape
    err = float(jnp.max(jnp.abs(out - ref)))
    assert err < 5e-4, err

    # Multi-tile config: exercises interior halo boundaries and the
    # edge-reflection fix-up paths.
    out2 = jax.block_until_ready(
        jax.jit(functools.partial(res_convblock, tile_t=256))(x, params))
    err2 = float(jnp.max(jnp.abs(out2 - ref)))
    assert err2 < 5e-4, err2

    print("KERNEL_OK")
</pallas_src>

<mosaic_0001>
module attributes {stable_mosaic.version = 11 : i64} {
  func.func @_stats1_kernel(%arg0: i32, %arg1: i32, %arg2: memref<1x4x1024xf32, #tpu.memory_space<vmem>>, %arg3: memref<1x1x4x4xf32, #tpu.memory_space<vmem>>, %arg4: memref<4x12xf32, #tpu.memory_space<vmem>>, %arg5: memref<4x1xf32, #tpu.memory_space<vmem>>, %arg6: memref<1x4x2xf32, #tpu.memory_space<vmem>>) attributes {dimension_semantics = [#tpu.dimension_semantics<parallel>, #tpu.dimension_semantics<arbitrary>], iteration_bounds = array<i64: 2, 1>, scalar_prefetch = 0 : i64, scratch_operands = 0 : i64, tpu.core_type = #tpu.core_type<tc>, window_params = [{transform_indices = @transform_0, window_bounds = array<i64: 1, 4, 1024>}, {transform_indices = @transform_1, window_bounds = array<i64: 1, 1, 4, 4>}, {pipeline_mode = #tpu.pipeline_mode<synchronous>, transform_indices = @transform_2, window_bounds = array<i64: 4, 12>}, {pipeline_mode = #tpu.pipeline_mode<synchronous>, transform_indices = @transform_3, window_bounds = array<i64: 4, 1>}, {transform_indices = @transform_4, window_bounds = array<i64: 1, 4, 2>}]} {
    %c0 = arith.constant 0 : index
    %c0_0 = arith.constant 0 : index
    %c0_1 = arith.constant 0 : index
    %0 = vector.load %arg2[%c0, %c0_0, %c0_1] : memref<1x4x1024xf32, #tpu.memory_space<vmem>>, vector<1x4x1024xf32>
    %1 = vector.shape_cast %0 : vector<1x4x1024xf32> to vector<4x1024xf32>
    %c0_2 = arith.constant 0 : index
    %2 = arith.index_cast %arg1 : i32 to index
    %c0_3 = arith.constant 0 : index
    %c0_4 = arith.constant 0 : index
    %3 = vector.load %arg3[%c0_2, %2, %c0_3, %c0_4] : memref<1x1x4x4xf32, #tpu.memory_space<vmem>>, vector<1x1x4x4xf32>
    %4 = vector.shape_cast %3 : vector<1x1x4x4xf32> to vector<4x4xf32>
    %5 = vector.extract_strided_slice %4 {offsets = [0, 1], sizes = [4, 1], strides = [1, 1]} : vector<4x4xf32> to vector<4x1xf32>
    %6 = vector.extract_strided_slice %4 {offsets = [0, 2], sizes = [4, 1], strides = [1, 1]} : vector<4x4xf32> to vector<4x1xf32>
    %7 = tpu.concatenate %5, %1, %6 in 1 : vector<4x1xf32>, vector<4x1024xf32>, vector<4x1xf32> -> vector<4x1026xf32>
    %c0_5 = arith.constant 0 : index
    %c0_6 = arith.constant 0 : index
    %8 = vector.load %arg4[%c0_5, %c0_6] : memref<4x12xf32, #tpu.memory_space<vmem>>, vector<4x12xf32>
    %9 = vector.extract_strided_slice %8 {offsets = [0, 0], sizes = [4, 4], strides = [1, 1]} : vector<4x12xf32> to vector<4x4xf32>
    %10 = vector.extract_strided_slice %7 {offsets = [0, 0], sizes = [4, 1024], strides = [1, 1]} : vector<4x1026xf32> to vector<4x1024xf32>
    %cst = arith.constant dense<0.000000e+00> : vector<4x1024xf32>
    %11 = tpu.matmul %9, %10, %cst {dimension_numbers = #tpu.dot_dimension_numbers<[1], [0], [0], [1], [0, 0, 1, 1], [], []>} : vector<4x4xf32>, vector<4x1024xf32>, vector<4x1024xf32> -> vector<4x1024xf32>
    %12 = vector.extract_strided_slice %8 {offsets = [0, 4], sizes = [4, 4], strides = [1, 1]} : vector<4x12xf32> to vector<4x4xf32>
    %13 = vector.extract_strided_slice %7 {offsets = [0, 1], sizes = [4, 1024], strides = [1, 1]} : vector<4x1026xf32> to vector<4x1024xf32>
    %cst_7 = arith.constant dense<0.000000e+00> : vector<4x1024xf32>
    %14 = tpu.matmul %12, %13, %cst_7 {dimension_numbers = #tpu.dot_dimension_numbers<[1], [0], [0], [1], [0, 0, 1, 1], [], []>} : vector<4x4xf32>, vector<4x1024xf32>, vector<4x1024xf32> -> vector<4x1024xf32>
    %15 = arith.addf %11, %14 : vector<4x1024xf32>
    %16 = vector.extract_strided_slice %8 {offsets = [0, 8], sizes = [4, 4], strides = [1, 1]} : vector<4x12xf32> to vector<4x4xf32>
    %17 = vector.extract_strided_slice %7 {offsets = [0, 2], sizes = [4, 1024], strides = [1, 1]} : vector<4x1026xf32> to vector<4x1024xf32>
    %cst_8 = arith.constant dense<0.000000e+00> : vector<4x1024xf32>
    %18 = tpu.matmul %16, %17, %cst_8 {dimension_numbers = #tpu.dot_dimension_numbers<[1], [0], [0], [1], [0, 0, 1, 1], [], []>} : vector<4x4xf32>, vector<4x1024xf32>, vector<4x1024xf32> -> vector<4x1024xf32>
    %19 = arith.addf %15, %18 : vector<4x1024xf32>
    %c0_9 = arith.constant 0 : index
    %c0_10 = arith.constant 0 : index
    %20 = vector.load %arg5[%c0_9, %c0_10] : memref<4x1xf32, #tpu.memory_space<vmem>>, vector<4x1xf32>
    %21 = vector.broadcast %20 : vector<4x1xf32> to vector<4x1024xf32>
    %22 = arith.addf %19, %21 : vector<4x1024xf32>
    %cst_11 = arith.constant dense<0.000000e+00> : vector<4xf32>
    %23 = vector.multi_reduction <add>, %22, %cst_11 [1] : vector<4x1024xf32> to vector<4xf32>
    %24 = vector.shape_cast %23 : vector<4xf32> to vector<4x1xf32>
    %25 = arith.mulf %22, %22 : vector<4x1024xf32>
    %cst_12 = arith.constant dense<0.000000e+00> : vector<4xf32>
    %26 = vector.multi_reduction <add>, %25, %cst_12 [1] : vector<4x1024xf32> to vector<4xf32>
    %27 = vector.shape_cast %26 : vector<4xf32> to vector<4x1xf32>
    %28 = tpu.concatenate %24, %27 in 1 : vector<4x1xf32>, vector<4x1xf32> -> vector<4x2xf32>
    %29 = vector.shape_cast %28 : vector<4x2xf32> to vector<1x4x2xf32>
    %c0_i32 = arith.constant 0 : i32
    %30 = arith.cmpi eq, %arg1, %c0_i32 : i32
    %31 = arith.extui %30 : i1 to i32
    %c0_i32_13 = arith.constant 0 : i32
    %32 = arith.cmpi ne, %31, %c0_i32_13 : i32
    scf.if %32 {
      %c0_16 = arith.constant 0 : index
      %c0_17 = arith.constant 0 : index
      %c0_18 = arith.constant 0 : index
      %36 = vector.load %arg6[%c0_16, %c0_17, %c0_18] : memref<1x4x2xf32, #tpu.memory_space<vmem>>, vector<1x4x2xf32>
      tpu.vector_store %arg6[%c0_16, %c0_17, %c0_18], %29 {strides = array<i32>} : memref<1x4x2xf32, #tpu.memory_space<vmem>>, vector<1x4x2xf32>,
    } else {
    }
    %c0_i32_14 = arith.constant 0 : i32
    %33 = arith.cmpi sgt, %arg1, %c0_i32_14 : i32
    %34 = arith.extui %33 : i1 to i32
    %c0_i32_15 = arith.constant 0 : i32
    %35 = arith.cmpi ne, %34, %c0_i32_15 : i32
    scf.if %35 {
      %c0_16 = arith.constant 0 : index
      %c0_17 = arith.constant 0 : index
      %c0_18 = arith.constant 0 : index
      %36 = vector.load %arg6[%c0_16, %c0_17, %c0_18] : memref<1x4x2xf32, #tpu.memory_space<vmem>>, vector<1x4x2xf32>
      %37 = arith.addf %36, %29 : vector<1x4x2xf32>
      %c0_19 = arith.constant 0 : index
      %c0_20 = arith.constant 0 : index
      %c0_21 = arith.constant 0 : index
      %38 = vector.load %arg6[%c0_19, %c0_20, %c0_21] : memref<1x4x2xf32, #tpu.memory_space<vmem>>, vector<1x4x2xf32>
      tpu.vector_store %arg6[%c0_19, %c0_20, %c0_21], %37 {strides = array<i32>} : memref<1x4x2xf32, #tpu.memory_space<vmem>>, vector<1x4x2xf32>,
    } else {
    }
    return
  }
  func.func @transform_0(%arg0: i32, %arg1: i32) -> (i32, i32, i32) {
    %c0_i32 = arith.constant 0 : i32
    %c0_i32_0 = arith.constant 0 : i32
    return %arg0, %c0_i32, %arg1 : i32, i32, i32
  }
  func.func @transform_1(%arg0: i32, %arg1: i32) -> (i32, i32, i32, i32) {
    %c0_i32 = arith.constant 0 : i32
    %c0_i32_0 = arith.constant 0 : i32
    %c0_i32_1 = arith.constant 0 : i32
    %c0_i32_2 = arith.constant 0 : i32
    return %arg0, %c0_i32, %c0_i32_0, %c0_i32_1 : i32, i32, i32, i32
  }
  func.func @transform_2(%arg0: i32, %arg1: i32) -> (i32, i32) {
    %c0_i32 = arith.constant 0 : i32
    %c0_i32_0 = arith.constant 0 : i32
    %c0_i32_1 = arith.constant 0 : i32
    return %c0_i32, %c0_i32_0 : i32, i32
  }
  func.func @transform_3(%arg0: i32, %arg1: i32) -> (i32, i32) {
    %c0_i32 = arith.constant 0 : i32
    %c0_i32_0 = arith.constant 0 : i32
    %c0_i32_1 = arith.constant 0 : i32
    return %c0_i32, %c0_i32_0 : i32, i32
  }
  func.func @transform_4(%arg0: i32, %arg1: i32) -> (i32, i32, i32) {
    %c0_i32 = arith.constant 0 : i32
    %c0_i32_0 = arith.constant 0 : i32
    %c0_i32_1 = arith.constant 0 : i32
    return %arg0, %c0_i32, %c0_i32_0 : i32, i32, i32
  }
}

module attributes {stable_mosaic.version = 11 : i64} {
  func.func @_fused_kernel(%arg0: i32, %arg1: i32, %arg2: memref<1x4x1024xf32, #tpu.memory_space<vmem>>, %arg3: memref<1x1x4x4xf32, #tpu.memory_space<vmem>>, %arg4: memref<4x1xf32, #tpu.memory_space<vmem>>, %arg5: memref<4x1xf32, #tpu.memory_space<vmem>>, %arg6: memref<4x12xf32, #tpu.memory_space<vmem>>, %arg7: memref<4x1xf32, #tpu.memory_space<vmem>>, %arg8: memref<8x12xf32, #tpu.memory_space<vmem>>, %arg9: memref<8x1xf32, #tpu.memory_space<vmem>>, %arg10: memref<1x8x1024xf32, #tpu.memory_space<vmem>>, %arg11: memref<1x8x2xf32, #tpu.memory_space<vmem>>) attributes {dimension_semantics = [#tpu.dimension_semantics<parallel>, #tpu.dimension_semantics<arbitrary>], iteration_bounds = array<i64: 2, 1>, scalar_prefetch = 0 : i64, scratch_operands = 0 : i64, tpu.core_type = #tpu.core_type<tc>, window_params = [{transform_indices = @transform_0, window_bounds = array<i64: 1, 4, 1024>}, {transform_indices = @transform_1, window_bounds = array<i64: 1, 1, 4, 4>}, {pipeline_mode = #tpu.pipeline_mode<synchronous>, transform_indices = @transform_2, window_bounds = array<i64: 4, 1>}, {pipeline_mode = #tpu.pipeline_mode<synchronous>, transform_indices = @transform_3, window_bounds = array<i64: 4, 1>}, {pipeline_mode = #tpu.pipeline_mode<synchronous>, transform_indices = @transform_4, window_bounds = array<i64: 4, 12>}, {pipeline_mode = #tpu.pipeline_mode<synchronous>, transform_indices = @transform_5, window_bounds = array<i64: 4, 1>}, {pipeline_mode = #tpu.pipeline_mode<synchronous>, transform_indices = @transform_6, window_bounds = array<i64: 8, 12>}, {pipeline_mode = #tpu.pipeline_mode<synchronous>, transform_indices = @transform_7, window_bounds = array<i64: 8, 1>}, {transform_indices = @transform_8, window_bounds = array<i64: 1, 8, 1024>}, {transform_indices = @transform_9, window_bounds = array<i64: 1, 8, 2>}]} {
    %c0 = arith.constant 0 : index
    %c0_0 = arith.constant 0 : index
    %c0_1 = arith.constant 0 : index
    %0 = vector.load %arg2[%c0, %c0_0, %c0_1] : memref<1x4x1024xf32, #tpu.memory_space<vmem>>, vector<1x4x1024xf32>
    %1 = vector.shape_cast %0 : vector<1x4x1024xf32> to vector<4x1024xf32>
    %c0_2 = arith.constant 0 : index
    %2 = arith.index_cast %arg1 : i32 to index
    %c0_3 = arith.constant 0 : index
    %c0_4 = arith.constant 0 : index
    %3 = vector.load %arg3[%c0_2, %2, %c0_3, %c0_4] : memref<1x1x4x4xf32, #tpu.memory_space<vmem>>, vector<1x1x4x4xf32>
    %4 = vector.shape_cast %3 : vector<1x1x4x4xf32> to vector<4x4xf32>
    %5 = vector.extract_strided_slice %4 {offsets = [0, 0], sizes = [4, 2], strides = [1, 1]} : vector<4x4xf32> to vector<4x2xf32>
    %6 = vector.extract_strided_slice %4 {offsets = [0, 2], sizes = [4, 2], strides = [1, 1]} : vector<4x4xf32> to vector<4x2xf32>
    %7 = tpu.concatenate %5, %1, %6 in 1 : vector<4x2xf32>, vector<4x1024xf32>, vector<4x2xf32> -> vector<4x1028xf32>
    %c0_5 = arith.constant 0 : index
    %c0_6 = arith.constant 0 : index
    %8 = vector.load %arg6[%c0_5, %c0_6] : memref<4x12xf32, #tpu.memory_space<vmem>>, vector<4x12xf32>
    %9 = vector.extract_strided_slice %8 {offsets = [0, 0], sizes = [4, 4], strides = [1, 1]} : vector<4x12xf32> to vector<4x4xf32>
    %10 = vector.extract_strided_slice %7 {offsets = [0, 0], sizes = [4, 1026], strides = [1, 1]} : vector<4x1028xf32> to vector<4x1026xf32>
    %cst = arith.constant dense<0.000000e+00> : vector<4x1026xf32>
    %11 = tpu.matmul %9, %10, %cst {dimension_numbers = #tpu.dot_dimension_numbers<[1], [0], [0], [1], [0, 0, 1, 1], [], []>} : vector<4x4xf32>, vector<4x1026xf32>, vector<4x1026xf32> -> vector<4x1026xf32>
    %12 = vector.extract_strided_slice %8 {offsets = [0, 4], sizes = [4, 4], strides = [1, 1]} : vector<4x12xf32> to vector<4x4xf32>
    %13 = vector.extract_strided_slice %7 {offsets = [0, 1], sizes = [4, 1026], strides = [1, 1]} : vector<4x1028xf32> to vector<4x1026xf32>
    %cst_7 = arith.constant dense<0.000000e+00> : vector<4x1026xf32>
    %14 = tpu.matmul %12, %13, %cst_7 {dimension_numbers = #tpu.dot_dimension_numbers<[1], [0], [0], [1], [0, 0, 1, 1], [], []>} : vector<4x4xf32>, vector<4x1026xf32>, vector<4x1026xf32> -> vector<4x1026xf32>
    %15 = arith.addf %11, %14 : vector<4x1026xf32>
    %16 = vector.extract_strided_slice %8 {offsets = [0, 8], sizes = [4, 4], strides = [1, 1]} : vector<4x12xf32> to vector<4x4xf32>
    %17 = vector.extract_strided_slice %7 {offsets = [0, 2], sizes = [4, 1026], strides = [1, 1]} : vector<4x1028xf32> to vector<4x1026xf32>
    %cst_8 = arith.constant dense<0.000000e+00> : vector<4x1026xf32>
    %18 = tpu.matmul %16, %17, %cst_8 {dimension_numbers = #tpu.dot_dimension_numbers<[1], [0], [0], [1], [0, 0, 1, 1], [], []>} : vector<4x4xf32>, vector<4x1026xf32>, vector<4x1026xf32> -> vector<4x1026xf32>
    %19 = arith.addf %15, %18 : vector<4x1026xf32>
    %c0_9 = arith.constant 0 : index
    %c0_10 = arith.constant 0 : index
    %20 = vector.load %arg7[%c0_9, %c0_10] : memref<4x1xf32, #tpu.memory_space<vmem>>, vector<4x1xf32>
    %21 = vector.broadcast %20 : vector<4x1xf32> to vector<4x1026xf32>
    %22 = arith.addf %19, %21 : vector<4x1026xf32>
    %23 = vector.extract_strided_slice %7 {offsets = [0, 1], sizes = [4, 1026], strides = [1, 1]} : vector<4x1028xf32> to vector<4x1026xf32>
    %c0_11 = arith.constant 0 : index
    %c0_12 = arith.constant 0 : index
    %24 = vector.load %arg4[%c0_11, %c0_12] : memref<4x1xf32, #tpu.memory_space<vmem>>, vector<4x1xf32>
    %25 = vector.broadcast %24 : vector<4x1xf32> to vector<4x1026xf32>
    %26 = arith.mulf %22, %25 : vector<4x1026xf32>
    %c0_13 = arith.constant 0 : index
    %c0_14 = arith.constant 0 : index
    %27 = vector.load %arg5[%c0_13, %c0_14] : memref<4x1xf32, #tpu.memory_space<vmem>>, vector<4x1xf32>
    %28 = vector.broadcast %27 : vector<4x1xf32> to vector<4x1026xf32>
    %29 = arith.addf %26, %28 : vector<4x1026xf32>
    %cst_15 = arith.constant 0.000000e+00 : f32
    %30 = vector.broadcast %cst_15 : f32 to vector<4x1026xf32>
    %31 = arith.maximumf %29, %30 : vector<4x1026xf32>
    %32 = arith.addf %31, %23 : vector<4x1026xf32>
    %33 = vector.extract_strided_slice %32 {offsets = [0, 2], sizes = [4, 1], strides = [1, 1]} : vector<4x1026xf32> to vector<4x1xf32>
    %c0_i32 = arith.constant 0 : i32
    %34 = arith.cmpi eq, %arg1, %c0_i32 : i32
    %35 = vector.extract_strided_slice %32 {offsets = [0, 0], sizes = [4, 1], strides = [1, 1]} : vector<4x1026xf32> to vector<4x1xf32>
    %36 = arith.select %34, %33, %35 : vector<4x1xf32>
    %37 = vector.extract_strided_slice %32 {offsets = [0, 1023], sizes = [4, 1], strides = [1, 1]} : vector<4x1026xf32> to vector<4x1xf32>
    %c0_i32_16 = arith.constant 0 : i32
    %38 = arith.cmpi eq, %arg1, %c0_i32_16 : i32
    %39 = vector.extract_strided_slice %32 {offsets = [0, 1025], sizes = [4, 1], strides = [1, 1]} : vector<4x1026xf32> to vector<4x1xf32>
    %40 = arith.select %38, %37, %39 : vector<4x1xf32>
    %41 = vector.extract_strided_slice %32 {offsets = [0, 1], sizes = [4, 1024], strides = [1, 1]} : vector<4x1026xf32> to vector<4x1024xf32>
    %42 = tpu.concatenate %36, %41, %40 in 1 : vector<4x1xf32>, vector<4x1024xf32>, vector<4x1xf32> -> vector<4x1026xf32>
    %c0_17 = arith.constant 0 : index
    %c0_18 = arith.constant 0 : index
    %43 = vector.load %arg8[%c0_17, %c0_18] : memref<8x12xf32, #tpu.memory_space<vmem>>, vector<8x12xf32>
    %44 = vector.extract_strided_slice %43 {offsets = [0, 0], sizes = [8, 4], strides = [1, 1]} : vector<8x12xf32> to vector<8x4xf32>
    %45 = vector.extract_strided_slice %42 {offsets = [0, 0], sizes = [4, 1024], strides = [1, 1]} : vector<4x1026xf32> to vector<4x1024xf32>
    %cst_19 = arith.constant dense<0.000000e+00> : vector<8x1024xf32>
    %46 = tpu.matmul %44, %45, %cst_19 {dimension_numbers = #tpu.dot_dimension_numbers<[1], [0], [0], [1], [0, 0, 1, 1], [], []>} : vector<8x4xf32>, vector<4x1024xf32>, vector<8x1024xf32> -> vector<8x1024xf32>
    %47 = vector.extract_strided_slice %43 {offsets = [0, 4], sizes = [8, 4], strides = [1, 1]} : vector<8x12xf32> to vector<8x4xf32>
    %48 = vector.extract_strided_slice %42 {offsets = [0, 1], sizes = [4, 1024], strides = [1, 1]} : vector<4x1026xf32> to vector<4x1024xf32>
    %cst_20 = arith.constant dense<0.000000e+00> : vector<8x1024xf32>
    %49 = tpu.matmul %47, %48, %cst_20 {dimension_numbers = #tpu.dot_dimension_numbers<[1], [0], [0], [1], [0, 0, 1, 1], [], []>} : vector<8x4xf32>, vector<4x1024xf32>, vector<8x1024xf32> -> vector<8x1024xf32>
    %50 = arith.addf %46, %49 : vector<8x1024xf32>
    %51 = vector.extract_strided_slice %43 {offsets = [0, 8], sizes = [8, 4], strides = [1, 1]} : vector<8x12xf32> to vector<8x4xf32>
    %52 = vector.extract_strided_slice %42 {offsets = [0, 2], sizes = [4, 1024], strides = [1, 1]} : vector<4x1026xf32> to vector<4x1024xf32>
    %cst_21 = arith.constant dense<0.000000e+00> : vector<8x1024xf32>
    %53 = tpu.matmul %51, %52, %cst_21 {dimension_numbers = #tpu.dot_dimension_numbers<[1], [0], [0], [1], [0, 0, 1, 1], [], []>} : vector<8x4xf32>, vector<4x1024xf32>, vector<8x1024xf32> -> vector<8x1024xf32>
    %54 = arith.addf %50, %53 : vector<8x1024xf32>
    %c0_22 = arith.constant 0 : index
    %c0_23 = arith.constant 0 : index
    %55 = vector.load %arg9[%c0_22, %c0_23] : memref<8x1xf32, #tpu.memory_space<vmem>>, vector<8x1xf32>
    %56 = vector.broadcast %55 : vector<8x1xf32> to vector<8x1024xf32>
    %57 = arith.addf %54, %56 : vector<8x1024xf32>
    %58 = vector.shape_cast %57 : vector<8x1024xf32> to vector<1x8x1024xf32>
    %c0_24 = arith.constant 0 : index
    %c0_25 = arith.constant 0 : index
    %c0_26 = arith.constant 0 : index
    %59 = vector.load %arg10[%c0_24, %c0_25, %c0_26] : memref<1x8x1024xf32, #tpu.memory_space<vmem>>, vector<1x8x1024xf32>
    tpu.vector_store %arg10[%c0_24, %c0_25, %c0_26], %58 {strides = array<i32>} : memref<1x8x1024xf32, #tpu.memory_space<vmem>>, vector<1x8x1024xf32>,
    %cst_27 = arith.constant dense<0.000000e+00> : vector<8xf32>
    %60 = vector.multi_reduction <add>, %57, %cst_27 [1] : vector<8x1024xf32> to vector<8xf32>
    %61 = vector.shape_cast %60 : vector<8xf32> to vector<8x1xf32>
    %62 = arith.mulf %57, %57 : vector<8x1024xf32>
    %cst_28 = arith.constant dense<0.000000e+00> : vector<8xf32>
    %63 = vector.multi_reduction <add>, %62, %cst_28 [1] : vector<8x1024xf32> to vector<8xf32>
    %64 = vector.shape_cast %63 : vector<8xf32> to vector<8x1xf32>
    %65 = tpu.concatenate %61, %64 in 1 : vector<8x1xf32>, vector<8x1xf32> -> vector<8x2xf32>
    %66 = vector.shape_cast %65 : vector<8x2xf32> to vector<1x8x2xf32>
    %c0_i32_29 = arith.constant 0 : i32
    %67 = arith.cmpi eq, %arg1, %c0_i32_29 : i32
    %68 = arith.extui %67 : i1 to i32
    %c0_i32_30 = arith.constant 0 : i32
    %69 = arith.cmpi ne, %68, %c0_i32_30 : i32
    scf.if %69 {
      %c0_33 = arith.constant 0 : index
      %c0_34 = arith.constant 0 : index
      %c0_35 = arith.constant 0 : index
      %73 = vector.load %arg11[%c0_33, %c0_34, %c0_35] : memref<1x8x2xf32, #tpu.memory_space<vmem>>, vector<1x8x2xf32>
      tpu.vector_store %arg11[%c0_33, %c0_34, %c0_35], %66 {strides = array<i32>} : memref<1x8x2xf32, #tpu.memory_space<vmem>>, vector<1x8x2xf32>,
    } else {
    }
    %c0_i32_31 = arith.constant 0 : i32
    %70 = arith.cmpi sgt, %arg1, %c0_i32_31 : i32
    %71 = arith.extui %70 : i1 to i32
    %c0_i32_32 = arith.constant 0 : i32
    %72 = arith.cmpi ne, %71, %c0_i32_32 : i32
    scf.if %72 {
      %c0_33 = arith.constant 0 : index
      %c0_34 = arith.constant 0 : index
      %c0_35 = arith.constant 0 : index
      %73 = vector.load %arg11[%c0_33, %c0_34, %c0_35] : memref<1x8x2xf32, #tpu.memory_space<vmem>>, vector<1x8x2xf32>
      %74 = arith.addf %73, %66 : vector<1x8x2xf32>
      %c0_36 = arith.constant 0 : index
      %c0_37 = arith.constant 0 : index
      %c0_38 = arith.constant 0 : index
      %75 = vector.load %arg11[%c0_36, %c0_37, %c0_38] : memref<1x8x2xf32, #tpu.memory_space<vmem>>, vector<1x8x2xf32>
      tpu.vector_store %arg11[%c0_36, %c0_37, %c0_38], %74 {strides = array<i32>} : memref<1x8x2xf32, #tpu.memory_space<vmem>>, vector<1x8x2xf32>,
    } else {
    }
    return
  }
  func.func @transform_0(%arg0: i32, %arg1: i32) -> (i32, i32, i32) {
    %c0_i32 = arith.constant 0 : i32
    %c0_i32_0 = arith.constant 0 : i32
    return %arg0, %c0_i32, %arg1 : i32, i32, i32
  }
  func.func @transform_1(%arg0: i32, %arg1: i32) -> (i32, i32, i32, i32) {
    %c0_i32 = arith.constant 0 : i32
    %c0_i32_0 = arith.constant 0 : i32
    %c0_i32_1 = arith.constant 0 : i32
    %c0_i32_2 = arith.constant 0 : i32
    return %arg0, %c0_i32, %c0_i32_0, %c0_i32_1 : i32, i32, i32, i32
  }
  func.func @transform_2(%arg0: i32, %arg1: i32) -> (i32, i32) {
    %c0_i32 = arith.constant 0 : i32
    %c0_i32_0 = arith.constant 0 : i32
    %c0_i32_1 = arith.constant 0 : i32
    return %c0_i32, %c0_i32_0 : i32, i32
  }
  func.func @transform_3(%arg0: i32, %arg1: i32) -> (i32, i32) {
    %c0_i32 = arith.constant 0 : i32
    %c0_i32_0 = arith.constant 0 : i32
    %c0_i32_1 = arith.constant 0 : i32
    return %c0_i32, %c0_i32_0 : i32, i32
  }
  func.func @transform_4(%arg0: i32, %arg1: i32) -> (i32, i32) {
    %c0_i32 = arith.constant 0 : i32
    %c0_i32_0 = arith.constant 0 : i32
    %c0_i32_1 = arith.constant 0 : i32
    return %c0_i32, %c0_i32_0 : i32, i32
  }
  func.func @transform_5(%arg0: i32, %arg1: i32) -> (i32, i32) {
    %c0_i32 = arith.constant 0 : i32
    %c0_i32_0 = arith.constant 0 : i32
    %c0_i32_1 = arith.constant 0 : i32
    return %c0_i32, %c0_i32_0 : i32, i32
  }
  func.func @transform_6(%arg0: i32, %arg1: i32) -> (i32, i32) {
    %c0_i32 = arith.constant 0 : i32
    %c0_i32_0 = arith.constant 0 : i32
    %c0_i32_1 = arith.constant 0 : i32
    return %c0_i32, %c0_i32_0 : i32, i32
  }
  func.func @transform_7(%arg0: i32, %arg1: i32) -> (i32, i32) {
    %c0_i32 = arith.constant 0 : i32
    %c0_i32_0 = arith.constant 0 : i32
    %c0_i32_1 = arith.constant 0 : i32
    return %c0_i32, %c0_i32_0 : i32, i32
  }
  func.func @transform_8(%arg0: i32, %arg1: i32) -> (i32, i32, i32) {
    %c0_i32 = arith.constant 0 : i32
    %c0_i32_0 = arith.constant 0 : i32
    return %arg0, %c0_i32, %arg1 : i32, i32, i32
  }
  func.func @transform_9(%arg0: i32, %arg1: i32) -> (i32, i32, i32) {
    %c0_i32 = arith.constant 0 : i32
    %c0_i32_0 = arith.constant 0 : i32
    %c0_i32_1 = arith.constant 0 : i32
    return %arg0, %c0_i32, %c0_i32_0 : i32, i32, i32
  }
}

module attributes {stable_mosaic.version = 11 : i64} {
  func.func @_bn_relu_kernel(%arg0: i32, %arg1: i32, %arg2: memref<1x8x1024xf32, #tpu.memory_space<vmem>>, %arg3: memref<8x1xf32, #tpu.memory_space<vmem>>, %arg4: memref<8x1xf32, #tpu.memory_space<vmem>>, %arg5: memref<1x8x1024xf32, #tpu.memory_space<vmem>>) attributes {dimension_semantics = [#tpu.dimension_semantics<parallel>, #tpu.dimension_semantics<parallel>], iteration_bounds = array<i64: 2, 1>, scalar_prefetch = 0 : i64, scratch_operands = 0 : i64, tpu.core_type = #tpu.core_type<tc>, window_params = [{transform_indices = @transform_0, window_bounds = array<i64: 1, 8, 1024>}, {pipeline_mode = #tpu.pipeline_mode<synchronous>, transform_indices = @transform_1, window_bounds = array<i64: 8, 1>}, {pipeline_mode = #tpu.pipeline_mode<synchronous>, transform_indices = @transform_2, window_bounds = array<i64: 8, 1>}, {transform_indices = @transform_3, window_bounds = array<i64: 1, 8, 1024>}]} {
    %c0 = arith.constant 0 : index
    %c0_0 = arith.constant 0 : index
    %c0_1 = arith.constant 0 : index
    %0 = vector.load %arg2[%c0, %c0_0, %c0_1] : memref<1x8x1024xf32, #tpu.memory_space<vmem>>, vector<1x8x1024xf32>
    %1 = vector.shape_cast %0 : vector<1x8x1024xf32> to vector<8x1024xf32>
    %c0_2 = arith.constant 0 : index
    %c0_3 = arith.constant 0 : index
    %2 = vector.load %arg3[%c0_2, %c0_3] : memref<8x1xf32, #tpu.memory_space<vmem>>, vector<8x1xf32>
    %3 = vector.broadcast %2 : vector<8x1xf32> to vector<8x1024xf32>
    %4 = arith.mulf %1, %3 : vector<8x1024xf32>
    %c0_4 = arith.constant 0 : index
    %c0_5 = arith.constant 0 : index
    %5 = vector.load %arg4[%c0_4, %c0_5] : memref<8x1xf32, #tpu.memory_space<vmem>>, vector<8x1xf32>
    %6 = vector.broadcast %5 : vector<8x1xf32> to vector<8x1024xf32>
    %7 = arith.addf %4, %6 : vector<8x1024xf32>
    %cst = arith.constant 0.000000e+00 : f32
    %8 = vector.broadcast %cst : f32 to vector<8x1024xf32>
    %9 = arith.maximumf %7, %8 : vector<8x1024xf32>
    %10 = vector.shape_cast %9 : vector<8x1024xf32> to vector<1x8x1024xf32>
    %c0_6 = arith.constant 0 : index
    %c0_7 = arith.constant 0 : index
    %c0_8 = arith.constant 0 : index
    %11 = vector.load %arg5[%c0_6, %c0_7, %c0_8] : memref<1x8x1024xf32, #tpu.memory_space<vmem>>, vector<1x8x1024xf32>
    tpu.vector_store %arg5[%c0_6, %c0_7, %c0_8], %10 {strides = array<i32>} : memref<1x8x1024xf32, #tpu.memory_space<vmem>>, vector<1x8x1024xf32>,
    return
  }
  func.func @transform_0(%arg0: i32, %arg1: i32) -> (i32, i32, i32) {
    %c0_i32 = arith.constant 0 : i32
    %c0_i32_0 = arith.constant 0 : i32
    return %arg0, %c0_i32, %arg1 : i32, i32, i32
  }
  func.func @transform_1(%arg0: i32, %arg1: i32) -> (i32, i32) {
    %c0_i32 = arith.constant 0 : i32
    %c0_i32_0 = arith.constant 0 : i32
    %c0_i32_1 = arith.constant 0 : i32
    return %c0_i32, %c0_i32_0 : i32, i32
  }
  func.func @transform_2(%arg0: i32, %arg1: i32) -> (i32, i32) {
    %c0_i32 = arith.constant 0 : i32
    %c0_i32_0 = arith.constant 0 : i32
    %c0_i32_1 = arith.constant 0 : i32
    return %c0_i32, %c0_i32_0 : i32, i32
  }
  func.func @transform_3(%arg0: i32, %arg1: i32) -> (i32, i32, i32) {
    %c0_i32 = arith.constant 0 : i32
    %c0_i32_0 = arith.constant 0 : i32
    return %arg0, %c0_i32, %arg1 : i32, i32, i32
  }
}

</mosaic_0001>

<llo_original>
// kernel: res_convblock.5
$region0: #{res_convblock.5}
  #allocation0 [shape = 'u32[]', space=smem, size = 0x4, offset = 0x4, fixed_abs, tag = 'smem constant byte address 0x4 - core index']
  #allocation1 [shape = 'u32[144,128]{1,0:T(1,128)}', space=vmem, size = 0x12000, scoped, tag = 'internal scratch']
  %s0 = inlined_call_operand.hbm [shape: f32[2,8,1024], index: 0, kind: input, shape index: {}, may-alias: {0,3}]
  %s1 = inlined_call_operand.vmem [shape: f32[8,1], index: 1, kind: input, shape index: {}]
  %s2 = inlined_call_operand.vmem [shape: f32[8,1], index: 2, kind: input, shape index: {}]
  %s3 = inlined_call_operand.hbm [shape: f32[2,8,1024], index: 3, kind: output, shape index: {}, may-alias: {0,3}]
  %s4 = sld [smem:[#allocation0]]
  $region49: #{res_convblock.5} parent=0
    _
  %s6 = ssub.s32 1, %s4
  %s7 = scalar_select 0, %s6, %s4
  $region1: #{res_convblock.5} parent=0
    #allocation2 [shape = 'u8[65536]{0}', space=vmem, size = 0x10000, scoped, tag = 'input window, operand 0']
    #allocation3 [shape = 's32[2]{0}', space=sflag, size = 0x8, scoped, tag = 'scoped memory for res_convblock.5']
    #allocation4 [shape = 's32[2]{0}', space=sflag, size = 0x8, scoped, tag = 'scoped memory for res_convblock.5']
    #allocation5 [shape = 'u8[65536]{0}', space=vmem, size = 0x10000, scoped, tag = 'output window, operand 0']
    %8 = vsyncpa [#allocation3], 0
    %s9 = scalar_lea.sflag [#allocation3], 1
    %10 = vsyncpa %s9, 0
    %11 = vsyncpa [#allocation4], 0
    %s12 = scalar_lea.sflag [#allocation4], 1
    %13 = vsyncpa %s12, 0
    loop: start=0, step=1, limit=4
    $region2: #{res_convblock.5} parent=1 // loop_pre_header
      _
    $region3: #{res_convblock.5} parent=1 // loop_header
      %s15 = sphi 0, %s19
      %p16 = scmp.ge.s32.totalorder %s15, 4
      %s22 = sphi 0, %s34
      %s23 = sphi 0, %s30
      %s24 = sphi 0, %s22
      %s25 = sphi 0, %s23
      %s26 = sphi 0, %s24
      %s27 = sphi 0, %s25
      %s39 = sphi 0, %s41
      %s42 = sphi 0, %s39
      %s43 = sphi 0, %s42
      %s59 = sphi 0, %s43
      %s63 = sphi 0, %s63
      %s65 = sphi 0, %s63
      %s66 = sphi 0, %s65
      %s80 = sphi 0, %s66
      %s84 = sphi 0, %s84
      %s86 = sphi 0, %s84
      %s87 = sphi 0, %s86
      %s101 = sphi 0, %s87
      %s109 = sphi 0, %s111
      %s112 = sphi 0, %s109
      %s113 = sphi 0, %s112
      %s129 = sphi 0, %s113
    $region4: #{res_convblock.5} parent=1 // loop_header_branch
      %18 = sbr.rel (%p16) target = $region8
    $region5: #{res_convblock.5} parent=1 // loop_body
      %s20 = ssub.s32 %s15, 1
      %s21 = ssub.s32 %s15, 2
      %s28 = sadd.s32 1, %s23
      %p29 = scmp.ge.s32.totalorder %s28, 1
      %s30 = scalar_select %p29, 0, %s28
      %s31 = sadd.s32 1, %s22
      %s32 = scalar_select %p29, %s31, %s22
      %p33 = scmp.ge.s32.totalorder %s32, 2
      %s34 = scalar_select %p33, 0, %s32
      %s35 = ssub.s32 %s22, %s34
      %s36 = ssub.s32 %s23, %s30
      %s37 = sor.u32 %s35, %s36
      %p38 = scmp.eq.s32.totalorder %s37, 0
      %s40 = sadd.s32 %s39, 1
      %s41 = scalar_select %p38, %s39, %s40
      %p44 = pneg %p38
      %p45 = scmp.eq.s32.totalorder %s15, 1
      %p46 = por %p44, %p45
      %p47 = scmp.ne.s32.totalorder %s39, %s42
      %p48 = scmp.eq.s32.totalorder %s15, 0
      %p49 = por %p47, %p48
      %p50 = scmp.ne.s32.totalorder %s39, %s42
      %p51 = scmp.eq.s32.totalorder %s20, 1
      %p52 = por %p50, %p51
      %p53 = scmp.ne.s32.totalorder %s42, %s43
      %p54 = scmp.eq.s32.totalorder %s20, 0
      %p55 = por %p53, %p54
      %p56 = scmp.ne.s32.totalorder %s42, %s43
      %p57 = scmp.eq.s32.totalorder %s21, 1
      %p58 = por %p56, %p57
      %p60 = scmp.ne.s32.totalorder %s43, %s59
      %p61 = scmp.eq.s32.totalorder %s21, 0
      %p62 = por %p60, %p61
      %s64 = sadd.s32 %s63, 1
      %p67 = scmp.eq.s32.totalorder %s15, 1
      %p68 = scmp.ne.s32.totalorder %s63, %s65
      %p69 = scmp.eq.s32.totalorder %s15, 0
      %p70 = por %p68, %p69
      %p71 = scmp.ne.s32.totalorder %s63, %s65
      %p72 = scmp.eq.s32.totalorder %s20, 1
      %p73 = por %p71, %p72
      %p74 = scmp.ne.s32.totalorder %s65, %s66
      %p75 = scmp.eq.s32.totalorder %s20, 0
      %p76 = por %p74, %p75
      %p77 = scmp.ne.s32.totalorder %s65, %s66
      %p78 = scmp.eq.s32.totalorder %s21, 1
      %p79 = por %p77, %p78
      %p81 = scmp.ne.s32.totalorder %s66, %s80
      %p82 = scmp.eq.s32.totalorder %s21, 0
      %p83 = por %p81, %p82
      %s85 = sadd.s32 %s84, 1
      %p88 = scmp.eq.s32.totalorder %s15, 1
      %p89 = scmp.ne.s32.totalorder %s84, %s86
      %p90 = scmp.eq.s32.totalorder %s15, 0
      %p91 = por %p89, %p90
      %p92 = scmp.ne.s32.totalorder %s84, %s86
      %p93 = scmp.eq.s32.totalorder %s20, 1
      %p94 = por %p92, %p93
      %p95 = scmp.ne.s32.totalorder %s86, %s87
      %p96 = scmp.eq.s32.totalorder %s20, 0
      %p97 = por %p95, %p96
      %p98 = scmp.ne.s32.totalorder %s86, %s87
      %p99 = scmp.eq.s32.totalorder %s21, 1
      %p100 = por %p98, %p99
      %p102 = scmp.ne.s32.totalorder %s87, %s101
      %p103 = scmp.eq.s32.totalorder %s21, 0
      %p104 = por %p102, %p103
      %s105 = ssub.s32 %s22, %s34
      %s106 = ssub.s32 %s23, %s30
      %s107 = sor.u32 %s105, %s106
      %p108 = scmp.eq.s32.totalorder %s107, 0
      %s110 = sadd.s32 %s109, 1
      %s111 = scalar_select %p108, %s109, %s110
      %p114 = pneg %p108
      %p115 = scmp.eq.s32.totalorder %s15, 1
      %p116 = por %p114, %p115
      %p117 = scmp.ne.s32.totalorder %s109, %s112
      %p118 = scmp.eq.s32.totalorder %s15, 0
      %p119 = por %p117, %p118
      %p120 = scmp.ne.s32.totalorder %s109, %s112
      %p121 = scmp.eq.s32.totalorder %s20, 1
      %p122 = por %p120, %p121
      %p123 = scmp.ne.s32.totalorder %s112, %s113
      %p124 = scmp.eq.s32.totalorder %s20, 0
      %p125 = por %p123, %p124
      %p126 = scmp.ne.s32.totalorder %s112, %s113
      %p127 = scmp.eq.s32.totalorder %s21, 1
      %p128 = por %p126, %p127
      %p130 = scmp.ne.s32.totalorder %s113, %s129
      %p131 = scmp.eq.s32.totalorder %s21, 0
      %p132 = por %p130, %p131
      %p133 = scmp.le.s32.totalorder 1, %s15
      %p134 = scmp.lt.s32.totalorder %s15, 3
      %p135 = pnand %p133, %p134
      %p136 = pneg %p135
      // Predicated region
      $region9: #{res_convblock.5} parent=5 // pred_check
        _
      $region10: #{res_convblock.5} parent=5 // pred_check_branch
        %138 = sbr.rel (%p135) target = $region12
      $region11: #{res_convblock.5} parent=5 // pred_region
        %s139 = ssub.s32 %s15, 1
        // Predicated region
        $region13: #{res_convblock.5} parent=11 // pred_check
          %p140 = pneg %p76
        $region14: #{res_convblock.5} parent=11 // pred_check_branch
          %142 = sbr.rel (%p140) target = $region16
        $region15: #{res_convblock.5} parent=11 // pred_region
          _
        $region16: #{res_convblock.5} parent=11 // pred_fallthru
          _
        // Predicated region
        $region17: #{res_convblock.5} parent=11 // pred_check
          %p143 = pneg %p97
        $region18: #{res_convblock.5} parent=11 // pred_check_branch
          %145 = sbr.rel (%p143) target = $region20
        $region19: #{res_convblock.5} parent=11 // pred_region
          _
        $region20: #{res_convblock.5} parent=11 // pred_fallthru
          _
      $region12: #{res_convblock.5} parent=5 // pred_fallthru
        _
      %p146 = scmp.lt.s32.totalorder %s15, 2
      // Predicated region
      $region21: #{res_convblock.5} parent=5 // pred_check
        %p147 = pneg %p146
      $region22: #{res_convblock.5} parent=5 // pred_check_branch
        %149 = sbr.rel (%p147) target = $region24
      $region23: #{res_convblock.5} parent=5 // pred_region
        // Predicated region
        $region25: #{res_convblock.5} parent=23 // pred_check
          %p150 = pneg %p49
        $region26: #{res_convblock.5} parent=23 // pred_check_branch
          %152 = sbr.rel (%p150) target = $region28
        $region27: #{res_convblock.5} parent=23 // pred_region
          %s153 = sand.u32 %s39, 1
          %s154 = scalar_lea.sflag [#allocation3], %s153
          %s155 = sand.u32 %s39, 1
          %s156 = smul.addr %s155, 64
          %s157 = scalar_lea.vmem [#allocation2], %s156
          %s158 = smul.u32 8, %s23
          %s160 = ssub.s32 1024, 1024
          %161 = vsyncadd %s154, %s160
          %s162 = smul.addr %s22, 8
          %s163 = sadd.s32 %s158, %s162
          %s164 = smul.addr %s163, 128
          %s165 = scalar_lea.hbm %s0, %s164
          %s167 = sshll.u32 %s157, 4
          %s168 = int_to_ptr.vmem [resolvable:$true] %s167
          %170 = dma.hbm_to_vmem [thread:$0]  %s165, 1024, %s168, %s154
        $region28: #{res_convblock.5} parent=23 // pred_fallthru
          _
      $region24: #{res_convblock.5} parent=5 // pred_fallthru
        _
      %p171 = scmp.le.s32.totalorder 1, %s15
      %p172 = scmp.lt.s32.totalorder %s15, 3
      %p173 = pnand %p171, %p172
      %p174 = pneg %p173
      // Predicated region
      $region29: #{res_convblock.5} parent=5 // pred_check
        _
      $region30: #{res_convblock.5} parent=5 // pred_check_branch
        %176 = sbr.rel (%p173) target = $region32
      $region31: #{res_convblock.5} parent=5 // pred_region
        %s177 = ssub.s32 %s15, 1
        %s178 = sand.u32 %s42, 1
        %s179 = scalar_lea.sflag [#allocation3], %s178
        %s180 = sand.u32 %s42, 1
        %s181 = smul.addr %s180, 64
        %s182 = scalar_lea.vmem [#allocation2], %s181
        // Predicated region
        $region33: #{res_convblock.5} parent=31 // pred_check
          %p183 = pneg %p55
        $region34: #{res_convblock.5} parent=31 // pred_check_branch
          %185 = sbr.rel (%p183) target = $region36
        $region35: #{res_convblock.5} parent=31 // pred_region
          %186 = dma.done %s179, 1024
        $region36: #{res_convblock.5} parent=31 // pred_fallthru
          _
        %s187 = sand.u32 %s42, 1
        %s188 = scalar_lea.sflag [#allocation3], %s187
        %s189 = sand.u32 %s42, 1
        %s190 = smul.addr %s189, 64
        %s191 = scalar_lea.vmem [#allocation2], %s190
        %p192 = pneg %p55
        %p193 = pneg %p52
        %p194 = pneg %p76
        %p195 = pneg %p73
        %p196 = pneg %p97
        %p197 = pneg %p94
        %p198 = pneg %p125
        %p199 = pneg %p122
        %s200 = sand.u32 %s112, 1
        %s201 = scalar_lea.sflag [#allocation4], %s200
        %s202 = sand.u32 %s112, 1
        %s203 = smul.addr %s202, 64
        %s204 = scalar_lea.vmem [#allocation5], %s203
        %s205 = smul.u32 8, %s25
        %s206 = smul.u32 8, %s25
        %v207 = vld [vmem:[%s182] sm:$0xff]
        %v208 = vld [vmem:[%s182 + $0x8] sm:$0xff]
        %v209 = vld [vmem:[%s182 + $0x10] sm:$0xff]
        %v210 = vld [vmem:[%s182 + $0x18] sm:$0xff]
        %v211 = vld [vmem:[%s182 + $0x20] sm:$0xff]
        %v212 = vld [vmem:[%s182 + $0x28] sm:$0xff]
        %v213 = vld [vmem:[%s182 + $0x30] sm:$0xff]
        %v214 = vld [vmem:[%s182 + $0x38] sm:$0xff]
        %v215 = vld [vmem:[%s1] sm:$0xff]
        %217 = vset.pattern.permute.xlu0 0
        %218 = vperm.xlu0 %217, %v215
        %v219 = vpop.permute.xlu0 %218
        %v221 = vmul.f32 %v207, %v219
        %v222 = vmul.f32 %v208, %v219
        %v223 = vmul.f32 %v209, %v219
        %v224 = vmul.f32 %v210, %v219
        %v225 = vmul.f32 %v211, %v219
        %v226 = vmul.f32 %v212, %v219
        %v227 = vmul.f32 %v213, %v219
        %v228 = vmul.f32 %v214, %v219
        %v229 = vld [vmem:[%s2] sm:$0xff]
        %231 = vset.pattern.permute.xlu0 0
        %232 = vperm.xlu0 %231, %v229
        %v233 = vpop.permute.xlu0 %232
        %v235 = vadd.f32 %v221, %v233
        %v236 = vadd.f32 %v222, %v233
        %v237 = vadd.f32 %v223, %v233
        %v238 = vadd.f32 %v224, %v233
        %v239 = vadd.f32 %v225, %v233
        %v240 = vadd.f32 %v226, %v233
        %v241 = vadd.f32 %v227, %v233
        %v242 = vadd.f32 %v228, %v233
        %v243 = vmax.f32 %v235, 0.0
        %v244 = vmax.f32 %v236, 0.0
        %v245 = vmax.f32 %v237, 0.0
        %v246 = vmax.f32 %v238, 0.0
        %v247 = vmax.f32 %v239, 0.0
        %v248 = vmax.f32 %v240, 0.0
        %v249 = vmax.f32 %v241, 0.0
        %v250 = vmax.f32 %v242, 0.0
        %251 = vst [vmem:[%s204] sm:$0xff] %v243
        %252 = vst [vmem:[%s204 + $0x8] sm:$0xff] %v244
        %253 = vst [vmem:[%s204 + $0x10] sm:$0xff] %v245
        %254 = vst [vmem:[%s204 + $0x18] sm:$0xff] %v246
        %255 = vst [vmem:[%s204 + $0x20] sm:$0xff] %v247
        %256 = vst [vmem:[%s204 + $0x28] sm:$0xff] %v248
        %257 = vst [vmem:[%s204 + $0x30] sm:$0xff] %v249
        %258 = vst [vmem:[%s204 + $0x38] sm:$0xff] %v250
        %s259 = sand.u32 %s112, 1
        %s260 = scalar_lea.sflag [#allocation4], %s259
        %s261 = sand.u32 %s112, 1
        %s262 = smul.addr %s261, 64
        %s263 = scalar_lea.vmem [#allocation5], %s262
        // Predicated region
        $region37: #{res_convblock.5} parent=31 // pred_check
          %p264 = pneg %p122
        $region38: #{res_convblock.5} parent=31 // pred_check_branch
          %266 = sbr.rel (%p264) target = $region40
        $region39: #{res_convblock.5} parent=31 // pred_region
          %s267 = smul.u32 8, %s25
          %s269 = ssub.s32 1024, 1024
          %270 = vsyncadd %s260, %s269
          %s271 = smul.addr %s24, 8
          %s272 = sadd.s32 %s267, %s271
          %s273 = smul.addr %s272, 128
          %s274 = scalar_lea.hbm %s3, %s273
          %s276 = sshll.u32 %s263, 4
          %s277 = int_to_ptr.vmem [resolvable:$true] %s276
          %279 = dma.vmem_to_hbm [thread:$0]  %s277, 1024, %s274, %s260
        $region40: #{res_convblock.5} parent=31 // pred_fallthru
          _
      $region32: #{res_convblock.5} parent=5 // pred_fallthru
        _
      %p280 = scmp.le.s32.totalorder 2, %s15
      // Predicated region
      $region41: #{res_convblock.5} parent=5 // pred_check
        %p281 = pneg %p280
      $region42: #{res_convblock.5} parent=5 // pred_check_branch
        %283 = sbr.rel (%p281) target = $region44
      $region43: #{res_convblock.5} parent=5 // pred_region
        %s284 = ssub.s32 %s15, 2
        // Predicated region
        $region45: #{res_convblock.5} parent=43 // pred_check
          %p285 = pneg %p128
        $region46: #{res_convblock.5} parent=43 // pred_check_branch
          %287 = sbr.rel (%p285) target = $region48
        $region47: #{res_convblock.5} parent=43 // pred_region
          %s288 = sand.u32 %s113, 1
          %s289 = scalar_lea.sflag [#allocation4], %s288
          %s290 = sand.u32 %s113, 1
          %s291 = smul.addr %s290, 64
          %s292 = scalar_lea.vmem [#allocation5], %s291
          %293 = dma.done %s289, 1024
        $region48: #{res_convblock.5} parent=43 // pred_fallthru
          _
      $region44: #{res_convblock.5} parent=5 // pred_fallthru
        _
    $region6: #{res_convblock.5} parent=1 // loop_footer
      %s19 = sadd.s32 1, %s15
    $region7: #{res_convblock.5} parent=1 // loop_footer_branch
      %14 = sbr.rel target = $region3
    $region8: #{res_convblock.5} parent=1 // loop_exit
      _
    %294 = vsyncpa [#allocation3], 1
    %s295 = scalar_lea.sflag [#allocation3], 1
    %296 = vsyncpa %s295, 1
    %297 = vsyncpa [#allocation4], 1
    %s298 = scalar_lea.sflag [#allocation4], 1
    %299 = vsyncpa %s298, 1

// kernel: res_convblock.3
$region0: #{res_convblock.3}
  #allocation0 [shape = 'u32[]', space=smem, size = 0x4, offset = 0x4, fixed_abs, tag = 'smem constant byte address 0x4 - core index']
  #allocation1 [shape = 'u32[144,128]{1,0:T(1,128)}', space=vmem, size = 0x12000, scoped, tag = 'internal scratch']
  %s0 = inlined_call_operand.vmem [shape: f32[2,4,1024], index: 0, kind: input, shape index: {}]
  %s1 = inlined_call_operand.vmem [shape: f32[2,1,4,4], index: 1, kind: input, shape index: {}]
  %s2 = inlined_call_operand.vmem [shape: f32[4,12], index: 2, kind: input, shape index: {}]
  %s3 = inlined_call_operand.vmem [shape: f32[4,1], index: 3, kind: input, shape index: {}]
  %s4 = inlined_call_operand.vmem [shape: f32[2,4,2], index: 4, kind: output, shape index: {}]
  %s5 = sld [smem:[#allocation0]]
  $region57: #{res_convblock.3} parent=0
    _
  %s7 = ssub.s32 1, %s5
  %s8 = scalar_select 0, %s7, %s5
  loop: start=0, step=1, limit=4
  $region2: #{res_convblock.3} parent=0 // loop_pre_header
    _
  $region3: #{res_convblock.3} parent=0 // loop_header
    %s10 = sphi 0, %s14
    %p11 = scmp.ge.s32.totalorder %s10, 4
    %s17 = sphi 0, %s29
    %s18 = sphi 0, %s25
    %s19 = sphi 0, %s17
    %s20 = sphi 0, %s18
    %s21 = sphi 0, %s19
    %s22 = sphi 0, %s20
    %s34 = sphi 0, %s36
    %s37 = sphi 0, %s34
    %s38 = sphi 0, %s37
    %s54 = sphi 0, %s38
    %s60 = sphi 0, %s62
    %s63 = sphi 0, %s60
    %s64 = sphi 0, %s63
    %s80 = sphi 0, %s64
    %s84 = sphi 0, %s84
    %s86 = sphi 0, %s84
    %s87 = sphi 0, %s86
    %s101 = sphi 0, %s87
    %s105 = sphi 0, %s105
    %s107 = sphi 0, %s105
    %s108 = sphi 0, %s107
    %s122 = sphi 0, %s108
    %s128 = sphi 0, %s130
    %s131 = sphi 0, %s128
    %s132 = sphi 0, %s131
    %s148 = sphi 0, %s132
  $region4: #{res_convblock.3} parent=0 // loop_header_branch
    %13 = sbr.rel (%p11) target = $region8
  $region5: #{res_convblock.3} parent=0 // loop_body
    %s15 = ssub.s32 %s10, 1
    %s16 = ssub.s32 %s10, 2
    %s23 = sadd.s32 1, %s18
    %p24 = scmp.ge.s32.totalorder %s23, 1
    %s25 = scalar_select %p24, 0, %s23
    %s26 = sadd.s32 1, %s17
    %s27 = scalar_select %p24, %s26, %s17
    %p28 = scmp.ge.s32.totalorder %s27, 2
    %s29 = scalar_select %p28, 0, %s27
    %s30 = ssub.s32 %s17, %s29
    %s31 = ssub.s32 %s18, %s25
    %s32 = sor.u32 %s30, %s31
    %p33 = scmp.eq.s32.totalorder %s32, 0
    %s35 = sadd.s32 %s34, 1
    %s36 = scalar_select %p33, %s34, %s35
    %p39 = pneg %p33
    %p40 = scmp.eq.s32.totalorder %s10, 1
    %p41 = por %p39, %p40
    %p42 = scmp.ne.s32.totalorder %s34, %s37
    %p43 = scmp.eq.s32.totalorder %s10, 0
    %p44 = por %p42, %p43
    %p45 = scmp.ne.s32.totalorder %s34, %s37
    %p46 = scmp.eq.s32.totalorder %s15, 1
    %p47 = por %p45, %p46
    %p48 = scmp.ne.s32.totalorder %s37, %s38
    %p49 = scmp.eq.s32.totalorder %s15, 0
    %p50 = por %p48, %p49
    %p51 = scmp.ne.s32.totalorder %s37, %s38
    %p52 = scmp.eq.s32.totalorder %s16, 1
    %p53 = por %p51, %p52
    %p55 = scmp.ne.s32.totalorder %s38, %s54
    %p56 = scmp.eq.s32.totalorder %s16, 0
    %p57 = por %p55, %p56
    %s58 = ssub.s32 %s17, %s29
    %p59 = scmp.eq.s32.totalorder %s58, 0
    %s61 = sadd.s32 %s60, 1
    %s62 = scalar_select %p59, %s60, %s61
    %p65 = pneg %p59
    %p66 = scmp.eq.s32.totalorder %s10, 1
    %p67 = por %p65, %p66
    %p68 = scmp.ne.s32.totalorder %s60, %s63
    %p69 = scmp.eq.s32.totalorder %s10, 0
    %p70 = por %p68, %p69
    %p71 = scmp.ne.s32.totalorder %s60, %s63
    %p72 = scmp.eq.s32.totalorder %s15, 1
    %p73 = por %p71, %p72
    %p74 = scmp.ne.s32.totalorder %s63, %s64
    %p75 = scmp.eq.s32.totalorder %s15, 0
    %p76 = por %p74, %p75
    %p77 = scmp.ne.s32.totalorder %s63, %s64
    %p78 = scmp.eq.s32.totalorder %s16, 1
    %p79 = por %p77, %p78
    %p81 = scmp.ne.s32.totalorder %s64, %s80
    %p82 = scmp.eq.s32.totalorder %s16, 0
    %p83 = por %p81, %p82
    %s85 = sadd.s32 %s84, 1
    %p88 = scmp.eq.s32.totalorder %s10, 1
    %p89 = scmp.ne.s32.totalorder %s84, %s86
    %p90 = scmp.eq.s32.totalorder %s10, 0
    %p91 = por %p89, %p90
    %p92 = scmp.ne.s32.totalorder %s84, %s86
    %p93 = scmp.eq.s32.totalorder %s15, 1
    %p94 = por %p92, %p93
    %p95 = scmp.ne.s32.totalorder %s86, %s87
    %p96 = scmp.eq.s32.totalorder %s15, 0
    %p97 = por %p95, %p96
    %p98 = scmp.ne.s32.totalorder %s86, %s87
    %p99 = scmp.eq.s32.totalorder %s16, 1
    %p100 = por %p98, %p99
    %p102 = scmp.ne.s32.totalorder %s87, %s101
    %p103 = scmp.eq.s32.totalorder %s16, 0
    %p104 = por %p102, %p103
    %s106 = sadd.s32 %s105, 1
    %p109 = scmp.eq.s32.totalorder %s10, 1
    %p110 = scmp.ne.s32.totalorder %s105, %s107
    %p111 = scmp.eq.s32.totalorder %s10, 0
    %p112 = por %p110, %p111
    %p113 = scmp.ne.s32.totalorder %s105, %s107
    %p114 = scmp.eq.s32.totalorder %s15, 1
    %p115 = por %p113, %p114
    %p116 = scmp.ne.s32.totalorder %s107, %s108
    %p117 = scmp.eq.s32.totalorder %s15, 0
    %p118 = por %p116, %p117
    %p119 = scmp.ne.s32.totalorder %s107, %s108
    %p120 = scmp.eq.s32.totalorder %s16, 1
    %p121 = por %p119, %p120
    %p123 = scmp.ne.s32.totalorder %s108, %s122
    %p124 = scmp.eq.s32.totalorder %s16, 0
    %p125 = por %p123, %p124
    %s126 = ssub.s32 %s17, %s29
    %p127 = scmp.eq.s32.totalorder %s126, 0
    %s129 = sadd.s32 %s128, 1
    %s130 = scalar_select %p127, %s128, %s129
    %p133 = pneg %p127
    %p134 = scmp.eq.s32.totalorder %s10, 1
    %p135 = por %p133, %p134
    %p136 = scmp.ne.s32.totalorder %s128, %s131
    %p137 = scmp.eq.s32.totalorder %s10, 0
    %p138 = por %p136, %p137
    %p139 = scmp.ne.s32.totalorder %s128, %s131
    %p140 = scmp.eq.s32.totalorder %s15, 1
    %p141 = por %p139, %p140
    %p142 = scmp.ne.s32.totalorder %s131, %s132
    %p143 = scmp.eq.s32.totalorder %s15, 0
    %p144 = por %p142, %p143
    %p145 = scmp.ne.s32.totalorder %s131, %s132
    %p146 = scmp.eq.s32.totalorder %s16, 1
    %p147 = por %p145, %p146
    %p149 = scmp.ne.s32.totalorder %s132, %s148
    %p150 = scmp.eq.s32.totalorder %s16, 0
    %p151 = por %p149, %p150
    %p152 = scmp.le.s32.totalorder 1, %s10
    %p153 = scmp.lt.s32.totalorder %s10, 3
    %p154 = pnand %p152, %p153
    %p155 = pneg %p154
    // Predicated region
    $region9: #{res_convblock.3} parent=5 // pred_check
      _
    $region10: #{res_convblock.3} parent=5 // pred_check_branch
      %157 = sbr.rel (%p154) target = $region12
    $region11: #{res_convblock.3} parent=5 // pred_region
      %s158 = ssub.s32 %s10, 1
      // Predicated region
      $region13: #{res_convblock.3} parent=11 // pred_check
        %p159 = pneg %p97
      $region14: #{res_convblock.3} parent=11 // pred_check_branch
        %161 = sbr.rel (%p159) target = $region16
      $region15: #{res_convblock.3} parent=11 // pred_region
        _
      $region16: #{res_convblock.3} parent=11 // pred_fallthru
        _
      // Predicated region
      $region17: #{res_convblock.3} parent=11 // pred_check
        %p162 = pneg %p118
      $region18: #{res_convblock.3} parent=11 // pred_check_branch
        %164 = sbr.rel (%p162) target = $region20
      $region19: #{res_convblock.3} parent=11 // pred_region
        _
      $region20: #{res_convblock.3} parent=11 // pred_fallthru
        _
    $region12: #{res_convblock.3} parent=5 // pred_fallthru
      _
    %p165 = scmp.lt.s32.totalorder %s10, 2
    // Predicated region
    $region21: #{res_convblock.3} parent=5 // pred_check
      %p166 = pneg %p165
    $region22: #{res_convblock.3} parent=5 // pred_check_branch
      %168 = sbr.rel (%p166) target = $region24
    $region23: #{res_convblock.3} parent=5 // pred_region
      // Predicated region
      $region25: #{res_convblock.3} parent=23 // pred_check
        %p169 = pneg %p44
      $region26: #{res_convblock.3} parent=23 // pred_check_branch
        %171 = sbr.rel (%p169) target = $region28
      $region27: #{res_convblock.3} parent=23 // pred_region
        %s172 = smul.u32 8, %s18
        %p173 = scmp.lt.s32.totalorder %s17, 1
        %s174 = scalar_select %p173, %s17, 1
        %p175 = scmp.lt.s32.totalorder %s172, 7
        %s176 = scalar_select %p175, %s172, 7
        %s177 = smul.addr %s174, 8
        %s178 = sadd.s32 %s176, %s177
        %s179 = smul.addr %s178, 4
        %s180 = scalar_lea.vmem %s0, %s179
        %s181 = smul.u32 8, %s18
      $region28: #{res_convblock.3} parent=23 // pred_fallthru
        _
      // Predicated region
      $region29: #{res_convblock.3} parent=23 // pred_check
        %p182 = pneg %p70
      $region30: #{res_convblock.3} parent=23 // pred_check_branch
        %184 = sbr.rel (%p182) target = $region32
      $region31: #{res_convblock.3} parent=23 // pred_region
        %p185 = scmp.lt.s32.totalorder %s17, 1
        %s186 = scalar_select %p185, %s17, 1
        %s187 = smul.addr %s186, 4
        %s188 = scalar_lea.vmem %s1, %s187
      $region32: #{res_convblock.3} parent=23 // pred_fallthru
        _
    $region24: #{res_convblock.3} parent=5 // pred_fallthru
      _
    %p189 = scmp.le.s32.totalorder 1, %s10
    %p190 = scmp.lt.s32.totalorder %s10, 3
    %p191 = pnand %p189, %p190
    %p192 = pneg %p191
    // Predicated region
    $region33: #{res_convblock.3} parent=5 // pred_check
      _
    $region34: #{res_convblock.3} parent=5 // pred_check_branch
      %194 = sbr.rel (%p191) target = $region36
    $region35: #{res_convblock.3} parent=5 // pred_region
      %s195 = ssub.s32 %s10, 1
      %s196 = smul.u32 8, %s20
      %p197 = scmp.lt.s32.totalorder %s19, 1
      %s198 = scalar_select %p197, %s19, 1
      %p199 = scmp.lt.s32.totalorder %s196, 7
      %s200 = scalar_select %p199, %s196, 7
      %s201 = smul.addr %s198, 8
      %s202 = sadd.s32 %s200, %s201
      %s203 = smul.addr %s202, 4
      %s204 = scalar_lea.vmem %s0, %s203
      %p205 = pneg %p50
      %p206 = pneg %p47
      %p207 = scmp.lt.s32.totalorder %s19, 1
      %s208 = scalar_select %p207, %s19, 1
      %s209 = smul.addr %s208, 4
      %s210 = scalar_lea.vmem %s1, %s209
      %p211 = pneg %p76
      %p212 = pneg %p73
      %p213 = pneg %p97
      %p214 = pneg %p94
      %p215 = pneg %p118
      %p216 = pneg %p115
      %p217 = pneg %p144
      %p218 = pneg %p141
      %p219 = scmp.lt.s32.totalorder %s19, 1
      %s220 = scalar_select %p219, %s19, 1
      %s221 = smul.addr %s220, 4
      %s222 = scalar_lea.vmem %s4, %s221
      %s223 = smul.u32 8, %s20
      %p224 = scmp.lt.s32.totalorder %s19, 1
      %s225 = scalar_select %p224, %s19, 1
      %p226 = scmp.lt.s32.totalorder %s223, 7
      %s227 = scalar_select %p226, %s223, 7
      %s228 = smul.addr %s225, 8
      %s229 = sadd.s32 %s227, %s228
      %s230 = smul.addr %s229, 4
      %s231 = scalar_lea.vmem %s0, %s230
      %s232 = smul.u32 8, %s20
      %p233 = scmp.lt.s32.totalorder %s19, 1
      %s234 = scalar_select %p233, %s19, 1
      %s235 = smul.addr %s234, 4
      %s236 = scalar_lea.vmem %s1, %s235
      %p237 = scmp.lt.s32.totalorder %s19, 1
      %s238 = scalar_select %p237, %s19, 1
      %s239 = smul.addr %s238, 4
      %s240 = scalar_lea.vmem %s4, %s239
      %v241 = vld [vmem:[%s231] sm:$0xff]
      %v242 = vld [vmem:[%s231 + $0x8] sm:$0xff]
      %v243 = vld [vmem:[%s231 + $0x10] sm:$0xff]
      %v244 = vld [vmem:[%s231 + $0x18] sm:$0xff]
      %s245 = smul.u32 %s20, 4
      %s246 = scalar_lea.vmem %s236, %s245
      %v247 = vld [vmem:[%s246] sm:$0xf]
      %249 = vrot.lane.b32.xlu0 %v247, 127
      %v250 = vpop.permute.xlu0 %249
      %v256 = vcombine.high %v241, %v241
      %v257 = vcombine.high %v242, %v242
      %v258 = vcombine.high %v243, %v243
      %v259 = vcombine.high %v244, %v244
      %260 = vrot.lane.b32.xlu0 %v241, 1
      %v261 = vpop.permute.xlu0 %260
      %262 = vrot.lane.b32.xlu0 %v256, 1
      %v263 = vpop.permute.xlu0 %262
      %264 = vrot.lane.b32.xlu0 %v242, 1
      %v265 = vpop.permute.xlu0 %264
      %266 = vrot.lane.b32.xlu0 %v257, 1
      %v267 = vpop.permute.xlu0 %266
      %268 = vrot.lane.b32.xlu0 %v243, 1
      %v269 = vpop.permute.xlu0 %268
      %270 = vrot.lane.b32.xlu0 %v258, 1
      %v271 = vpop.permute.xlu0 %270
      %272 = vrot.lane.b32.xlu0 %v244, 1
      %v273 = vpop.permute.xlu0 %272
      %274 = vrot.lane.b32.xlu0 %v259, 1
      %v275 = vpop.permute.xlu0 %274
      %vm276 = vcmask 7168
      %v277 = vsel %vm276, %v261, %v263
      %v278 = vsel %vm276, %v263, %v265
      %v279 = vsel %vm276, %v265, %v267
      %v280 = vsel %vm276, %v267, %v269
      %v281 = vsel %vm276, %v269, %v271
      %v282 = vsel %vm276, %v271, %v273
      %v283 = vsel %vm276, %v273, %v275
      %v286 = vsel %vm276, %v250, %v261
      %v287 = vsel %vm276, %v275, %v250
      %v288 = vld [vmem:[%s2] sm:$0xf]
      %290 = vrot.lane.b32.xlu0 %v288, 124
      %v291 = vpop.permute.xlu0 %290
      %294 = vrot.lane.b32.xlu0 %v286, 127
      %v295 = vpop.permute.xlu0 %294
      %296 = vrot.lane.b32.xlu0 %v277, 127
      %v297 = vpop.permute.xlu0 %296
      %298 = vrot.lane.b32.xlu0 %v278, 127
      %v299 = vpop.permute.xlu0 %298
      %300 = vrot.lane.b32.xlu0 %v279, 127
      %v301 = vpop.permute.xlu0 %300
      %302 = vrot.lane.b32.xlu0 %v280, 127
      %v303 = vpop.permute.xlu0 %302
      %304 = vrot.lane.b32.xlu0 %v281, 127
      %v305 = vpop.permute.xlu0 %304
      %306 = vrot.lane.b32.xlu0 %v282, 127
      %v307 = vpop.permute.xlu0 %306
      %308 = vrot.lane.b32.xlu0 %v283, 127
      %v309 = vpop.permute.xlu0 %308
      %310 = vrot.lane.b32.xlu0 %v287, 127
      %v311 = vpop.permute.xlu0 %310
      %vm312 = vcmask 1039360
      %v313 = vsel %vm312, %v295, %v297
      %v314 = vsel %vm312, %v297, %v299
      %v315 = vsel %vm312, %v299, %v301
      %v316 = vsel %vm312, %v301, %v303
      %v317 = vsel %vm312, %v303, %v305
      %v318 = vsel %vm312, %v305, %v307
      %v319 = vsel %vm312, %v307, %v309
      %v320 = vsel %vm312, %v309, %v311
      %vm321 = vcmask 31744
      %v322 = vsel %vm321, %v291, 0
      %vm324 = vcmask 1043456
      %v325 = vsel %vm324, %v313, 0
      %v327 = vsel %vm324, %v314, 0
      %v329 = vsel %vm324, %v315, 0
      %v331 = vsel %vm324, %v316, 0
      %v333 = vsel %vm324, %v317, 0
      %v335 = vsel %vm324, %v318, 0
      %v337 = vsel %vm324, %v319, 0
      %v339 = vsel %vm324, %v320, 0
      %341 = vmatprep.subr.mxu0 %v327
      %342 = vmatpush1.msra.mxu0 %v325
      %343 = vmatprep.subr.mxu0 0.0
      %344 = vmatpush1.msra.mxu0 0.0
      %345 = vmatprep.subr.mxu0 0.0
      %346 = vmatpush1.msra.mxu0 0.0
      %347 = vmatprep.subr.mxu0 0.0
      %348 = vmatpush1.msra.mxu0 0.0
      %349 = vmatprep.subr.mxu0 0.0
      %350 = vmatpush1.msra.mxu0 0.0
      %351 = vmatprep.subr.mxu0 0.0
      %352 = vmatpush1.msra.mxu0 0.0
      %353 = vmatprep.subr.mxu0 0.0
      %354 = vmatpush1.msra.mxu0 0.0
      %355 = vmatprep.subr.mxu0 0.0
      %356 = vmatpush1.msra.mxu0 0.0
      %357 = vmatprep.subr.mxu0 0.0
      %358 = vmatpush1.msra.mxu0 0.0
      %359 = vmatprep.subr.mxu0 0.0
      %360 = vmatpush1.msra.mxu0 0.0
      %361 = vmatprep.subr.mxu0 0.0
      %362 = vmatpush1.msra.mxu0 0.0
      %363 = vmatprep.subr.mxu0 0.0
      %364 = vmatpush1.msra.mxu0 0.0
      %365 = vmatprep.subr.mxu0 0.0
      %366 = vmatpush1.msra.mxu0 0.0
      %367 = vmatprep.subr.mxu0 0.0
      %368 = vmatpush1.msra.mxu0 0.0
      %369 = vmatprep.subr.mxu0 0.0
      %370 = vmatpush1.msra.mxu0 0.0
      %371 = vmatprep.subr.mxu0 0.0
      %372 = vmatpush1.msra.mxu0 0.0
      %373 = vmatprep.subr.mxu0 0.0
      %374 = vmatpush1.msra.mxu0 0.0
      %375 = vmatprep.subr.mxu0 0.0
      %376 = vmatpush1.msra.mxu0 0.0
      %377 = vmatprep.subr.mxu0 0.0
      %378 = vmatpush1.msra.mxu0 0.0
      %379 = vmatprep.subr.mxu0 0.0
      %380 = vmatpush1.msra.mxu0 0.0
      %381 = vmatprep.subr.mxu0 0.0
      %382 = vmatpush1.msra.mxu0 0.0
      %383 = vmatprep.subr.mxu0 0.0
      %384 = vmatpush1.msra.mxu0 0.0
      %385 = vmatprep.subr.mxu0 0.0
      %386 = vmatpush1.msra.mxu0 0.0
      %387 = vmatprep.subr.mxu0 0.0
      %388 = vmatpush1.msra.mxu0 0.0
      %389 = vmatprep.subr.mxu0 0.0
      %390 = vmatpush1.msra.mxu0 0.0
      %391 = vmatprep.subr.mxu0 0.0
      %392 = vmatpush1.msra.mxu0 0.0
      %393 = vmatprep.subr.mxu0 0.0
      %394 = vmatpush1.msra.mxu0 0.0
      %395 = vmatprep.subr.mxu0 0.0
      %396 = vmatpush1.msra.mxu0 0.0
      %397 = vmatprep.subr.mxu0 0.0
      %398 = vmatpush1.msra.mxu0 0.0
      %399 = vmatprep.subr.mxu0 0.0
      %400 = vmatpush1.msra.mxu0 0.0
      %401 = vmatprep.subr.mxu0 0.0
      %402 = vmatpush1.msra.mxu0 0.0
      %403 = vmatprep.subr.mxu0 0.0
      %404 = vmatpush1.msra.mxu0 0.0
      %405 = vmatprep.mubr.f32.mxu0 0.0
      %406 = vmatmul.mubr.f32.gmra.mrb[0].mxu0 %v322
      %v407 = vpop.f32.mrb[0].mxu0
      %v408 = vadd.f32 0.0, %v407
      %v409 = vpop.f32.mrb[0].mxu0
      %v410 = vadd.f32 0.0, %v409
      %411 = vdwg.mxu0
      %412 = vmatprep.subr.mxu0 %v331
      %413 = vmatpush1.msra.mxu0 %v329
      %414 = vmatprep.subr.mxu0 0.0
      %415 = vmatpush1.msra.mxu0 0.0
      %416 = vmatprep.subr.mxu0 0.0
      %417 = vmatpush1.msra.mxu0 0.0
      %418 = vmatprep.subr.mxu0 0.0
      %419 = vmatpush1.msra.mxu0 0.0
      %420 = vmatprep.subr.mxu0 0.0
      %421 = vmatpush1.msra.mxu0 0.0
      %422 = vmatprep.subr.mxu0 0.0
      %423 = vmatpush1.msra.mxu0 0.0
      %424 = vmatprep.subr.mxu0 0.0
      %425 = vmatpush1.msra.mxu0 0.0
      %426 = vmatprep.subr.mxu0 0.0
      %427 = vmatpush1.msra.mxu0 0.0
      %428 = vmatprep.subr.mxu0 0.0
      %429 = vmatpush1.msra.mxu0 0.0
      %430 = vmatprep.subr.mxu0 0.0
      %431 = vmatpush1.msra.mxu0 0.0
      %432 = vmatprep.subr.mxu0 0.0
      %433 = vmatpush1.msra.mxu0 0.0
      %434 = vmatprep.subr.mxu0 0.0
      %435 = vmatpush1.msra.mxu0 0.0
      %436 = vmatprep.subr.mxu0 0.0
      %437 = vmatpush1.msra.mxu0 0.0
      %438 = vmatprep.subr.mxu0 0.0
      %439 = vmatpush1.msra.mxu0 0.0
      %440 = vmatprep.subr.mxu0 0.0
      %441 = vmatpush1.msra.mxu0 0.0
      %442 = vmatprep.subr.mxu0 0.0
      %443 = vmatpush1.msra.mxu0 0.0
      %444 = vmatprep.subr.mxu0 0.0
      %445 = vmatpush1.msra.mxu0 0.0
      %446 = vmatprep.subr.mxu0 0.0
      %447 = vmatpush1.msra.mxu0 0.0
      %448 = vmatprep.subr.mxu0 0.0
      %449 = vmatpush1.msra.mxu0 0.0
      %450 = vmatprep.subr.mxu0 0.0
      %451 = vmatpush1.msra.mxu0 0.0
      %452 = vmatprep.subr.mxu0 0.0
      %453 = vmatpush1.msra.mxu0 0.0
      %454 = vmatprep.subr.mxu0 0.0
      %455 = vmatpush1.msra.mxu0 0.0
      %456 = vmatprep.subr.mxu0 0.0
      %457 = vmatpush1.msra.mxu0 0.0
      %458 = vmatprep.subr.mxu0 0.0
      %459 = vmatpush1.msra.mxu0 0.0
      %460 = vmatprep.subr.mxu0 0.0
      %461 = vmatpush1.msra.mxu0 0.0
      %462 = vmatprep.subr.mxu0 0.0
      %463 = vmatpush1.msra.mxu0 0.0
      %464 = vmatprep.subr.mxu0 0.0
      %465 = vmatpush1.msra.mxu0 0.0
      %466 = vmatprep.subr.mxu0 0.0
      %467 = vmatpush1.msra.mxu0 0.0
      %468 = vmatprep.subr.mxu0 0.0
      %469 = vmatpush1.msra.mxu0 0.0
      %470 = vmatprep.subr.mxu0 0.0
      %471 = vmatpush1.msra.mxu0 0.0
      %472 = vmatprep.subr.mxu0 0.0
      %473 = vmatpush1.msra.mxu0 0.0
      %474 = vmatprep.subr.mxu0 0.0
      %475 = vmatpush1.msra.mxu0 0.0
      %476 = vmatprep.mubr.f32.mxu0 0.0
      %477 = vmatmul.mubr.f32.gmra.mrb[0].mxu0 %v322
      %v478 = vpop.f32.mrb[0].mxu0
      %v479 = vadd.f32 0.0, %v478
      %v480 = vpop.f32.mrb[0].mxu0
      %v481 = vadd.f32 0.0, %v480
      %482 = vdwg.mxu0
      %483 = vmatprep.subr.mxu0 %v335
      %484 = vmatpush1.msra.mxu0 %v333
      %485 = vmatprep.subr.mxu0 0.0
      %486 = vmatpush1.msra.mxu0 0.0
      %487 = vmatprep.subr.mxu0 0.0
      %488 = vmatpush1.msra.mxu0 0.0
      %489 = vmatprep.subr.mxu0 0.0
      %490 = vmatpush1.msra.mxu0 0.0
      %491 = vmatprep.subr.mxu0 0.0
      %492 = vmatpush1.msra.mxu0 0.0
      %493 = vmatprep.subr.mxu0 0.0
      %494 = vmatpush1.msra.mxu0 0.0
      %495 = vmatprep.subr.mxu0 0.0
      %496 = vmatpush1.msra.mxu0 0.0
      %497 = vmatprep.subr.mxu0 0.0
      %498 = vmatpush1.msra.mxu0 0.0
      %499 = vmatprep.subr.mxu0 0.0
      %500 = vmatpush1.msra.mxu0 0.0
      %501 = vmatprep.subr.mxu0 0.0
      %502 = vmatpush1.msra.mxu0 0.0
      %503 = vmatprep.subr.mxu0 0.0
      %504 = vmatpush1.msra.mxu0 0.0
      %505 = vmatprep.subr.mxu0 0.0
      %506 = vmatpush1.msra.mxu0 0.0
      %507 = vmatprep.subr.mxu0 0.0
      %508 = vmatpush1.msra.mxu0 0.0
      %509 = vmatprep.subr.mxu0 0.0
      %510 = vmatpush1.msra.mxu0 0.0
      %511 = vmatprep.subr.mxu0 0.0
      %512 = vmatpush1.msra.mxu0 0.0
      %513 = vmatprep.subr.mxu0 0.0
      %514 = vmatpush1.msra.mxu0 0.0
      %515 = vmatprep.subr.mxu0 0.0
      %516 = vmatpush1.msra.mxu0 0.0
      %517 = vmatprep.subr.mxu0 0.0
      %518 = vmatpush1.msra.mxu0 0.0
      %519 = vmatprep.subr.mxu0 0.0
      %520 = vmatpush1.msra.mxu0 0.0
      %521 = vmatprep.subr.mxu0 0.0
      %522 = vmatpush1.msra.mxu0 0.0
      %523 = vmatprep.subr.mxu0 0.0
      %524 = vmatpush1.msra.mxu0 0.0
      %525 = vmatprep.subr.mxu0 0.0
      %526 = vmatpush1.msra.mxu0 0.0
      %527 = vmatprep.subr.mxu0 0.0
      %528 = vmatpush1.msra.mxu0 0.0
      %529 = vmatprep.subr.mxu0 0.0
      %530 = vmatpush1.msra.mxu0 0.0
      %531 = vmatprep.subr.mxu0 0.0
      %532 = vmatpush1.msra.mxu0 0.0
      %533 = vmatprep.subr.mxu0 0.0
      %534 = vmatpush1.msra.mxu0 0.0
      %535 = vmatprep.subr.mxu0 0.0
      %536 = vmatpush1.msra.mxu0 0.0
      %537 = vmatprep.subr.mxu0 0.0
      %538 = vmatpush1.msra.mxu0 0.0
      %539 = vmatprep.subr.mxu0 0.0
      %540 = vmatpush1.msra.mxu0 0.0
      %541 = vmatprep.subr.mxu0 0.0
      %542 = vmatpush1.msra.mxu0 0.0
      %543 = vmatprep.subr.mxu0 0.0
      %544 = vmatpush1.msra.mxu0 0.0
      %545 = vmatprep.subr.mxu0 0.0
      %546 = vmatpush1.msra.mxu0 0.0
      %547 = vmatprep.mubr.f32.mxu0 0.0
      %548 = vmatmul.mubr.f32.gmra.mrb[0].mxu0 %v322
      %v549 = vpop.f32.mrb[0].mxu0
      %v550 = vadd.f32 0.0, %v549
      %v551 = vpop.f32.mrb[0].mxu0
      %v552 = vadd.f32 0.0, %v551
      %553 = vdwg.mxu0
      %554 = vmatprep.subr.mxu0 %v339
      %555 = vmatpush1.msra.mxu0 %v337
      %556 = vmatprep.subr.mxu0 0.0
      %557 = vmatpush1.msra.mxu0 0.0
      %558 = vmatprep.subr.mxu0 0.0
      %559 = vmatpush1.msra.mxu0 0.0
      %560 = vmatprep.subr.mxu0 0.0
      %561 = vmatpush1.msra.mxu0 0.0
      %562 = vmatprep.subr.mxu0 0.0
      %563 = vmatpush1.msra.mxu0 0.0
      %564 = vmatprep.subr.mxu0 0.0
      %565 = vmatpush1.msra.mxu0 0.0
      %566 = vmatprep.subr.mxu0 0.0
      %567 = vmatpush1.msra.mxu0 0.0
      %568 = vmatprep.subr.mxu0 0.0
      %569 = vmatpush1.msra.mxu0 0.0
      %570 = vmatprep.subr.mxu0 0.0
      %571 = vmatpush1.msra.mxu0 0.0
      %572 = vmatprep.subr.mxu0 0.0
      %573 = vmatpush1.msra.mxu0 0.0
      %574 = vmatprep.subr.mxu0 0.0
      %575 = vmatpush1.msra.mxu0 0.0
      %576 = vmatprep.subr.mxu0 0.0
      %577 = vmatpush1.msra.mxu0 0.0
      %578 = vmatprep.subr.mxu0 0.0
      %579 = vmatpush1.msra.mxu0 0.0
      %580 = vmatprep.subr.mxu0 0.0
      %581 = vmatpush1.msra.mxu0 0.0
      %582 = vmatprep.subr.mxu0 0.0
      %583 = vmatpush1.msra.mxu0 0.0
      %584 = vmatprep.subr.mxu0 0.0
      %585 = vmatpush1.msra.mxu0 0.0
      %586 = vmatprep.subr.mxu0 0.0
      %587 = vmatpush1.msra.mxu0 0.0
      %588 = vmatprep.subr.mxu0 0.0
      %589 = vmatpush1.msra.mxu0 0.0
      %590 = vmatprep.subr.mxu0 0.0
      %591 = vmatpush1.msra.mxu0 0.0
      %592 = vmatprep.subr.mxu0 0.0
      %593 = vmatpush1.msra.mxu0 0.0
      %594 = vmatprep.subr.mxu0 0.0
      %595 = vmatpush1.msra.mxu0 0.0
      %596 = vmatprep.subr.mxu0 0.0
      %597 = vmatpush1.msra.mxu0 0.0
      %598 = vmatprep.subr.mxu0 0.0
      %599 = vmatpush1.msra.mxu0 0.0
      %600 = vmatprep.subr.mxu0 0.0
      %601 = vmatpush1.msra.mxu0 0.0
      %602 = vmatprep.subr.mxu0 0.0
      %603 = vmatpush1.msra.mxu0 0.0
      %604 = vmatprep.subr.mxu0 0.0
      %605 = vmatpush1.msra.mxu0 0.0
      %606 = vmatprep.subr.mxu0 0.0
      %607 = vmatpush1.msra.mxu0 0.0
      %608 = vmatprep.subr.mxu0 0.0
      %609 = vmatpush1.msra.mxu0 0.0
      %610 = vmatprep.subr.mxu0 0.0
      %611 = vmatpush1.msra.mxu0 0.0
      %612 = vmatprep.subr.mxu0 0.0
      %613 = vmatpush1.msra.mxu0 0.0
      %614 = vmatprep.subr.mxu0 0.0
      %615 = vmatpush1.msra.mxu0 0.0
      %616 = vmatprep.subr.mxu0 0.0
      %617 = vmatpush1.msra.mxu0 0.0
      %618 = vmatprep.mubr.f32.mxu0 0.0
      %619 = vmatmul.mubr.f32.gmra.mrb[0].mxu0 %v322
      %v620 = vpop.f32.mrb[0].mxu0
      %v621 = vadd.f32 0.0, %v620
      %v622 = vpop.f32.mrb[0].mxu0
      %v623 = vadd.f32 0.0, %v622
      %624 = vdwg.mxu0
      %v625 = vsel %vm321, %v288, 0
      %v627 = vsel %vm324, %v286, 0
      %v629 = vsel %vm324, %v277, 0
      %v631 = vsel %vm324, %v278, 0
      %v633 = vsel %vm324, %v279, 0
      %v635 = vsel %vm324, %v280, 0
      %v637 = vsel %vm324, %v281, 0
      %v639 = vsel %vm324, %v282, 0
      %v641 = vsel %vm324, %v283, 0
      %643 = vmatprep.subr.mxu0 %v629
      %644 = vmatpush1.msra.mxu0 %v627
      %645 = vmatprep.subr.mxu0 0.0
      %646 = vmatpush1.msra.mxu0 0.0
      %647 = vmatprep.subr.mxu0 0.0
      %648 = vmatpush1.msra.mxu0 0.0
      %649 = vmatprep.subr.mxu0 0.0
      %650 = vmatpush1.msra.mxu0 0.0
      %651 = vmatprep.subr.mxu0 0.0
      %652 = vmatpush1.msra.mxu0 0.0
      %653 = vmatprep.subr.mxu0 0.0
      %654 = vmatpush1.msra.mxu0 0.0
      %655 = vmatprep.subr.mxu0 0.0
      %656 = vmatpush1.msra.mxu0 0.0
      %657 = vmatprep.subr.mxu0 0.0
      %658 = vmatpush1.msra.mxu0 0.0
      %659 = vmatprep.subr.mxu0 0.0
      %660 = vmatpush1.msra.mxu0 0.0
      %661 = vmatprep.subr.mxu0 0.0
      %662 = vmatpush1.msra.mxu0 0.0
      %663 = vmatprep.subr.mxu0 0.0
      %664 = vmatpush1.msra.mxu0 0.0
      %665 = vmatprep.subr.mxu0 0.0
      %666 = vmatpush1.msra.mxu0 0.0
      %667 = vmatprep.subr.mxu0 0.0
      %668 = vmatpush1.msra.mxu0 0.0
      %669 = vmatprep.subr.mxu0 0.0
      %670 = vmatpush1.msra.mxu0 0.0
      %671 = vmatprep.subr.mxu0 0.0
      %672 = vmatpush1.msra.mxu0 0.0
      %673 = vmatprep.subr.mxu0 0.0
      %674 = vmatpush1.msra.mxu0 0.0
      %675 = vmatprep.subr.mxu0 0.0
      %676 = vmatpush1.msra.mxu0 0.0
      %677 = vmatprep.subr.mxu0 0.0
      %678 = vmatpush1.msra.mxu0 0.0
      %679 = vmatprep.subr.mxu0 0.0
      %680 = vmatpush1.msra.mxu0 0.0
      %681 = vmatprep.subr.mxu0 0.0
      %682 = vmatpush1.msra.mxu0 0.0
      %683 = vmatprep.subr.mxu0 0.0
      %684 = vmatpush1.msra.mxu0 0.0
      %685 = vmatprep.subr.mxu0 0.0
      %686 = vmatpush1.msra.mxu0 0.0
      %687 = vmatprep.subr.mxu0 0.0
      %688 = vmatpush1.msra.mxu0 0.0
      %689 = vmatprep.subr.mxu0 0.0
      %690 = vmatpush1.msra.mxu0 0.0
      %691 = vmatprep.subr.mxu0 0.0
      %692 = vmatpush1.msra.mxu0 0.0
      %693 = vmatprep.subr.mxu0 0.0
      %694 = vmatpush1.msra.mxu0 0.0
      %695 = vmatprep.subr.mxu0 0.0
      %696 = vmatpush1.msra.mxu0 0.0
      %697 = vmatprep.subr.mxu0 0.0
      %698 = vmatpush1.msra.mxu0 0.0
      %699 = vmatprep.subr.mxu0 0.0
      %700 = vmatpush1.msra.mxu0 0.0
      %701 = vmatprep.subr.mxu0 0.0
      %702 = vmatpush1.msra.mxu0 0.0
      %703 = vmatprep.subr.mxu0 0.0
      %704 = vmatpush1.msra.mxu0 0.0
      %705 = vmatprep.subr.mxu0 0.0
      %706 = vmatpush1.msra.mxu0 0.0
      %707 = vmatprep.mubr.f32.mxu0 0.0
      %708 = vmatmul.mubr.f32.gmra.mrb[0].mxu0 %v625
      %v709 = vpop.f32.mrb[0].mxu0
      %v710 = vadd.f32 %v408, %v709
      %v711 = vpop.f32.mrb[0].mxu0
      %v712 = vadd.f32 %v410, %v711
      %713 = vdwg.mxu0
      %714 = vmatprep.subr.mxu0 %v633
      %715 = vmatpush1.msra.mxu0 %v631
      %716 = vmatprep.subr.mxu0 0.0
      %717 = vmatpush1.msra.mxu0 0.0
      %718 = vmatprep.subr.mxu0 0.0
      %719 = vmatpush1.msra.mxu0 0.0
      %720 = vmatprep.subr.mxu0 0.0
      %721 = vmatpush1.msra.mxu0 0.0
      %722 = vmatprep.subr.mxu0 0.0
      %723 = vmatpush1.msra.mxu0 0.0
      %724 = vmatprep.subr.mxu0 0.0
      %725 = vmatpush1.msra.mxu0 0.0
      %726 = vmatprep.subr.mxu0 0.0
      %727 = vmatpush1.msra.mxu0 0.0
      %728 = vmatprep.subr.mxu0 0.0
      %729 = vmatpush1.msra.mxu0 0.0
      %730 = vmatprep.subr.mxu0 0.0
      %731 = vmatpush1.msra.mxu0 0.0
      %732 = vmatprep.subr.mxu0 0.0
      %733 = vmatpush1.msra.mxu0 0.0
      %734 = vmatprep.subr.mxu0 0.0
      %735 = vmatpush1.msra.mxu0 0.0
      %736 = vmatprep.subr.mxu0 0.0
      %737 = vmatpush1.msra.mxu0 0.0
      %738 = vmatprep.subr.mxu0 0.0
      %739 = vmatpush1.msra.mxu0 0.0
      %740 = vmatprep.subr.mxu0 0.0
      %741 = vmatpush1.msra.mxu0 0.0
      %742 = vmatprep.subr.mxu0 0.0
      %743 = vmatpush1.msra.mxu0 0.0
      %744 = vmatprep.subr.mxu0 0.0
      %745 = vmatpush1.msra.mxu0 0.0
      %746 = vmatprep.subr.mxu0 0.0
      %747 = vmatpush1.msra.mxu0 0.0
      %748 = vmatprep.subr.mxu0 0.0
      %749 = vmatpush1.msra.mxu0 0.0
      %750 = vmatprep.subr.mxu0 0.0
      %751 = vmatpush1.msra.mxu0 0.0
      %752 = vmatprep.subr.mxu0 0.0
      %753 = vmatpush1.msra.mxu0 0.0
      %754 = vmatprep.subr.mxu0 0.0
      %755 = vmatpush1.msra.mxu0 0.0
      %756 = vmatprep.subr.mxu0 0.0
      %757 = vmatpush1.msra.mxu0 0.0
      %758 = vmatprep.subr.mxu0 0.0
      %759 = vmatpush1.msra.mxu0 0.0
      %760 = vmatprep.subr.mxu0 0.0
      %761 = vmatpush1.msra.mxu0 0.0
      %762 = vmatprep.subr.mxu0 0.0
      %763 = vmatpush1.msra.mxu0 0.0
      %764 = vmatprep.subr.mxu0 0.0
      %765 = vmatpush1.msra.mxu0 0.0
      %766 = vmatprep.subr.mxu0 0.0
      %767 = vmatpush1.msra.mxu0 0.0
      %768 = vmatprep.subr.mxu0 0.0
      %769 = vmatpush1.msra.mxu0 0.0
      %770 = vmatprep.subr.mxu0 0.0
      %771 = vmatpush1.msra.mxu0 0.0
      %772 = vmatprep.subr.mxu0 0.0
      %773 = vmatpush1.msra.mxu0 0.0
      %774 = vmatprep.subr.mxu0 0.0
      %775 = vmatpush1.msra.mxu0 0.0
      %776 = vmatprep.subr.mxu0 0.0
      %777 = vmatpush1.msra.mxu0 0.0
      %778 = vmatprep.mubr.f32.mxu0 0.0
      %779 = vmatmul.mubr.f32.gmra.mrb[0].mxu0 %v625
      %v780 = vpop.f32.mrb[0].mxu0
      %v781 = vadd.f32 %v479, %v780
      %v782 = vpop.f32.mrb[0].mxu0
      %v783 = vadd.f32 %v481, %v782
      %784 = vdwg.mxu0
      %785 = vmatprep.subr.mxu0 %v637
      %786 = vmatpush1.msra.mxu0 %v635
      %787 = vmatprep.subr.mxu0 0.0
      %788 = vmatpush1.msra.mxu0 0.0
      %789 = vmatprep.subr.mxu0 0.0
      %790 = vmatpush1.msra.mxu0 0.0
      %791 = vmatprep.subr.mxu0 0.0
      %792 = vmatpush1.msra.mxu0 0.0
      %793 = vmatprep.subr.mxu0 0.0
      %794 = vmatpush1.msra.mxu0 0.0
      %795 = vmatprep.subr.mxu0 0.0
      %796 = vmatpush1.msra.mxu0 0.0
      %797 = vmatprep.subr.mxu0 0.0
      %798 = vmatpush1.msra.mxu0 0.0
      %799 = vmatprep.subr.mxu0 0.0
      %800 = vmatpush1.msra.mxu0 0.0
      %801 = vmatprep.subr.mxu0 0.0
      %802 = vmatpush1.msra.mxu0 0.0
      %803 = vmatprep.subr.mxu0 0.0
      %804 = vmatpush1.msra.mxu0 0.0
      %805 = vmatprep.subr.mxu0 0.0
      %806 = vmatpush1.msra.mxu0 0.0
      %807 = vmatprep.subr.mxu0 0.0
      %808 = vmatpush1.msra.mxu0 0.0
      %809 = vmatprep.subr.mxu0 0.0
      %810 = vmatpush1.msra.mxu0 0.0
      %811 = vmatprep.subr.mxu0 0.0
      %812 = vmatpush1.msra.mxu0 0.0
      %813 = vmatprep.subr.mxu0 0.0
      %814 = vmatpush1.msra.mxu0 0.0
      %815 = vmatprep.subr.mxu0 0.0
      %816 = vmatpush1.msra.mxu0 0.0
      %817 = vmatprep.subr.mxu0 0.0
      %818 = vmatpush1.msra.mxu0 0.0
      %819 = vmatprep.subr.mxu0 0.0
      %820 = vmatpush1.msra.mxu0 0.0
      %821 = vmatprep.subr.mxu0 0.0
      %822 = vmatpush1.msra.mxu0 0.0
      %823 = vmatprep.subr.mxu0 0.0
      %824 = vmatpush1.msra.mxu0 0.0
      %825 = vmatprep.subr.mxu0 0.0
      %826 = vmatpush1.msra.mxu0 0.0
      %827 = vmatprep.subr.mxu0 0.0
      %828 = vmatpush1.msra.mxu0 0.0
      %829 = vmatprep.subr.mxu0 0.0
      %830 = vmatpush1.msra.mxu0 0.0
      %831 = vmatprep.subr.mxu0 0.0
      %832 = vmatpush1.msra.mxu0 0.0
      %833 = vmatprep.subr.mxu0 0.0
      %834 = vmatpush1.msra.mxu0 0.0
      %835 = vmatprep.subr.mxu0 0.0
      %836 = vmatpush1.msra.mxu0 0.0
      %837 = vmatprep.subr.mxu0 0.0
      %838 = vmatpush1.msra.mxu0 0.0
      %839 = vmatprep.subr.mxu0 0.0
      %840 = vmatpush1.msra.mxu0 0.0
      %841 = vmatprep.subr.mxu0 0.0
      %842 = vmatpush1.msra.mxu0 0.0
      %843 = vmatprep.subr.mxu0 0.0
      %844 = vmatpush1.msra.mxu0 0.0
      %845 = vmatprep.subr.mxu0 0.0
      %846 = vmatpush1.msra.mxu0 0.0
      %847 = vmatprep.subr.mxu0 0.0
      %848 = vmatpush1.msra.mxu0 0.0
      %849 = vmatprep.mubr.f32.mxu0 0.0
      %850 = vmatmul.mubr.f32.gmra.mrb[0].mxu0 %v625
      %v851 = vpop.f32.mrb[0].mxu0
      %v852 = vadd.f32 %v550, %v851
      %v853 = vpop.f32.mrb[0].mxu0
      %v854 = vadd.f32 %v552, %v853
      %855 = vdwg.mxu0
      %856 = vmatprep.subr.mxu0 %v641
      %857 = vmatpush1.msra.mxu0 %v639
      %858 = vmatprep.subr.mxu0 0.0
      %859 = vmatpush1.msra.mxu0 0.0
      %860 = vmatprep.subr.mxu0 0.0
      %861 = vmatpush1.msra.mxu0 0.0
      %862 = vmatprep.subr.mxu0 0.0
      %863 = vmatpush1.msra.mxu0 0.0
      %864 = vmatprep.subr.mxu0 0.0
      %865 = vmatpush1.msra.mxu0 0.0
      %866 = vmatprep.subr.mxu0 0.0
      %867 = vmatpush1.msra.mxu0 0.0
      %868 = vmatprep.subr.mxu0 0.0
      %869 = vmatpush1.msra.mxu0 0.0
      %870 = vmatprep.subr.mxu0 0.0
      %871 = vmatpush1.msra.mxu0 0.0
      %872 = vmatprep.subr.mxu0 0.0
      %873 = vmatpush1.msra.mxu0 0.0
      %874 = vmatprep.subr.mxu0 0.0
      %875 = vmatpush1.msra.mxu0 0.0
      %876 = vmatprep.subr.mxu0 0.0
      %877 = vmatpush1.msra.mxu0 0.0
      %878 = vmatprep.subr.mxu0 0.0
      %879 = vmatpush1.msra.mxu0 0.0
      %880 = vmatprep.subr.mxu0 0.0
      %881 = vmatpush1.msra.mxu0 0.0
      %882 = vmatprep.subr.mxu0 0.0
      %883 = vmatpush1.msra.mxu0 0.0
      %884 = vmatprep.subr.mxu0 0.0
      %885 = vmatpush1.msra.mxu0 0.0
      %886 = vmatprep.subr.mxu0 0.0
      %887 = vmatpush1.msra.mxu0 0.0
      %888 = vmatprep.subr.mxu0 0.0
      %889 = vmatpush1.msra.mxu0 0.0
      %890 = vmatprep.subr.mxu0 0.0
      %891 = vmatpush1.msra.mxu0 0.0
      %892 = vmatprep.subr.mxu0 0.0
      %893 = vmatpush1.msra.mxu0 0.0
      %894 = vmatprep.subr.mxu0 0.0
      %895 = vmatpush1.msra.mxu0 0.0
      %896 = vmatprep.subr.mxu0 0.0
      %897 = vmatpush1.msra.mxu0 0.0
      %898 = vmatprep.subr.mxu0 0.0
      %899 = vmatpush1.msra.mxu0 0.0
      %900 = vmatprep.subr.mxu0 0.0
      %901 = vmatpush1.msra.mxu0 0.0
      %902 = vmatprep.subr.mxu0 0.0
      %903 = vmatpush1.msra.mxu0 0.0
      %904 = vmatprep.subr.mxu0 0.0
      %905 = vmatpush1.msra.mxu0 0.0
      %906 = vmatprep.subr.mxu0 0.0
      %907 = vmatpush1.msra.mxu0 0.0
      %908 = vmatprep.subr.mxu0 0.0
      %909 = vmatpush1.msra.mxu0 0.0
      %910 = vmatprep.subr.mxu0 0.0
      %911 = vmatpush1.msra.mxu0 0.0
      %912 = vmatprep.subr.mxu0 0.0
      %913 = vmatpush1.msra.mxu0 0.0
      %914 = vmatprep.subr.mxu0 0.0
      %915 = vmatpush1.msra.mxu0 0.0
      %916 = vmatprep.subr.mxu0 0.0
      %917 = vmatpush1.msra.mxu0 0.0
      %918 = vmatprep.subr.mxu0 0.0
      %919 = vmatpush1.msra.mxu0 0.0
      %920 = vmatprep.mubr.f32.mxu0 0.0
      %921 = vmatmul.mubr.f32.gmra.mrb[0].mxu0 %v625
      %v922 = vpop.f32.mrb[0].mxu0
      %v923 = vadd.f32 %v621, %v922
      %v924 = vpop.f32.mrb[0].mxu0
      %v925 = vadd.f32 %v623, %v924
      %926 = vdwg.mxu0
      %927 = vrot.lane.b32.xlu0 %v288, 120
      %v928 = vpop.permute.xlu0 %927
      %929 = vrot.lane.b32.xlu0 %v286, 126
      %v930 = vpop.permute.xlu0 %929
      %931 = vrot.lane.b32.xlu0 %v277, 126
      %v932 = vpop.permute.xlu0 %931
      %933 = vrot.lane.b32.xlu0 %v278, 126
      %v934 = vpop.permute.xlu0 %933
      %935 = vrot.lane.b32.xlu0 %v279, 126
      %v936 = vpop.permute.xlu0 %935
      %937 = vrot.lane.b32.xlu0 %v280, 126
      %v938 = vpop.permute.xlu0 %937
      %939 = vrot.lane.b32.xlu0 %v281, 126
      %v940 = vpop.permute.xlu0 %939
      %941 = vrot.lane.b32.xlu0 %v282, 126
      %v942 = vpop.permute.xlu0 %941
      %943 = vrot.lane.b32.xlu0 %v283, 126
      %v944 = vpop.permute.xlu0 %943
      %945 = vrot.lane.b32.xlu0 %v287, 126
      %v946 = vpop.permute.xlu0 %945
      %vm947 = vcmask 1031168
      %v948 = vsel %vm947, %v930, %v932
      %v949 = vsel %vm947, %v932, %v934
      %v950 = vsel %vm947, %v934, %v936
      %v951 = vsel %vm947, %v936, %v938
      %v952 = vsel %vm947, %v938, %v940
      %v953 = vsel %vm947, %v940, %v942
      %v954 = vsel %vm947, %v942, %v944
      %v955 = vsel %vm947, %v944, %v946
      %v956 = vsel %vm321, %v928, 0
      %v958 = vsel %vm324, %v948, 0
      %v960 = vsel %vm324, %v949, 0
      %v962 = vsel %vm324, %v950, 0
      %v964 = vsel %vm324, %v951, 0
      %v966 = vsel %vm324, %v952, 0
      %v968 = vsel %vm324, %v953, 0
      %v970 = vsel %vm324, %v954, 0
      %v972 = vsel %vm324, %v955, 0
      %974 = vmatprep.subr.mxu0 %v960
      %975 = vmatpush1.msra.mxu0 %v958
      %976 = vmatprep.subr.mxu0 0.0
      %977 = vmatpush1.msra.mxu0 0.0
      %978 = vmatprep.subr.mxu0 0.0
      %979 = vmatpush1.msra.mxu0 0.0
      %980 = vmatprep.subr.mxu0 0.0
      %981 = vmatpush1.msra.mxu0 0.0
      %982 = vmatprep.subr.mxu0 0.0
      %983 = vmatpush1.msra.mxu0 0.0
      %984 = vmatprep.subr.mxu0 0.0
      %985 = vmatpush1.msra.mxu0 0.0
      %986 = vmatprep.subr.mxu0 0.0
      %987 = vmatpush1.msra.mxu0 0.0
      %988 = vmatprep.subr.mxu0 0.0
      %989 = vmatpush1.msra.mxu0 0.0
      %990 = vmatprep.subr.mxu0 0.0
      %991 = vmatpush1.msra.mxu0 0.0
      %992 = vmatprep.subr.mxu0 0.0
      %993 = vmatpush1.msra.mxu0 0.0
      %994 = vmatprep.subr.mxu0 0.0
      %995 = vmatpush1.msra.mxu0 0.0
      %996 = vmatprep.subr.mxu0 0.0
      %997 = vmatpush1.msra.mxu0 0.0
      %998 = vmatprep.subr.mxu0 0.0
      %999 = vmatpush1.msra.mxu0 0.0
      %1000 = vmatprep.subr.mxu0 0.0
      %1001 = vmatpush1.msra.mxu0 0.0
      %1002 = vmatprep.subr.mxu0 0.0
      %1003 = vmatpush1.msra.mxu0 0.0
      %1004 = vmatprep.subr.mxu0 0.0
      %1005 = vmatpush1.msra.mxu0 0.0
      %1006 = vmatprep.subr.mxu0 0.0
      %1007 = vmatpush1.msra.mxu0 0.0
      %1008 = vmatprep.subr.mxu0 0.0
      %1009 = vmatpush1.msra.mxu0 0.0
      %1010 = vmatprep.subr.mxu0 0.0
      %1011 = vmatpush1.msra.mxu0 0.0
      %1012 = vmatprep.subr.mxu0 0.0
      %1013 = vmatpush1.msra.mxu0 0.0
      %1014 = vmatprep.subr.mxu0 0.0
      %1015 = vmatpush1.msra.mxu0 0.0
      %1016 = vmatprep.subr.mxu0 0.0
      %1017 = vmatpush1.msra.mxu0 0.0
      %1018 = vmatprep.subr.mxu0 0.0
      %1019 = vmatpush1.msra.mxu0 0.0
      %1020 = vmatprep.subr.mxu0 0.0
      %1021 = vmatpush1.msra.mxu0 0.0
      %1022 = vmatprep.subr.mxu0 0.0
      %1023 = vmatpush1.msra.mxu0 0.0
      %1024 = vmatprep.subr.mxu0 0.0
      %1025 = vmatpush1.msra.mxu0 0.0
      %1026 = vmatprep.subr.mxu0 0.0
      %1027 = vmatpush1.msra.mxu0 0.0
      %1028 = vmatprep.subr.mxu0 0.0
      %1029 = vmatpush1.msra.mxu0 0.0
      %1030 = vmatprep.subr.mxu0 0.0
      %1031 = vmatpush1.msra.mxu0 0.0
      %1032 = vmatprep.subr.mxu0 0.0
      %1033 = vmatpush1.msra.mxu0 0.0
      %1034 = vmatprep.subr.mxu0 0.0
      %1035 = vmatpush1.msra.mxu0 0.0
      %1036 = vmatprep.subr.mxu0 0.0
      %1037 = vmatpush1.msra.mxu0 0.0
      %1038 = vmatprep.mubr.f32.mxu0 0.0
      %1039 = vmatmul.mubr.f32.gmra.mrb[0].mxu0 %v956
      %v1040 = vpop.f32.mrb[0].mxu0
      %v1041 = vadd.f32 0.0, %v1040
      %v1042 = vpop.f32.mrb[0].mxu0
      %v1043 = vadd.f32 0.0, %v1042
      %1044 = vdwg.mxu0
      %1045 = vmatprep.subr.mxu0 %v964
      %1046 = vmatpush1.msra.mxu0 %v962
      %1047 = vmatprep.subr.mxu0 0.0
      %1048 = vmatpush1.msra.mxu0 0.0
      %1049 = vmatprep.subr.mxu0 0.0
      %1050 = vmatpush1.msra.mxu0 0.0
      %1051 = vmatprep.subr.mxu0 0.0
      %1052 = vmatpush1.msra.mxu0 0.0
      %1053 = vmatprep.subr.mxu0 0.0
      %1054 = vmatpush1.msra.mxu0 0.0
      %1055 = vmatprep.subr.mxu0 0.0
      %1056 = vmatpush1.msra.mxu0 0.0
      %1057 = vmatprep.subr.mxu0 0.0
      %1058 = vmatpush1.msra.mxu0 0.0
      %1059 = vmatprep.subr.mxu0 0.0
      %1060 = vmatpush1.msra.mxu0 0.0
      %1061 = vmatprep.subr.mxu0 0.0
      %1062 = vmatpush1.msra.mxu0 0.0
      %1063 = vmatprep.subr.mxu0 0.0
      %1064 = vmatpush1.msra.mxu0 0.0
      %1065 = vmatprep.subr.mxu0 0.0
      %1066 = vmatpush1.msra.mxu0 0.0
      %1067 = vmatprep.subr.mxu0 0.0
      %1068 = vmatpush1.msra.mxu0 0.0
      %1069 = vmatprep.subr.mxu0 0.0
      %1070 = vmatpush1.msra.mxu0 0.0
      %1071 = vmatprep.subr.mxu0 0.0
      %1072 = vmatpush1.msra.mxu0 0.0
      %1073 = vmatprep.subr.mxu0 0.0
      %1074 = vmatpush1.msra.mxu0 0.0
      %1075 = vmatprep.subr.mxu0 0.0
      %1076 = vmatpush1.msra.mxu0 0.0
      %1077 = vmatprep.subr.mxu0 0.0
      %1078 = vmatpush1.msra.mxu0 0.0
      %1079 = vmatprep.subr.mxu0 0.0
      %1080 = vmatpush1.msra.mxu0 0.0
      %1081 = vmatprep.subr.mxu0 0.0
      %1082 = vmatpush1.msra.mxu0 0.0
      %1083 = vmatprep.subr.mxu0 0.0
      %1084 = vmatpush1.msra.mxu0 0.0
      %1085 = vmatprep.subr.mxu0 0.0
      %1086 = vmatpush1.msra.mxu0 0.0
      %1087 = vmatprep.subr.mxu0 0.0
      %1088 = vmatpush1.msra.mxu0 0.0
      %1089 = vmatprep.subr.mxu0 0.0
      %1090 = vmatpush1.msra.mxu0 0.0
      %1091 = vmatprep.subr.mxu0 0.0
      %1092 = vmatpush1.msra.mxu0 0.0
      %1093 = vmatprep.subr.mxu0 0.0
      %1094 = vmatpush1.msra.mxu0 0.0
      %1095 = vmatprep.subr.mxu0 0.0
      %1096 = vmatpush1.msra.mxu0 0.0
      %1097 = vmatprep.subr.mxu0 0.0
      %1098 = vmatpush1.msra.mxu0 0.0
      %1099 = vmatprep.subr.mxu0 0.0
      %1100 = vmatpush1.msra.mxu0 0.0
      %1101 = vmatprep.subr.mxu0 0.0
      %1102 = vmatpush1.msra.mxu0 0.0
      %1103 = vmatprep.subr.mxu0 0.0
      %1104 = vmatpush1.msra.mxu0 0.0
      %1105 = vmatprep.subr.mxu0 0.0
      %1106 = vmatpush1.msra.mxu0 0.0
      %1107 = vmatprep.subr.mxu0 0.0
      %1108 = vmatpush1.msra.mxu0 0.0
      %1109 = vmatprep.mubr.f32.mxu0 0.0
      %1110 = vmatmul.mubr.f32.gmra.mrb[0].mxu0 %v956
      %v1111 = vpop.f32.mrb[0].mxu0
      %v1112 = vadd.f32 0.0, %v1111
      %v1113 = vpop.f32.mrb[0].mxu0
      %v1114 = vadd.f32 0.0, %v1113
      %1115 = vdwg.mxu0
      %1116 = vmatprep.subr.mxu0 %v968
      %1117 = vmatpush1.msra.mxu0 %v966
      %1118 = vmatprep.subr.mxu0 0.0
      %1119 = vmatpush1.msra.mxu0 0.0
      %1120 = vmatprep.subr.mxu0 0.0
      %1121 = vmatpush1.msra.mxu0 0.0
      %1122 = vmatprep.subr.mxu0 0.0
      %1123 = vmatpush1.msra.mxu0 0.0
      %1124 = vmatprep.subr.mxu0 0.0
      %1125 = vmatpush1.msra.mxu0 0.0
      %1126 = vmatprep.subr.mxu0 0.0
      %1127 = vmatpush1.msra.mxu0 0.0
      %1128 = vmatprep.subr.mxu0 0.0
      %1129 = vmatpush1.msra.mxu0 0.0
      %1130 = vmatprep.subr.mxu0 0.0
      %1131 = vmatpush1.msra.mxu0 0.0
      %1132 = vmatprep.subr.mxu0 0.0
      %1133 = vmatpush1.msra.mxu0 0.0
      %1134 = vmatprep.subr.mxu0 0.0
      %1135 = vmatpush1.msra.mxu0 0.0
      %1136 = vmatprep.subr.mxu0 0.0
      %1137 = vmatpush1.msra.mxu0 0.0
      %1138 = vmatprep.subr.mxu0 0.0
      %1139 = vmatpush1.msra.mxu0 0.0
      %1140 = vmatprep.subr.mxu0 0.0
      %1141 = vmatpush1.msra.mxu0 0.0
      %1142 = vmatprep.subr.mxu0 0.0
      %1143 = vmatpush1.msra.mxu0 0.0
      %1144 = vmatprep.subr.mxu0 0.0
      %1145 = vmatpush1.msra.mxu0 0.0
      %1146 = vmatprep.subr.mxu0 0.0
      %1147 = vmatpush1.msra.mxu0 0.0
      %1148 = vmatprep.subr.mxu0 0.0
      %1149 = vmatpush1.msra.mxu0 0.0
      %1150 = vmatprep.subr.mxu0 0.0
      %1151 = vmatpush1.msra.mxu0 0.0
      %1152 = vmatprep.subr.mxu0 0.0
      %1153 = vmatpush1.msra.mxu0 0.0
      %1154 = vmatprep.subr.mxu0 0.0
      %1155 = vmatpush1.msra.mxu0 0.0
      %1156 = vmatprep.subr.mxu0 0.0
      %1157 = vmatpush1.msra.mxu0 0.0
      %1158 = vmatprep.subr.mxu0 0.0
      %1159 = vmatpush1.msra.mxu0 0.0
      %1160 = vmatprep.subr.mxu0 0.0
      %1161 = vmatpush1.msra.mxu0 0.0
      %1162 = vmatprep.subr.mxu0 0.0
      %1163 = vmatpush1.msra.mxu0 0.0
      %1164 = vmatprep.subr.mxu0 0.0
      %1165 = vmatpush1.msra.mxu0 0.0
      %1166 = vmatprep.subr.mxu0 0.0
      %1167 = vmatpush1.msra.mxu0 0.0
      %1168 = vmatprep.subr.mxu0 0.0
      %1169 = vmatpush1.msra.mxu0 0.0
      %1170 = vmatprep.subr.mxu0 0.0
      %1171 = vmatpush1.msra.mxu0 0.0
      %1172 = vmatprep.subr.mxu0 0.0
      %1173 = vmatpush1.msra.mxu0 0.0
      %1174 = vmatprep.subr.mxu0 0.0
      %1175 = vmatpush1.msra.mxu0 0.0
      %1176 = vmatprep.subr.mxu0 0.0
      %1177 = vmatpush1.msra.mxu0 0.0
      %1178 = vmatprep.subr.mxu0 0.0
      %1179 = vmatpush1.msra.mxu0 0.0
      %1180 = vmatprep.mubr.f32.mxu0 0.0
      %1181 = vmatmul.mubr.f32.gmra.mrb[0].mxu0 %v956
      %v1182 = vpop.f32.mrb[0].mxu0
      %v1183 = vadd.f32 0.0, %v1182
      %v1184 = vpop.f32.mrb[0].mxu0
      %v1185 = vadd.f32 0.0, %v1184
      %1186 = vdwg.mxu0
      %1187 = vmatprep.subr.mxu0 %v972
      %1188 = vmatpush1.msra.mxu0 %v970
      %1189 = vmatprep.subr.mxu0 0.0
      %1190 = vmatpush1.msra.mxu0 0.0
      %1191 = vmatprep.subr.mxu0 0.0
      %1192 = vmatpush1.msra.mxu0 0.0
      %1193 = vmatprep.subr.mxu0 0.0
      %1194 = vmatpush1.msra.mxu0 0.0
      %1195 = vmatprep.subr.mxu0 0.0
      %1196 = vmatpush1.msra.mxu0 0.0
      %1197 = vmatprep.subr.mxu0 0.0
      %1198 = vmatpush1.msra.mxu0 0.0
      %1199 = vmatprep.subr.mxu0 0.0
      %1200 = vmatpush1.msra.mxu0 0.0
      %1201 = vmatprep.subr.mxu0 0.0
      %1202 = vmatpush1.msra.mxu0 0.0
      %1203 = vmatprep.subr.mxu0 0.0
      %1204 = vmatpush1.msra.mxu0 0.0
      %1205 = vmatprep.subr.mxu0 0.0
      %1206 = vmatpush1.msra.mxu0 0.0
      %1207 = vmatprep.subr.mxu0 0.0
      %1208 = vmatpush1.msra.mxu0 0.0
      %1209 = vmatprep.subr.mxu0 0.0
      %1210 = vmatpush1.msra.mxu0 0.0
      %1211 = vmatprep.subr.mxu0 0.0
      %1212 = vmatpush1.msra.mxu0 0.0
      %1213 = vmatprep.subr.mxu0 0.0
      %1214 = vmatpush1.msra.mxu0 0.0
      %1215 = vmatprep.subr.mxu0 0.0
      %1216 = vmatpush1.msra.mxu0 0.0
      %1217 = vmatprep.subr.mxu0 0.0
      %1218 = vmatpush1.msra.mxu0 0.0
      %1219 = vmatprep.subr.mxu0 0.0
      %1220 = vmatpush1.msra.mxu0 0.0
      %1221 = vmatprep.subr.mxu0 0.0
      %1222 = vmatpush1.msra.mxu0 0.0
      %1223 = vmatprep.subr.mxu0 0.0
      %1224 = vmatpush1.msra.mxu0 0.0
      %1225 = vmatprep.subr.mxu0 0.0
      %1226 = vmatpush1.msra.mxu0 0.0
      %1227 = vmatprep.subr.mxu0 0.0
      %1228 = vmatpush1.msra.mxu0 0.0
      %1229 = vmatprep.subr.mxu0 0.0
      %1230 = vmatpush1.msra.mxu0 0.0
      %1231 = vmatprep.subr.mxu0 0.0
      %1232 = vmatpush1.msra.mxu0 0.0
      %1233 = vmatprep.subr.mxu0 0.0
      %1234 = vmatpush1.msra.mxu0 0.0
      %1235 = vmatprep.subr.mxu0 0.0
      %1236 = vmatpush1.msra.mxu0 0.0
      %1237 = vmatprep.subr.mxu0 0.0
      %1238 = vmatpush1.msra.mxu0 0.0
      %1239 = vmatprep.subr.mxu0 0.0
      %1240 = vmatpush1.msra.mxu0 0.0
      %1241 = vmatprep.subr.mxu0 0.0
      %1242 = vmatpush1.msra.mxu0 0.0
      %1243 = vmatprep.subr.mxu0 0.0
      %1244 = vmatpush1.msra.mxu0 0.0
      %1245 = vmatprep.subr.mxu0 0.0
      %1246 = vmatpush1.msra.mxu0 0.0
      %1247 = vmatprep.subr.mxu0 0.0
      %1248 = vmatpush1.msra.mxu0 0.0
      %1249 = vmatprep.subr.mxu0 0.0
      %1250 = vmatpush1.msra.mxu0 0.0
      %1251 = vmatprep.mubr.f32.mxu0 0.0
      %1252 = vmatmul.mubr.f32.gmra.mrb[0].mxu0 %v956
      %v1253 = vpop.f32.mrb[0].mxu0
      %v1254 = vadd.f32 0.0, %v1253
      %v1255 = vpop.f32.mrb[0].mxu0
      %v1256 = vadd.f32 0.0, %v1255
      %1257 = vdwg.mxu0
      %v1258 = vadd.f32 %v710, %v1041
      %v1259 = vadd.f32 %v712, %v1043
      %v1260 = vadd.f32 %v781, %v1112
      %v1261 = vadd.f32 %v783, %v1114
      %v1262 = vadd.f32 %v852, %v1183
      %v1263 = vadd.f32 %v854, %v1185
      %v1264 = vadd.f32 %v923, %v1254
      %v1265 = vadd.f32 %v925, %v1256
      %v1266 = vld [vmem:[%s3] sm:$0xf]
      %1268 = vset.pattern.permute.xlu0 0
      %1269 = vperm.xlu0 %1268, %v1266
      %v1270 = vpop.permute.xlu0 %1269
      %v1272 = vadd.f32 %v1258, %v1270
      %v1273 = vadd.f32 %v1259, %v1270
      %v1274 = vadd.f32 %v1260, %v1270
      %v1275 = vadd.f32 %v1261, %v1270
      %v1276 = vadd.f32 %v1262, %v1270
      %v1277 = vadd.f32 %v1263, %v1270
      %v1278 = vadd.f32 %v1264, %v1270
      %v1279 = vadd.f32 %v1265, %v1270
      %v1280 = vsel %vm324, %v1272, 0.0
      %v1281 = vsel %vm324, %v1273, 0.0
      %v1282 = vadd.f32 %v1280, %v1281
      %v1283 = vsel %vm324, %v1274, 0.0
      %v1284 = vadd.f32 %v1282, %v1283
      %v1285 = vsel %vm324, %v1275, 0.0
      %v1286 = vadd.f32 %v1284, %v1285
      %v1287 = vsel %vm324, %v1276, 0.0
      %v1288 = vadd.f32 %v1286, %v1287
      %v1289 = vsel %vm324, %v1277, 0.0
      %v1290 = vadd.f32 %v1288, %v1289
      %v1291 = vsel %vm324, %v1278, 0.0
      %v1292 = vadd.f32 %v1290, %v1291
      %v1293 = vsel %vm324, %v1279, 0.0
      %v1294 = vadd.f32 %v1292, %v1293
      %1295 = vadd.xlane.f32.xlu0 %v1294
      %v1296 = vpop.xlane.xlu0 %1295
      %v1297 = vmul.f32 %v1272, %v1272
      %v1298 = vmul.f32 %v1273, %v1273
      %v1299 = vmul.f32 %v1274, %v1274
      %v1300 = vmul.f32 %v1275, %v1275
      %v1301 = vmul.f32 %v1276, %v1276
      %v1302 = vmul.f32 %v1277, %v1277
      %v1303 = vmul.f32 %v1278, %v1278
      %v1304 = vmul.f32 %v1279, %v1279
      %v1305 = vsel %vm324, %v1297, 0.0
      %v1306 = vsel %vm324, %v1298, 0.0
      %v1307 = vadd.f32 %v1305, %v1306
      %v1308 = vsel %vm324, %v1299, 0.0
      %v1309 = vadd.f32 %v1307, %v1308
      %v1310 = vsel %vm324, %v1300, 0.0
      %v1311 = vadd.f32 %v1309, %v1310
      %v1312 = vsel %vm324, %v1301, 0.0
      %v1313 = vadd.f32 %v1311, %v1312
      %v1314 = vsel %vm324, %v1302, 0.0
      %v1315 = vadd.f32 %v1313, %v1314
      %v1316 = vsel %vm324, %v1303, 0.0
      %v1317 = vadd.f32 %v1315, %v1316
      %v1318 = vsel %vm324, %v1304, 0.0
      %v1319 = vadd.f32 %v1317, %v1318
      %1320 = vadd.xlane.f32.xlu0 %v1319
      %v1321 = vpop.xlane.xlu0 %1320
      %v1322 = vsel %vm276, %v1296, %v1321
      %p1323 = scmp.eq.s32.totalorder %s20, 0
      // Predicated region
      $region37: #{res_convblock.3} parent=35 // pred_check
        %p1324 = pneg %p1323
      $region38: #{res_convblock.3} parent=35 // pred_check_branch
        %1326 = sbr.rel (%p1324) target = $region40
      $region39: #{res_convblock.3} parent=35 // pred_region
        %vm1327 = vcmask 11264
        %1328 = vst.msk [vmem:[%s240] sm:$0xf] %vm1327, %v1322
      $region40: #{res_convblock.3} parent=35 // pred_fallthru
        _
      %p1329 = scmp.gt.s32.totalorder %s20, 0
      // Predicated region
      $region41: #{res_convblock.3} parent=35 // pred_check
        %p1330 = pneg %p1329
      $region42: #{res_convblock.3} parent=35 // pred_check_branch
        %1332 = sbr.rel (%p1330) target = $region44
      $region43: #{res_convblock.3} parent=35 // pred_region
        %v1333 = vld [vmem:[%s240] sm:$0xf]
        %v1334 = vadd.f32 %v1333, %v1322
        %vm1335 = vcmask 11264
        %1336 = vst.msk [vmem:[%s240] sm:$0xf] %vm1335, %v1334
      $region44: #{res_convblock.3} parent=35 // pred_fallthru
        _
      %p1337 = scmp.lt.s32.totalorder %s19, 1
      %s1338 = scalar_select %p1337, %s19, 1
      %s1339 = smul.addr %s1338, 4
      %s1340 = scalar_lea.vmem %s4, %s1339
      // Predicated region
      $region45: #{res_convblock.3} parent=35 // pred_check
        %p1341 = pneg %p141
      $region46: #{res_convblock.3} parent=35 // pred_check_branch
        %1343 = sbr.rel (%p1341) target = $region48
      $region47: #{res_convblock.3} parent=35 // pred_region
        _
      $region48: #{res_convblock.3} parent=35 // pred_fallthru
        _
    $region36: #{res_convblock.3} parent=5 // pred_fallthru
      _
    %p1344 = scmp.le.s32.totalorder 2, %s10
    // Predicated region
    $region49: #{res_convblock.3} parent=5 // pred_check
      %p1345 = pneg %p1344
    $region50: #{res_convblock.3} parent=5 // pred_check_branch
      %1347 = sbr.rel (%p1345) target = $region52
    $region51: #{res_convblock.3} parent=5 // pred_region
      %s1348 = ssub.s32 %s10, 2
      // Predicated region
      $region53: #{res_convblock.3} parent=51 // pred_check
        %p1349 = pneg %p147
      $region54: #{res_convblock.3} parent=51 // pred_check_branch
        %1351 = sbr.rel (%p1349) target = $region56
      $region55: #{res_convblock.3} parent=51 // pred_region
        %p1352 = scmp.lt.s32.totalorder %s21, 1
        %s1353 = scalar_select %p1352, %s21, 1
        %s1354 = smul.addr %s1353, 4
        %s1355 = scalar_lea.vmem %s4, %s1354
      $region56: #{res_convblock.3} parent=51 // pred_fallthru
        _
    $region52: #{res_convblock.3} parent=5 // pred_fallthru
      _
  $region6: #{res_convblock.3} parent=0 // loop_footer
    %s14 = sadd.s32 1, %s10
  $region7: #{res_convblock.3} parent=0 // loop_footer_branch
    %9 = sbr.rel target = $region3
  $region8: #{res_convblock.3} parent=0 // loop_exit
    _

// kernel: res_convblock.4
$region0: #{res_convblock.4}
  #allocation0 [shape = 'u32[]', space=smem, size = 0x4, offset = 0x4, fixed_abs, tag = 'smem constant byte address 0x4 - core index']
  #allocation1 [shape = 'u32[144,128]{1,0:T(1,128)}', space=vmem, size = 0x12000, scoped, tag = 'internal scratch']
  %s0 = inlined_call_operand.vmem [shape: f32[2,4,1024], index: 0, kind: input, shape index: {}]
  %s1 = inlined_call_operand.vmem [shape: f32[2,1,4,4], index: 1, kind: input, shape index: {}]
  %s2 = inlined_call_operand.vmem [shape: f32[4,1], index: 2, kind: input, shape index: {}]
  %s3 = inlined_call_operand.vmem [shape: f32[4,1], index: 3, kind: input, shape index: {}]
  %s4 = inlined_call_operand.vmem [shape: f32[4,12], index: 4, kind: input, shape index: {}]
  %s5 = inlined_call_operand.vmem [shape: f32[4,1], index: 5, kind: input, shape index: {}]
  %s6 = inlined_call_operand.vmem [shape: f32[8,12], index: 6, kind: input, shape index: {}]
  %s7 = inlined_call_operand.vmem [shape: f32[8,1], index: 7, kind: input, shape index: {}]
  %s8 = inlined_call_operand.hbm [shape: f32[2,8,1024], index: 8, kind: output, shape index: {0}]
  %s9 = inlined_call_operand.vmem [shape: f32[2,8,2], index: 9, kind: output, shape index: {1}]
  %10 = xla_tuple %s8, %s9
  %s11 = sld [smem:[#allocation0]]
  $region81: #{res_convblock.4} parent=0
    _
  %s13 = ssub.s32 1, %s11
  %s14 = scalar_select 0, %s13, %s11
  $region1: #{res_convblock.4} parent=0
    #allocation2 [shape = 'u8[65536]{0}', space=vmem, size = 0x10000, scoped, tag = 'output window, operand 0']
    #allocation3 [shape = 's32[2]{0}', space=sflag, size = 0x8, scoped, tag = 'scoped memory for res_convblock.4']
    %15 = vsyncpa [#allocation3], 0
    %s16 = scalar_lea.sflag [#allocation3], 1
    %17 = vsyncpa %s16, 0
    loop: start=0, step=1, limit=4
    $region2: #{res_convblock.4} parent=1 // loop_pre_header
      _
    $region3: #{res_convblock.4} parent=1 // loop_header
      %s19 = sphi 0, %s23
      %p20 = scmp.ge.s32.totalorder %s19, 4
      %s26 = sphi 0, %s38
      %s27 = sphi 0, %s34
      %s28 = sphi 0, %s26
      %s29 = sphi 0, %s27
      %s30 = sphi 0, %s28
      %s31 = sphi 0, %s29
      %s43 = sphi 0, %s45
      %s46 = sphi 0, %s43
      %s47 = sphi 0, %s46
      %s63 = sphi 0, %s47
      %s69 = sphi 0, %s71
      %s72 = sphi 0, %s69
      %s73 = sphi 0, %s72
      %s89 = sphi 0, %s73
      %s93 = sphi 0, %s93
      %s95 = sphi 0, %s93
      %s96 = sphi 0, %s95
      %s110 = sphi 0, %s96
      %s114 = sphi 0, %s114
      %s116 = sphi 0, %s114
      %s117 = sphi 0, %s116
      %s131 = sphi 0, %s117
      %s135 = sphi 0, %s135
      %s137 = sphi 0, %s135
      %s138 = sphi 0, %s137
      %s152 = sphi 0, %s138
      %s156 = sphi 0, %s156
      %s158 = sphi 0, %s156
      %s159 = sphi 0, %s158
      %s173 = sphi 0, %s159
      %s177 = sphi 0, %s177
      %s179 = sphi 0, %s177
      %s180 = sphi 0, %s179
      %s194 = sphi 0, %s180
      %s198 = sphi 0, %s198
      %s200 = sphi 0, %s198
      %s201 = sphi 0, %s200
      %s215 = sphi 0, %s201
      %s223 = sphi 0, %s225
      %s226 = sphi 0, %s223
      %s227 = sphi 0, %s226
      %s243 = sphi 0, %s227
      %s249 = sphi 0, %s251
      %s252 = sphi 0, %s249
      %s253 = sphi 0, %s252
      %s269 = sphi 0, %s253
    $region4: #{res_convblock.4} parent=1 // loop_header_branch
      %22 = sbr.rel (%p20) target = $region8
    $region5: #{res_convblock.4} parent=1 // loop_body
      %s24 = ssub.s32 %s19, 1
      %s25 = ssub.s32 %s19, 2
      %s32 = sadd.s32 1, %s27
      %p33 = scmp.ge.s32.totalorder %s32, 1
      %s34 = scalar_select %p33, 0, %s32
      %s35 = sadd.s32 1, %s26
      %s36 = scalar_select %p33, %s35, %s26
      %p37 = scmp.ge.s32.totalorder %s36, 2
      %s38 = scalar_select %p37, 0, %s36
      %s39 = ssub.s32 %s26, %s38
      %s40 = ssub.s32 %s27, %s34
      %s41 = sor.u32 %s39, %s40
      %p42 = scmp.eq.s32.totalorder %s41, 0
      %s44 = sadd.s32 %s43, 1
      %s45 = scalar_select %p42, %s43, %s44
      %p48 = pneg %p42
      %p49 = scmp.eq.s32.totalorder %s19, 1
      %p50 = por %p48, %p49
      %p51 = scmp.ne.s32.totalorder %s43, %s46
      %p52 = scmp.eq.s32.totalorder %s19, 0
      %p53 = por %p51, %p52
      %p54 = scmp.ne.s32.totalorder %s43, %s46
      %p55 = scmp.eq.s32.totalorder %s24, 1
      %p56 = por %p54, %p55
      %p57 = scmp.ne.s32.totalorder %s46, %s47
      %p58 = scmp.eq.s32.totalorder %s24, 0
      %p59 = por %p57, %p58
      %p60 = scmp.ne.s32.totalorder %s46, %s47
      %p61 = scmp.eq.s32.totalorder %s25, 1
      %p62 = por %p60, %p61
      %p64 = scmp.ne.s32.totalorder %s47, %s63
      %p65 = scmp.eq.s32.totalorder %s25, 0
      %p66 = por %p64, %p65
      %s67 = ssub.s32 %s26, %s38
      %p68 = scmp.eq.s32.totalorder %s67, 0
      %s70 = sadd.s32 %s69, 1
      %s71 = scalar_select %p68, %s69, %s70
      %p74 = pneg %p68
      %p75 = scmp.eq.s32.totalorder %s19, 1
      %p76 = por %p74, %p75
      %p77 = scmp.ne.s32.totalorder %s69, %s72
      %p78 = scmp.eq.s32.totalorder %s19, 0
      %p79 = por %p77, %p78
      %p80 = scmp.ne.s32.totalorder %s69, %s72
      %p81 = scmp.eq.s32.totalorder %s24, 1
      %p82 = por %p80, %p81
      %p83 = scmp.ne.s32.totalorder %s72, %s73
      %p84 = scmp.eq.s32.totalorder %s24, 0
      %p85 = por %p83, %p84
      %p86 = scmp.ne.s32.totalorder %s72, %s73
      %p87 = scmp.eq.s32.totalorder %s25, 1
      %p88 = por %p86, %p87
      %p90 = scmp.ne.s32.totalorder %s73, %s89
      %p91 = scmp.eq.s32.totalorder %s25, 0
      %p92 = por %p90, %p91
      %s94 = sadd.s32 %s93, 1
      %p97 = scmp.eq.s32.totalorder %s19, 1
      %p98 = scmp.ne.s32.totalorder %s93, %s95
      %p99 = scmp.eq.s32.totalorder %s19, 0
      %p100 = por %p98, %p99
      %p101 = scmp.ne.s32.totalorder %s93, %s95
      %p102 = scmp.eq.s32.totalorder %s24, 1
      %p103 = por %p101, %p102
      %p104 = scmp.ne.s32.totalorder %s95, %s96
      %p105 = scmp.eq.s32.totalorder %s24, 0
      %p106 = por %p104, %p105
      %p107 = scmp.ne.s32.totalorder %s95, %s96
      %p108 = scmp.eq.s32.totalorder %s25, 1
      %p109 = por %p107, %p108
      %p111 = scmp.ne.s32.totalorder %s96, %s110
      %p112 = scmp.eq.s32.totalorder %s25, 0
      %p113 = por %p111, %p112
      %s115 = sadd.s32 %s114, 1
      %p118 = scmp.eq.s32.totalorder %s19, 1
      %p119 = scmp.ne.s32.totalorder %s114, %s116
      %p120 = scmp.eq.s32.totalorder %s19, 0
      %p121 = por %p119, %p120
      %p122 = scmp.ne.s32.totalorder %s114, %s116
      %p123 = scmp.eq.s32.totalorder %s24, 1
      %p124 = por %p122, %p123
      %p125 = scmp.ne.s32.totalorder %s116, %s117
      %p126 = scmp.eq.s32.totalorder %s24, 0
      %p127 = por %p125, %p126
      %p128 = scmp.ne.s32.totalorder %s116, %s117
      %p129 = scmp.eq.s32.totalorder %s25, 1
      %p130 = por %p128, %p129
      %p132 = scmp.ne.s32.totalorder %s117, %s131
      %p133 = scmp.eq.s32.totalorder %s25, 0
      %p134 = por %p132, %p133
      %s136 = sadd.s32 %s135, 1
      %p139 = scmp.eq.s32.totalorder %s19, 1
      %p140 = scmp.ne.s32.totalorder %s135, %s137
      %p141 = scmp.eq.s32.totalorder %s19, 0
      %p142 = por %p140, %p141
      %p143 = scmp.ne.s32.totalorder %s135, %s137
      %p144 = scmp.eq.s32.totalorder %s24, 1
      %p145 = por %p143, %p144
      %p146 = scmp.ne.s32.totalorder %s137, %s138
      %p147 = scmp.eq.s32.totalorder %s24, 0
      %p148 = por %p146, %p147
      %p149 = scmp.ne.s32.totalorder %s137, %s138
      %p150 = scmp.eq.s32.totalorder %s25, 1
      %p151 = por %p149, %p150
      %p153 = scmp.ne.s32.totalorder %s138, %s152
      %p154 = scmp.eq.s32.totalorder %s25, 0
      %p155 = por %p153, %p154
      %s157 = sadd.s32 %s156, 1
      %p160 = scmp.eq.s32.totalorder %s19, 1
      %p161 = scmp.ne.s32.totalorder %s156, %s158
      %p162 = scmp.eq.s32.totalorder %s19, 0
      %p163 = por %p161, %p162
      %p164 = scmp.ne.s32.totalorder %s156, %s158
      %p165 = scmp.eq.s32.totalorder %s24, 1
      %p166 = por %p164, %p165
      %p167 = scmp.ne.s32.totalorder %s158, %s159
      %p168 = scmp.eq.s32.totalorder %s24, 0
      %p169 = por %p167, %p168
      %p170 = scmp.ne.s32.totalorder %s158, %s159
      %p171 = scmp.eq.s32.totalorder %s25, 1
      %p172 = por %p170, %p171
      %p174 = scmp.ne.s32.totalorder %s159, %s173
      %p175 = scmp.eq.s32.totalorder %s25, 0
      %p176 = por %p174, %p175
      %s178 = sadd.s32 %s177, 1
      %p181 = scmp.eq.s32.totalorder %s19, 1
      %p182 = scmp.ne.s32.totalorder %s177, %s179
      %p183 = scmp.eq.s32.totalorder %s19, 0
      %p184 = por %p182, %p183
      %p185 = scmp.ne.s32.totalorder %s177, %s179
      %p186 = scmp.eq.s32.totalorder %s24, 1
      %p187 = por %p185, %p186
      %p188 = scmp.ne.s32.totalorder %s179, %s180
      %p189 = scmp.eq.s32.totalorder %s24, 0
      %p190 = por %p188, %p189
      %p191 = scmp.ne.s32.totalorder %s179, %s180
      %p192 = scmp.eq.s32.totalorder %s25, 1
      %p193 = por %p191, %p192
      %p195 = scmp.ne.s32.totalorder %s180, %s194
      %p196 = scmp.eq.s32.totalorder %s25, 0
      %p197 = por %p195, %p196
      %s199 = sadd.s32 %s198, 1
      %p202 = scmp.eq.s32.totalorder %s19, 1
      %p203 = scmp.ne.s32.totalorder %s198, %s200
      %p204 = scmp.eq.s32.totalorder %s19, 0
      %p205 = por %p203, %p204
      %p206 = scmp.ne.s32.totalorder %s198, %s200
      %p207 = scmp.eq.s32.totalorder %s24, 1
      %p208 = por %p206, %p207
      %p209 = scmp.ne.s32.totalorder %s200, %s201
      %p210 = scmp.eq.s32.totalorder %s24, 0
      %p211 = por %p209, %p210
      %p212 = scmp.ne.s32.totalorder %s200, %s201
      %p213 = scmp.eq.s32.totalorder %s25, 1
      %p214 = por %p212, %p213
      %p216 = scmp.ne.s32.totalorder %s201, %s215
      %p217 = scmp.eq.s32.totalorder %s25, 0
      %p218 = por %p216, %p217
      %s219 = ssub.s32 %s26, %s38
      %s220 = ssub.s32 %s27, %s34
      %s221 = sor.u32 %s219, %s220
      %p222 = scmp.eq.s32.totalorder %s221, 0
      %s224 = sadd.s32 %s223, 1
      %s225 = scalar_select %p222, %s223, %s224
      %p228 = pneg %p222
      %p229 = scmp.eq.s32.totalorder %s19, 1
      %p230 = por %p228, %p229
      %p231 = scmp.ne.s32.totalorder %s223, %s226
      %p232 = scmp.eq.s32.totalorder %s19, 0
      %p233 = por %p231, %p232
      %p234 = scmp.ne.s32.totalorder %s223, %s226
      %p235 = scmp.eq.s32.totalorder %s24, 1
      %p236 = por %p234, %p235
      %p237 = scmp.ne.s32.totalorder %s226, %s227
      %p238 = scmp.eq.s32.totalorder %s24, 0
      %p239 = por %p237, %p238
      %p240 = scmp.ne.s32.totalorder %s226, %s227
      %p241 = scmp.eq.s32.totalorder %s25, 1
      %p242 = por %p240, %p241
      %p244 = scmp.ne.s32.totalorder %s227, %s243
      %p245 = scmp.eq.s32.totalorder %s25, 0
      %p246 = por %p244, %p245
      %s247 = ssub.s32 %s26, %s38
      %p248 = scmp.eq.s32.totalorder %s247, 0
      %s250 = sadd.s32 %s249, 1
      %s251 = scalar_select %p248, %s249, %s250
      %p254 = pneg %p248
      %p255 = scmp.eq.s32.totalorder %s19, 1
      %p256 = por %p254, %p255
      %p257 = scmp.ne.s32.totalorder %s249, %s252
      %p258 = scmp.eq.s32.totalorder %s19, 0
      %p259 = por %p257, %p258
      %p260 = scmp.ne.s32.totalorder %s249, %s252
      %p261 = scmp.eq.s32.totalorder %s24, 1
      %p262 = por %p260, %p261
      %p263 = scmp.ne.s32.totalorder %s252, %s253
      %p264 = scmp.eq.s32.totalorder %s24, 0
      %p265 = por %p263, %p264
      %p266 = scmp.ne.s32.totalorder %s252, %s253
      %p267 = scmp.eq.s32.totalorder %s25, 1
      %p268 = por %p266, %p267
      %p270 = scmp.ne.s32.totalorder %s253, %s269
      %p271 = scmp.eq.s32.totalorder %s25, 0
      %p272 = por %p270, %p271
      %p273 = scmp.le.s32.totalorder 1, %s19
      %p274 = scmp.lt.s32.totalorder %s19, 3
      %p275 = pnand %p273, %p274
      %p276 = pneg %p275
      // Predicated region
      $region9: #{res_convblock.4} parent=5 // pred_check
        _
      $region10: #{res_convblock.4} parent=5 // pred_check_branch
        %278 = sbr.rel (%p275) target = $region12
      $region11: #{res_convblock.4} parent=5 // pred_region
        %s279 = ssub.s32 %s19, 1
        // Predicated region
        $region13: #{res_convblock.4} parent=11 // pred_check
          %p280 = pneg %p106
        $region14: #{res_convblock.4} parent=11 // pred_check_branch
          %282 = sbr.rel (%p280) target = $region16
        $region15: #{res_convblock.4} parent=11 // pred_region
          _
        $region16: #{res_convblock.4} parent=11 // pred_fallthru
          _
        // Predicated region
        $region17: #{res_convblock.4} parent=11 // pred_check
          %p283 = pneg %p127
        $region18: #{res_convblock.4} parent=11 // pred_check_branch
          %285 = sbr.rel (%p283) target = $region20
        $region19: #{res_convblock.4} parent=11 // pred_region
          _
        $region20: #{res_convblock.4} parent=11 // pred_fallthru
          _
        // Predicated region
        $region21: #{res_convblock.4} parent=11 // pred_check
          %p286 = pneg %p148
        $region22: #{res_convblock.4} parent=11 // pred_check_branch
          %288 = sbr.rel (%p286) target = $region24
        $region23: #{res_convblock.4} parent=11 // pred_region
          _
        $region24: #{res_convblock.4} parent=11 // pred_fallthru
          _
        // Predicated region
        $region25: #{res_convblock.4} parent=11 // pred_check
          %p289 = pneg %p169
        $region26: #{res_convblock.4} parent=11 // pred_check_branch
          %291 = sbr.rel (%p289) target = $region28
        $region27: #{res_convblock.4} parent=11 // pred_region
          _
        $region28: #{res_convblock.4} parent=11 // pred_fallthru
          _
        // Predicated region
        $region29: #{res_convblock.4} parent=11 // pred_check
          %p292 = pneg %p190
        $region30: #{res_convblock.4} parent=11 // pred_check_branch
          %294 = sbr.rel (%p292) target = $region32
        $region31: #{res_convblock.4} parent=11 // pred_region
          _
        $region32: #{res_convblock.4} parent=11 // pred_fallthru
          _
        // Predicated region
        $region33: #{res_convblock.4} parent=11 // pred_check
          %p295 = pneg %p211
        $region34: #{res_convblock.4} parent=11 // pred_check_branch
          %297 = sbr.rel (%p295) target = $region36
        $region35: #{res_convblock.4} parent=11 // pred_region
          _
        $region36: #{res_convblock.4} parent=11 // pred_fallthru
          _
      $region12: #{res_convblock.4} parent=5 // pred_fallthru
        _
      %p298 = scmp.lt.s32.totalorder %s19, 2
      // Predicated region
      $region37: #{res_convblock.4} parent=5 // pred_check
        %p299 = pneg %p298
      $region38: #{res_convblock.4} parent=5 // pred_check_branch
        %301 = sbr.rel (%p299) target = $region40
      $region39: #{res_convblock.4} parent=5 // pred_region
        // Predicated region
        $region41: #{res_convblock.4} parent=39 // pred_check
          %p302 = pneg %p53
        $region42: #{res_convblock.4} parent=39 // pred_check_branch
          %304 = sbr.rel (%p302) target = $region44
        $region43: #{res_convblock.4} parent=39 // pred_region
          %s305 = smul.u32 8, %s27
          %p306 = scmp.lt.s32.totalorder %s26, 1
          %s307 = scalar_select %p306, %s26, 1
          %p308 = scmp.lt.s32.totalorder %s305, 7
          %s309 = scalar_select %p308, %s305, 7
          %s310 = smul.addr %s307, 8
          %s311 = sadd.s32 %s309, %s310
          %s312 = smul.addr %s311, 4
          %s313 = scalar_lea.vmem %s0, %s312
          %s314 = smul.u32 8, %s27
        $region44: #{res_convblock.4} parent=39 // pred_fallthru
          _
        // Predicated region
        $region45: #{res_convblock.4} parent=39 // pred_check
          %p315 = pneg %p79
        $region46: #{res_convblock.4} parent=39 // pred_check_branch
          %317 = sbr.rel (%p315) target = $region48
        $region47: #{res_convblock.4} parent=39 // pred_region
          %p318 = scmp.lt.s32.totalorder %s26, 1
          %s319 = scalar_select %p318, %s26, 1
          %s320 = smul.addr %s319, 4
          %s321 = scalar_lea.vmem %s1, %s320
        $region48: #{res_convblock.4} parent=39 // pred_fallthru
          _
      $region40: #{res_convblock.4} parent=5 // pred_fallthru
        _
      %p322 = scmp.le.s32.totalorder 1, %s19
      %p323 = scmp.lt.s32.totalorder %s19, 3
      %p324 = pnand %p322, %p323
      %p325 = pneg %p324
      // Predicated region
      $region49: #{res_convblock.4} parent=5 // pred_check
        _
      $region50: #{res_convblock.4} parent=5 // pred_check_branch
        %327 = sbr.rel (%p324) target = $region52
      $region51: #{res_convblock.4} parent=5 // pred_region
        %s328 = ssub.s32 %s19, 1
        %s329 = smul.u32 8, %s29
        %p330 = scmp.lt.s32.totalorder %s28, 1
        %s331 = scalar_select %p330, %s28, 1
        %p332 = scmp.lt.s32.totalorder %s329, 7
        %s333 = scalar_select %p332, %s329, 7
        %s334 = smul.addr %s331, 8
        %s335 = sadd.s32 %s333, %s334
        %s336 = smul.addr %s335, 4
        %s337 = scalar_lea.vmem %s0, %s336
        %p338 = pneg %p59
        %p339 = pneg %p56
        %p340 = scmp.lt.s32.totalorder %s28, 1
        %s341 = scalar_select %p340, %s28, 1
        %s342 = smul.addr %s341, 4
        %s343 = scalar_lea.vmem %s1, %s342
        %p344 = pneg %p85
        %p345 = pneg %p82
        %p346 = pneg %p106
        %p347 = pneg %p103
        %p348 = pneg %p127
        %p349 = pneg %p124
        %p350 = pneg %p148
        %p351 = pneg %p145
        %p352 = pneg %p169
        %p353 = pneg %p166
        %p354 = pneg %p190
        %p355 = pneg %p187
        %p356 = pneg %p211
        %p357 = pneg %p208
        %p358 = pneg %p239
        %p359 = pneg %p236
        %s360 = sand.u32 %s226, 1
        %s361 = scalar_lea.sflag [#allocation3], %s360
        %s362 = sand.u32 %s226, 1
        %s363 = smul.addr %s362, 64
        %s364 = scalar_lea.vmem [#allocation2], %s363
        %p365 = pneg %p265
        %p366 = pneg %p262
        %p367 = scmp.lt.s32.totalorder %s28, 1
        %s368 = scalar_select %p367, %s28, 1
        %s369 = smul.addr %s368, 8
        %s370 = scalar_lea.vmem %s9, %s369
        %s371 = smul.u32 8, %s29
        %p372 = scmp.lt.s32.totalorder %s28, 1
        %s373 = scalar_select %p372, %s28, 1
        %p374 = scmp.lt.s32.totalorder %s371, 7
        %s375 = scalar_select %p374, %s371, 7
        %s376 = smul.addr %s373, 8
        %s377 = sadd.s32 %s375, %s376
        %s378 = smul.addr %s377, 4
        %s379 = scalar_lea.vmem %s0, %s378
        %s380 = smul.u32 8, %s29
        %p381 = scmp.lt.s32.totalorder %s28, 1
        %s382 = scalar_select %p381, %s28, 1
        %s383 = smul.addr %s382, 4
        %s384 = scalar_lea.vmem %s1, %s383
        %s385 = smul.u32 8, %s29
        %p386 = scmp.lt.s32.totalorder %s28, 1
        %s387 = scalar_select %p386, %s28, 1
        %s388 = smul.addr %s387, 8
        %s389 = scalar_lea.vmem %s9, %s388
        %v390 = vld [vmem:[%s379] sm:$0xff]
        %v391 = vld [vmem:[%s379 + $0x8] sm:$0xff]
        %v392 = vld [vmem:[%s379 + $0x10] sm:$0xff]
        %v393 = vld [vmem:[%s379 + $0x18] sm:$0xff]
        %s394 = smul.u32 %s29, 4
        %s395 = scalar_lea.vmem %s384, %s394
        %v396 = vld [vmem:[%s395] sm:$0xf]
        %v401 = vcombine.high %v390, %v390
        %v402 = vcombine.high %v391, %v391
        %v403 = vcombine.high %v392, %v392
        %v404 = vcombine.high %v393, %v393
        %405 = vrot.lane.b32.xlu0 %v390, 2
        %v406 = vpop.permute.xlu0 %405
        %407 = vrot.lane.b32.xlu0 %v401, 2
        %v408 = vpop.permute.xlu0 %407
        %409 = vrot.lane.b32.xlu0 %v391, 2
        %v410 = vpop.permute.xlu0 %409
        %411 = vrot.lane.b32.xlu0 %v402, 2
        %v412 = vpop.permute.xlu0 %411
        %413 = vrot.lane.b32.xlu0 %v392, 2
        %v414 = vpop.permute.xlu0 %413
        %415 = vrot.lane.b32.xlu0 %v403, 2
        %v416 = vpop.permute.xlu0 %415
        %417 = vrot.lane.b32.xlu0 %v393, 2
        %v418 = vpop.permute.xlu0 %417
        %419 = vrot.lane.b32.xlu0 %v404, 2
        %v420 = vpop.permute.xlu0 %419
        %vm421 = vcmask 15360
        %v422 = vsel %vm421, %v406, %v408
        %v423 = vsel %vm421, %v408, %v410
        %v424 = vsel %vm421, %v410, %v412
        %v425 = vsel %vm421, %v412, %v414
        %v426 = vsel %vm421, %v414, %v416
        %v427 = vsel %vm421, %v416, %v418
        %v428 = vsel %vm421, %v418, %v420
        %v431 = vsel %vm421, %v396, %v406
        %v432 = vsel %vm421, %v420, %v396
        %v433 = vld [vmem:[%s4] sm:$0xf]
        %435 = vrot.lane.b32.xlu0 %v433, 124
        %v436 = vpop.permute.xlu0 %435
        %439 = vrot.lane.b32.xlu0 %v431, 127
        %v440 = vpop.permute.xlu0 %439
        %441 = vrot.lane.b32.xlu0 %v422, 127
        %v442 = vpop.permute.xlu0 %441
        %443 = vrot.lane.b32.xlu0 %v423, 127
        %v444 = vpop.permute.xlu0 %443
        %445 = vrot.lane.b32.xlu0 %v424, 127
        %v446 = vpop.permute.xlu0 %445
        %447 = vrot.lane.b32.xlu0 %v425, 127
        %v448 = vpop.permute.xlu0 %447
        %449 = vrot.lane.b32.xlu0 %v426, 127
        %v450 = vpop.permute.xlu0 %449
        %451 = vrot.lane.b32.xlu0 %v427, 127
        %v452 = vpop.permute.xlu0 %451
        %453 = vrot.lane.b32.xlu0 %v428, 127
        %v454 = vpop.permute.xlu0 %453
        %455 = vrot.lane.b32.xlu0 %v432, 127
        %v456 = vpop.permute.xlu0 %455
        %vm457 = vcmask 1039360
        %v458 = vsel %vm457, %v440, %v442
        %v459 = vsel %vm457, %v442, %v444
        %v460 = vsel %vm457, %v444, %v446
        %v461 = vsel %vm457, %v446, %v448
        %v462 = vsel %vm457, %v448, %v450
        %v463 = vsel %vm457, %v450, %v452
        %v464 = vsel %vm457, %v452, %v454
        %v465 = vsel %vm457, %v454, %v456
        %vm466 = vcmask 31744
        %v467 = vsel %vm466, %v436, 0
        %vm469 = vcmask 1043456
        %v470 = vsel %vm469, %v458, 0
        %v472 = vsel %vm469, %v459, 0
        %v474 = vsel %vm469, %v460, 0
        %v476 = vsel %vm469, %v461, 0
        %v478 = vsel %vm469, %v462, 0
        %v480 = vsel %vm469, %v463, 0
        %v482 = vsel %vm469, %v464, 0
        %v484 = vsel %vm469, %v465, 0
        %v486 = vsel %vm469, %v456, 0
        %488 = vmatprep.subr.mxu0 %v472
        %489 = vmatpush1.msra.mxu0 %v470
        %490 = vmatprep.subr.mxu0 0.0
        %491 = vmatpush1.msra.mxu0 0.0
        %492 = vmatprep.subr.mxu0 0.0
        %493 = vmatpush1.msra.mxu0 0.0
        %494 = vmatprep.subr.mxu0 0.0
        %495 = vmatpush1.msra.mxu0 0.0
        %496 = vmatprep.subr.mxu0 0.0
        %497 = vmatpush1.msra.mxu0 0.0
        %498 = vmatprep.subr.mxu0 0.0
        %499 = vmatpush1.msra.mxu0 0.0
        %500 = vmatprep.subr.mxu0 0.0
        %501 = vmatpush1.msra.mxu0 0.0
        %502 = vmatprep.subr.mxu0 0.0
        %503 = vmatpush1.msra.mxu0 0.0
        %504 = vmatprep.subr.mxu0 0.0
        %505 = vmatpush1.msra.mxu0 0.0
        %506 = vmatprep.subr.mxu0 0.0
        %507 = vmatpush1.msra.mxu0 0.0
        %508 = vmatprep.subr.mxu0 0.0
        %509 = vmatpush1.msra.mxu0 0.0
        %510 = vmatprep.subr.mxu0 0.0
        %511 = vmatpush1.msra.mxu0 0.0
        %512 = vmatprep.subr.mxu0 0.0
        %513 = vmatpush1.msra.mxu0 0.0
        %514 = vmatprep.subr.mxu0 0.0
        %515 = vmatpush1.msra.mxu0 0.0
        %516 = vmatprep.subr.mxu0 0.0
        %517 = vmatpush1.msra.mxu0 0.0
        %518 = vmatprep.subr.mxu0 0.0
        %519 = vmatpush1.msra.mxu0 0.0
        %520 = vmatprep.subr.mxu0 0.0
        %521 = vmatpush1.msra.mxu0 0.0
        %522 = vmatprep.subr.mxu0 0.0
        %523 = vmatpush1.msra.mxu0 0.0
        %524 = vmatprep.subr.mxu0 0.0
        %525 = vmatpush1.msra.mxu0 0.0
        %526 = vmatprep.subr.mxu0 0.0
        %527 = vmatpush1.msra.mxu0 0.0
        %528 = vmatprep.subr.mxu0 0.0
        %529 = vmatpush1.msra.mxu0 0.0
        %530 = vmatprep.subr.mxu0 0.0
        %531 = vmatpush1.msra.mxu0 0.0
        %532 = vmatprep.subr.mxu0 0.0
        %533 = vmatpush1.msra.mxu0 0.0
        %534 = vmatprep.subr.mxu0 0.0
        %535 = vmatpush1.msra.mxu0 0.0
        %536 = vmatprep.subr.mxu0 0.0
        %537 = vmatpush1.msra.mxu0 0.0
        %538 = vmatprep.subr.mxu0 0.0
        %539 = vmatpush1.msra.mxu0 0.0
        %540 = vmatprep.subr.mxu0 0.0
        %541 = vmatpush1.msra.mxu0 0.0
        %542 = vmatprep.subr.mxu0 0.0
        %543 = vmatpush1.msra.mxu0 0.0
        %544 = vmatprep.subr.mxu0 0.0
        %545 = vmatpush1.msra.mxu0 0.0
        %546 = vmatprep.subr.mxu0 0.0
        %547 = vmatpush1.msra.mxu0 0.0
        %548 = vmatprep.subr.mxu0 0.0
        %549 = vmatpush1.msra.mxu0 0.0
        %550 = vmatprep.subr.mxu0 0.0
        %551 = vmatpush1.msra.mxu0 0.0
        %552 = vmatprep.mubr.f32.mxu0 0.0
        %553 = vmatmul.mubr.f32.gmra.mrb[0].mxu0 %v467
        %v554 = vpop.f32.mrb[0].mxu0
        %v555 = vadd.f32 0.0, %v554
        %v556 = vpop.f32.mrb[0].mxu0
        %v557 = vadd.f32 0.0, %v556
        %558 = vdwg.mxu0
        %559 = vmatprep.subr.mxu0 %v476
        %560 = vmatpush1.msra.mxu0 %v474
        %561 = vmatprep.subr.mxu0 0.0
        %562 = vmatpush1.msra.mxu0 0.0
        %563 = vmatprep.subr.mxu0 0.0
        %564 = vmatpush1.msra.mxu0 0.0
        %565 = vmatprep.subr.mxu0 0.0
        %566 = vmatpush1.msra.mxu0 0.0
        %567 = vmatprep.subr.mxu0 0.0
        %568 = vmatpush1.msra.mxu0 0.0
        %569 = vmatprep.subr.mxu0 0.0
        %570 = vmatpush1.msra.mxu0 0.0
        %571 = vmatprep.subr.mxu0 0.0
        %572 = vmatpush1.msra.mxu0 0.0
        %573 = vmatprep.subr.mxu0 0.0
        %574 = vmatpush1.msra.mxu0 0.0
        %575 = vmatprep.subr.mxu0 0.0
        %576 = vmatpush1.msra.mxu0 0.0
        %577 = vmatprep.subr.mxu0 0.0
        %578 = vmatpush1.msra.mxu0 0.0
        %579 = vmatprep.subr.mxu0 0.0
        %580 = vmatpush1.msra.mxu0 0.0
        %581 = vmatprep.subr.mxu0 0.0
        %582 = vmatpush1.msra.mxu0 0.0
        %583 = vmatprep.subr.mxu0 0.0
        %584 = vmatpush1.msra.mxu0 0.0
        %585 = vmatprep.subr.mxu0 0.0
        %586 = vmatpush1.msra.mxu0 0.0
        %587 = vmatprep.subr.mxu0 0.0
        %588 = vmatpush1.msra.mxu0 0.0
        %589 = vmatprep.subr.mxu0 0.0
        %590 = vmatpush1.msra.mxu0 0.0
        %591 = vmatprep.subr.mxu0 0.0
        %592 = vmatpush1.msra.mxu0 0.0
        %593 = vmatprep.subr.mxu0 0.0
        %594 = vmatpush1.msra.mxu0 0.0
        %595 = vmatprep.subr.mxu0 0.0
        %596 = vmatpush1.msra.mxu0 0.0
        %597 = vmatprep.subr.mxu0 0.0
        %598 = vmatpush1.msra.mxu0 0.0
        %599 = vmatprep.subr.mxu0 0.0
        %600 = vmatpush1.msra.mxu0 0.0
        %601 = vmatprep.subr.mxu0 0.0
        %602 = vmatpush1.msra.mxu0 0.0
        %603 = vmatprep.subr.mxu0 0.0
        %604 = vmatpush1.msra.mxu0 0.0
        %605 = vmatprep.subr.mxu0 0.0
        %606 = vmatpush1.msra.mxu0 0.0
        %607 = vmatprep.subr.mxu0 0.0
        %608 = vmatpush1.msra.mxu0 0.0
        %609 = vmatprep.subr.mxu0 0.0
        %610 = vmatpush1.msra.mxu0 0.0
        %611 = vmatprep.subr.mxu0 0.0
        %612 = vmatpush1.msra.mxu0 0.0
        %613 = vmatprep.subr.mxu0 0.0
        %614 = vmatpush1.msra.mxu0 0.0
        %615 = vmatprep.subr.mxu0 0.0
        %616 = vmatpush1.msra.mxu0 0.0
        %617 = vmatprep.subr.mxu0 0.0
        %618 = vmatpush1.msra.mxu0 0.0
        %619 = vmatprep.subr.mxu0 0.0
        %620 = vmatpush1.msra.mxu0 0.0
        %621 = vmatprep.subr.mxu0 0.0
        %622 = vmatpush1.msra.mxu0 0.0
        %623 = vmatprep.mubr.f32.mxu0 0.0
        %624 = vmatmul.mubr.f32.gmra.mrb[0].mxu0 %v467
        %v625 = vpop.f32.mrb[0].mxu0
        %v626 = vadd.f32 0.0, %v625
        %v627 = vpop.f32.mrb[0].mxu0
        %v628 = vadd.f32 0.0, %v627
        %629 = vdwg.mxu0
        %630 = vmatprep.subr.mxu0 %v480
        %631 = vmatpush1.msra.mxu0 %v478
        %632 = vmatprep.subr.mxu0 0.0
        %633 = vmatpush1.msra.mxu0 0.0
        %634 = vmatprep.subr.mxu0 0.0
        %635 = vmatpush1.msra.mxu0 0.0
        %636 = vmatprep.subr.mxu0 0.0
        %637 = vmatpush1.msra.mxu0 0.0
        %638 = vmatprep.subr.mxu0 0.0
        %639 = vmatpush1.msra.mxu0 0.0
        %640 = vmatprep.subr.mxu0 0.0
        %641 = vmatpush1.msra.mxu0 0.0
        %642 = vmatprep.subr.mxu0 0.0
        %643 = vmatpush1.msra.mxu0 0.0
        %644 = vmatprep.subr.mxu0 0.0
        %645 = vmatpush1.msra.mxu0 0.0
        %646 = vmatprep.subr.mxu0 0.0
        %647 = vmatpush1.msra.mxu0 0.0
        %648 = vmatprep.subr.mxu0 0.0
        %649 = vmatpush1.msra.mxu0 0.0
        %650 = vmatprep.subr.mxu0 0.0
        %651 = vmatpush1.msra.mxu0 0.0
        %652 = vmatprep.subr.mxu0 0.0
        %653 = vmatpush1.msra.mxu0 0.0
        %654 = vmatprep.subr.mxu0 0.0
        %655 = vmatpush1.msra.mxu0 0.0
        %656 = vmatprep.subr.mxu0 0.0
        %657 = vmatpush1.msra.mxu0 0.0
        %658 = vmatprep.subr.mxu0 0.0
        %659 = vmatpush1.msra.mxu0 0.0
        %660 = vmatprep.subr.mxu0 0.0
        %661 = vmatpush1.msra.mxu0 0.0
        %662 = vmatprep.subr.mxu0 0.0
        %663 = vmatpush1.msra.mxu0 0.0
        %664 = vmatprep.subr.mxu0 0.0
        %665 = vmatpush1.msra.mxu0 0.0
        %666 = vmatprep.subr.mxu0 0.0
        %667 = vmatpush1.msra.mxu0 0.0
        %668 = vmatprep.subr.mxu0 0.0
        %669 = vmatpush1.msra.mxu0 0.0
        %670 = vmatprep.subr.mxu0 0.0
        %671 = vmatpush1.msra.mxu0 0.0
        %672 = vmatprep.subr.mxu0 0.0
        %673 = vmatpush1.msra.mxu0 0.0
        %674 = vmatprep.subr.mxu0 0.0
        %675 = vmatpush1.msra.mxu0 0.0
        %676 = vmatprep.subr.mxu0 0.0
        %677 = vmatpush1.msra.mxu0 0.0
        %678 = vmatprep.subr.mxu0 0.0
        %679 = vmatpush1.msra.mxu0 0.0
        %680 = vmatprep.subr.mxu0 0.0
        %681 = vmatpush1.msra.mxu0 0.0
        %682 = vmatprep.subr.mxu0 0.0
        %683 = vmatpush1.msra.mxu0 0.0
        %684 = vmatprep.subr.mxu0 0.0
        %685 = vmatpush1.msra.mxu0 0.0
        %686 = vmatprep.subr.mxu0 0.0
        %687 = vmatpush1.msra.mxu0 0.0
        %688 = vmatprep.subr.mxu0 0.0
        %689 = vmatpush1.msra.mxu0 0.0
        %690 = vmatprep.subr.mxu0 0.0
        %691 = vmatpush1.msra.mxu0 0.0
        %692 = vmatprep.subr.mxu0 0.0
        %693 = vmatpush1.msra.mxu0 0.0
        %694 = vmatprep.mubr.f32.mxu0 0.0
        %695 = vmatmul.mubr.f32.gmra.mrb[0].mxu0 %v467
        %v696 = vpop.f32.mrb[0].mxu0
        %v697 = vadd.f32 0.0, %v696
        %v698 = vpop.f32.mrb[0].mxu0
        %v699 = vadd.f32 0.0, %v698
        %700 = vdwg.mxu0
        %701 = vmatprep.subr.mxu0 %v484
        %702 = vmatpush1.msra.mxu0 %v482
        %703 = vmatprep.subr.mxu0 0.0
        %704 = vmatpush1.msra.mxu0 0.0
        %705 = vmatprep.subr.mxu0 0.0
        %706 = vmatpush1.msra.mxu0 0.0
        %707 = vmatprep.subr.mxu0 0.0
        %708 = vmatpush1.msra.mxu0 0.0
        %709 = vmatprep.subr.mxu0 0.0
        %710 = vmatpush1.msra.mxu0 0.0
        %711 = vmatprep.subr.mxu0 0.0
        %712 = vmatpush1.msra.mxu0 0.0
        %713 = vmatprep.subr.mxu0 0.0
        %714 = vmatpush1.msra.mxu0 0.0
        %715 = vmatprep.subr.mxu0 0.0
        %716 = vmatpush1.msra.mxu0 0.0
        %717 = vmatprep.subr.mxu0 0.0
        %718 = vmatpush1.msra.mxu0 0.0
        %719 = vmatprep.subr.mxu0 0.0
        %720 = vmatpush1.msra.mxu0 0.0
        %721 = vmatprep.subr.mxu0 0.0
        %722 = vmatpush1.msra.mxu0 0.0
        %723 = vmatprep.subr.mxu0 0.0
        %724 = vmatpush1.msra.mxu0 0.0
        %725 = vmatprep.subr.mxu0 0.0
        %726 = vmatpush1.msra.mxu0 0.0
        %727 = vmatprep.subr.mxu0 0.0
        %728 = vmatpush1.msra.mxu0 0.0
        %729 = vmatprep.subr.mxu0 0.0
        %730 = vmatpush1.msra.mxu0 0.0
        %731 = vmatprep.subr.mxu0 0.0
        %732 = vmatpush1.msra.mxu0 0.0
        %733 = vmatprep.subr.mxu0 0.0
        %734 = vmatpush1.msra.mxu0 0.0
        %735 = vmatprep.subr.mxu0 0.0
        %736 = vmatpush1.msra.mxu0 0.0
        %737 = vmatprep.subr.mxu0 0.0
        %738 = vmatpush1.msra.mxu0 0.0
        %739 = vmatprep.subr.mxu0 0.0
        %740 = vmatpush1.msra.mxu0 0.0
        %741 = vmatprep.subr.mxu0 0.0
        %742 = vmatpush1.msra.mxu0 0.0
        %743 = vmatprep.subr.mxu0 0.0
        %744 = vmatpush1.msra.mxu0 0.0
        %745 = vmatprep.subr.mxu0 0.0
        %746 = vmatpush1.msra.mxu0 0.0
        %747 = vmatprep.subr.mxu0 0.0
        %748 = vmatpush1.msra.mxu0 0.0
        %749 = vmatprep.subr.mxu0 0.0
        %750 = vmatpush1.msra.mxu0 0.0
        %751 = vmatprep.subr.mxu0 0.0
        %752 = vmatpush1.msra.mxu0 0.0
        %753 = vmatprep.subr.mxu0 0.0
        %754 = vmatpush1.msra.mxu0 0.0
        %755 = vmatprep.subr.mxu0 0.0
        %756 = vmatpush1.msra.mxu0 0.0
        %757 = vmatprep.subr.mxu0 0.0
        %758 = vmatpush1.msra.mxu0 0.0
        %759 = vmatprep.subr.mxu0 0.0
        %760 = vmatpush1.msra.mxu0 0.0
        %761 = vmatprep.subr.mxu0 0.0
        %762 = vmatpush1.msra.mxu0 0.0
        %763 = vmatprep.subr.mxu0 0.0
        %764 = vmatpush1.msra.mxu0 0.0
        %765 = vmatprep.mubr.f32.mxu0 0.0
        %766 = vmatmul.mubr.f32.gmra.mrb[0].mxu0 %v467
        %v767 = vpop.f32.mrb[0].mxu0
        %v768 = vadd.f32 0.0, %v767
        %v769 = vpop.f32.mrb[0].mxu0
        %v770 = vadd.f32 0.0, %v769
        %771 = vdwg.mxu0
        %772 = vmatprep.subr.mxu0 0.0
        %773 = vmatpush1.msra.mxu0 %v486
        %774 = vmatprep.subr.mxu0 0.0
        %775 = vmatpush1.msra.mxu0 0.0
        %776 = vmatprep.subr.mxu0 0.0
        %777 = vmatpush1.msra.mxu0 0.0
        %778 = vmatprep.subr.mxu0 0.0
        %779 = vmatpush1.msra.mxu0 0.0
        %780 = vmatprep.subr.mxu0 0.0
        %781 = vmatpush1.msra.mxu0 0.0
        %782 = vmatprep.subr.mxu0 0.0
        %783 = vmatpush1.msra.mxu0 0.0
        %784 = vmatprep.subr.mxu0 0.0
        %785 = vmatpush1.msra.mxu0 0.0
        %786 = vmatprep.subr.mxu0 0.0
        %787 = vmatpush1.msra.mxu0 0.0
        %788 = vmatprep.subr.mxu0 0.0
        %789 = vmatpush1.msra.mxu0 0.0
        %790 = vmatprep.subr.mxu0 0.0
        %791 = vmatpush1.msra.mxu0 0.0
        %792 = vmatprep.subr.mxu0 0.0
        %793 = vmatpush1.msra.mxu0 0.0
        %794 = vmatprep.subr.mxu0 0.0
        %795 = vmatpush1.msra.mxu0 0.0
        %796 = vmatprep.subr.mxu0 0.0
        %797 = vmatpush1.msra.mxu0 0.0
        %798 = vmatprep.subr.mxu0 0.0
        %799 = vmatpush1.msra.mxu0 0.0
        %800 = vmatprep.subr.mxu0 0.0
        %801 = vmatpush1.msra.mxu0 0.0
        %802 = vmatprep.subr.mxu0 0.0
        %803 = vmatpush1.msra.mxu0 0.0
        %804 = vmatprep.subr.mxu0 0.0
        %805 = vmatpush1.msra.mxu0 0.0
        %806 = vmatprep.subr.mxu0 0.0
        %807 = vmatpush1.msra.mxu0 0.0
        %808 = vmatprep.subr.mxu0 0.0
        %809 = vmatpush1.msra.mxu0 0.0
        %810 = vmatprep.subr.mxu0 0.0
        %811 = vmatpush1.msra.mxu0 0.0
        %812 = vmatprep.subr.mxu0 0.0
        %813 = vmatpush1.msra.mxu0 0.0
        %814 = vmatprep.subr.mxu0 0.0
        %815 = vmatpush1.msra.mxu0 0.0
        %816 = vmatprep.subr.mxu0 0.0
        %817 = vmatpush1.msra.mxu0 0.0
        %818 = vmatprep.subr.mxu0 0.0
        %819 = vmatpush1.msra.mxu0 0.0
        %820 = vmatprep.subr.mxu0 0.0
        %821 = vmatpush1.msra.mxu0 0.0
        %822 = vmatprep.subr.mxu0 0.0
        %823 = vmatpush1.msra.mxu0 0.0
        %824 = vmatprep.subr.mxu0 0.0
        %825 = vmatpush1.msra.mxu0 0.0
        %826 = vmatprep.subr.mxu0 0.0
        %827 = vmatpush1.msra.mxu0 0.0
        %828 = vmatprep.subr.mxu0 0.0
        %829 = vmatpush1.msra.mxu0 0.0
        %830 = vmatprep.subr.mxu0 0.0
        %831 = vmatpush1.msra.mxu0 0.0
        %832 = vmatprep.subr.mxu0 0.0
        %833 = vmatpush1.msra.mxu0 0.0
        %834 = vmatprep.subr.mxu0 0.0
        %835 = vmatpush1.msra.mxu0 0.0
        %836 = vmatprep.mubr.f32.mxu0 0.0
        %837 = vmatmul.mubr.f32.gmra.mrb[0].mxu0 %v467
        %v838 = vpop.f32.mrb[0].mxu0
        %v839 = vadd.f32 0.0, %v838
        %v840 = vpop.f32.mrb[0].mxu0
        %841 = vdwg.mxu0
        %v842 = vsel %vm466, %v433, 0
        %v844 = vsel %vm469, %v431, 0
        %v846 = vsel %vm469, %v422, 0
        %v848 = vsel %vm469, %v423, 0
        %v850 = vsel %vm469, %v424, 0
        %v852 = vsel %vm469, %v425, 0
        %v854 = vsel %vm469, %v426, 0
        %v856 = vsel %vm469, %v427, 0
        %v858 = vsel %vm469, %v428, 0
        %v860 = vsel %vm469, %v432, 0
        %862 = vmatprep.subr.mxu0 %v846
        %863 = vmatpush1.msra.mxu0 %v844
        %864 = vmatprep.subr.mxu0 0.0
        %865 = vmatpush1.msra.mxu0 0.0
        %866 = vmatprep.subr.mxu0 0.0
        %867 = vmatpush1.msra.mxu0 0.0
        %868 = vmatprep.subr.mxu0 0.0
        %869 = vmatpush1.msra.mxu0 0.0
        %870 = vmatprep.subr.mxu0 0.0
        %871 = vmatpush1.msra.mxu0 0.0
        %872 = vmatprep.subr.mxu0 0.0
        %873 = vmatpush1.msra.mxu0 0.0
        %874 = vmatprep.subr.mxu0 0.0
        %875 = vmatpush1.msra.mxu0 0.0
        %876 = vmatprep.subr.mxu0 0.0
        %877 = vmatpush1.msra.mxu0 0.0
        %878 = vmatprep.subr.mxu0 0.0
        %879 = vmatpush1.msra.mxu0 0.0
        %880 = vmatprep.subr.mxu0 0.0
        %881 = vmatpush1.msra.mxu0 0.0
        %882 = vmatprep.subr.mxu0 0.0
        %883 = vmatpush1.msra.mxu0 0.0
        %884 = vmatprep.subr.mxu0 0.0
        %885 = vmatpush1.msra.mxu0 0.0
        %886 = vmatprep.subr.mxu0 0.0
        %887 = vmatpush1.msra.mxu0 0.0
        %888 = vmatprep.subr.mxu0 0.0
        %889 = vmatpush1.msra.mxu0 0.0
        %890 = vmatprep.subr.mxu0 0.0
        %891 = vmatpush1.msra.mxu0 0.0
        %892 = vmatprep.subr.mxu0 0.0
        %893 = vmatpush1.msra.mxu0 0.0
        %894 = vmatprep.subr.mxu0 0.0
        %895 = vmatpush1.msra.mxu0 0.0
        %896 = vmatprep.subr.mxu0 0.0
        %897 = vmatpush1.msra.mxu0 0.0
        %898 = vmatprep.subr.mxu0 0.0
        %899 = vmatpush1.msra.mxu0 0.0
        %900 = vmatprep.subr.mxu0 0.0
        %901 = vmatpush1.msra.mxu0 0.0
        %902 = vmatprep.subr.mxu0 0.0
        %903 = vmatpush1.msra.mxu0 0.0
        %904 = vmatprep.subr.mxu0 0.0
        %905 = vmatpush1.msra.mxu0 0.0
        %906 = vmatprep.subr.mxu0 0.0
        %907 = vmatpush1.msra.mxu0 0.0
        %908 = vmatprep.subr.mxu0 0.0
        %909 = vmatpush1.msra.mxu0 0.0
        %910 = vmatprep.subr.mxu0 0.0
        %911 = vmatpush1.msra.mxu0 0.0
        %912 = vmatprep.subr.mxu0 0.0
        %913 = vmatpush1.msra.mxu0 0.0
        %914 = vmatprep.subr.mxu0 0.0
        %915 = vmatpush1.msra.mxu0 0.0
        %916 = vmatprep.subr.mxu0 0.0
        %917 = vmatpush1.msra.mxu0 0.0
        %918 = vmatprep.subr.mxu0 0.0
        %919 = vmatpush1.msra.mxu0 0.0
        %920 = vmatprep.subr.mxu0 0.0
        %921 = vmatpush1.msra.mxu0 0.0
        %922 = vmatprep.subr.mxu0 0.0
        %923 = vmatpush1.msra.mxu0 0.0
        %924 = vmatprep.subr.mxu0 0.0
        %925 = vmatpush1.msra.mxu0 0.0
        %926 = vmatprep.mubr.f32.mxu0 0.0
        %927 = vmatmul.mubr.f32.gmra.mrb[0].mxu0 %v842
        %v928 = vpop.f32.mrb[0].mxu0
        %v929 = vadd.f32 %v555, %v928
        %v930 = vpop.f32.mrb[0].mxu0
        %v931 = vadd.f32 %v557, %v930
        %932 = vdwg.mxu0
        %933 = vmatprep.subr.mxu0 %v850
        %934 = vmatpush1.msra.mxu0 %v848
        %935 = vmatprep.subr.mxu0 0.0
        %936 = vmatpush1.msra.mxu0 0.0
        %937 = vmatprep.subr.mxu0 0.0
        %938 = vmatpush1.msra.mxu0 0.0
        %939 = vmatprep.subr.mxu0 0.0
        %940 = vmatpush1.msra.mxu0 0.0
        %941 = vmatprep.subr.mxu0 0.0
        %942 = vmatpush1.msra.mxu0 0.0
        %943 = vmatprep.subr.mxu0 0.0
        %944 = vmatpush1.msra.mxu0 0.0
        %945 = vmatprep.subr.mxu0 0.0
        %946 = vmatpush1.msra.mxu0 0.0
        %947 = vmatprep.subr.mxu0 0.0
        %948 = vmatpush1.msra.mxu0 0.0
        %949 = vmatprep.subr.mxu0 0.0
        %950 = vmatpush1.msra.mxu0 0.0
        %951 = vmatprep.subr.mxu0 0.0
        %952 = vmatpush1.msra.mxu0 0.0
        %953 = vmatprep.subr.mxu0 0.0
        %954 = vmatpush1.msra.mxu0 0.0
        %955 = vmatprep.subr.mxu0 0.0
        %956 = vmatpush1.msra.mxu0 0.0
        %957 = vmatprep.subr.mxu0 0.0
        %958 = vmatpush1.msra.mxu0 0.0
        %959 = vmatprep.subr.mxu0 0.0
        %960 = vmatpush1.msra.mxu0 0.0
        %961 = vmatprep.subr.mxu0 0.0
        %962 = vmatpush1.msra.mxu0 0.0
        %963 = vmatprep.subr.mxu0 0.0
        %964 = vmatpush1.msra.mxu0 0.0
        %965 = vmatprep.subr.mxu0 0.0
        %966 = vmatpush1.msra.mxu0 0.0
        %967 = vmatprep.subr.mxu0 0.0
        %968 = vmatpush1.msra.mxu0 0.0
        %969 = vmatprep.subr.mxu0 0.0
        %970 = vmatpush1.msra.mxu0 0.0
        %971 = vmatprep.subr.mxu0 0.0
        %972 = vmatpush1.msra.mxu0 0.0
        %973 = vmatprep.subr.mxu0 0.0
        %974 = vmatpush1.msra.mxu0 0.0
        %975 = vmatprep.subr.mxu0 0.0
        %976 = vmatpush1.msra.mxu0 0.0
        %977 = vmatprep.subr.mxu0 0.0
        %978 = vmatpush1.msra.mxu0 0.0
        %979 = vmatprep.subr.mxu0 0.0
        %980 = vmatpush1.msra.mxu0 0.0
        %981 = vmatprep.subr.mxu0 0.0
        %982 = vmatpush1.msra.mxu0 0.0
        %983 = vmatprep.subr.mxu0 0.0
        %984 = vmatpush1.msra.mxu0 0.0
        %985 = vmatprep.subr.mxu0 0.0
        %986 = vmatpush1.msra.mxu0 0.0
        %987 = vmatprep.subr.mxu0 0.0
        %988 = vmatpush1.msra.mxu0 0.0
        %989 = vmatprep.subr.mxu0 0.0
        %990 = vmatpush1.msra.mxu0 0.0
        %991 = vmatprep.subr.mxu0 0.0
        %992 = vmatpush1.msra.mxu0 0.0
        %993 = vmatprep.subr.mxu0 0.0
        %994 = vmatpush1.msra.mxu0 0.0
        %995 = vmatprep.subr.mxu0 0.0
        %996 = vmatpush1.msra.mxu0 0.0
        %997 = vmatprep.mubr.f32.mxu0 0.0
        %998 = vmatmul.mubr.f32.gmra.mrb[0].mxu0 %v842
        %v999 = vpop.f32.mrb[0].mxu0
        %v1000 = vadd.f32 %v626, %v999
        %v1001 = vpop.f32.mrb[0].mxu0
        %v1002 = vadd.f32 %v628, %v1001
        %1003 = vdwg.mxu0
        %1004 = vmatprep.subr.mxu0 %v854
        %1005 = vmatpush1.msra.mxu0 %v852
        %1006 = vmatprep.subr.mxu0 0.0
        %1007 = vmatpush1.msra.mxu0 0.0
        %1008 = vmatprep.subr.mxu0 0.0
        %1009 = vmatpush1.msra.mxu0 0.0
        %1010 = vmatprep.subr.mxu0 0.0
        %1011 = vmatpush1.msra.mxu0 0.0
        %1012 = vmatprep.subr.mxu0 0.0
        %1013 = vmatpush1.msra.mxu0 0.0
        %1014 = vmatprep.subr.mxu0 0.0
        %1015 = vmatpush1.msra.mxu0 0.0
        %1016 = vmatprep.subr.mxu0 0.0
        %1017 = vmatpush1.msra.mxu0 0.0
        %1018 = vmatprep.subr.mxu0 0.0
        %1019 = vmatpush1.msra.mxu0 0.0
        %1020 = vmatprep.subr.mxu0 0.0
        %1021 = vmatpush1.msra.mxu0 0.0
        %1022 = vmatprep.subr.mxu0 0.0
        %1023 = vmatpush1.msra.mxu0 0.0
        %1024 = vmatprep.subr.mxu0 0.0
        %1025 = vmatpush1.msra.mxu0 0.0
        %1026 = vmatprep.subr.mxu0 0.0
        %1027 = vmatpush1.msra.mxu0 0.0
        %1028 = vmatprep.subr.mxu0 0.0
        %1029 = vmatpush1.msra.mxu0 0.0
        %1030 = vmatprep.subr.mxu0 0.0
        %1031 = vmatpush1.msra.mxu0 0.0
        %1032 = vmatprep.subr.mxu0 0.0
        %1033 = vmatpush1.msra.mxu0 0.0
        %1034 = vmatprep.subr.mxu0 0.0
        %1035 = vmatpush1.msra.mxu0 0.0
        %1036 = vmatprep.subr.mxu0 0.0
        %1037 = vmatpush1.msra.mxu0 0.0
        %1038 = vmatprep.subr.mxu0 0.0
        %1039 = vmatpush1.msra.mxu0 0.0
        %1040 = vmatprep.subr.mxu0 0.0
        %1041 = vmatpush1.msra.mxu0 0.0
        %1042 = vmatprep.subr.mxu0 0.0
        %1043 = vmatpush1.msra.mxu0 0.0
        %1044 = vmatprep.subr.mxu0 0.0
        %1045 = vmatpush1.msra.mxu0 0.0
        %1046 = vmatprep.subr.mxu0 0.0
        %1047 = vmatpush1.msra.mxu0 0.0
        %1048 = vmatprep.subr.mxu0 0.0
        %1049 = vmatpush1.msra.mxu0 0.0
        %1050 = vmatprep.subr.mxu0 0.0
        %1051 = vmatpush1.msra.mxu0 0.0
        %1052 = vmatprep.subr.mxu0 0.0
        %1053 = vmatpush1.msra.mxu0 0.0
        %1054 = vmatprep.subr.mxu0 0.0
        %1055 = vmatpush1.msra.mxu0 0.0
        %1056 = vmatprep.subr.mxu0 0.0
        %1057 = vmatpush1.msra.mxu0 0.0
        %1058 = vmatprep.subr.mxu0 0.0
        %1059 = vmatpush1.msra.mxu0 0.0
        %1060 = vmatprep.subr.mxu0 0.0
        %1061 = vmatpush1.msra.mxu0 0.0
        %1062 = vmatprep.subr.mxu0 0.0
        %1063 = vmatpush1.msra.mxu0 0.0
        %1064 = vmatprep.subr.mxu0 0.0
        %1065 = vmatpush1.msra.mxu0 0.0
        %1066 = vmatprep.subr.mxu0 0.0
        %1067 = vmatpush1.msra.mxu0 0.0
        %1068 = vmatprep.mubr.f32.mxu0 0.0
        %1069 = vmatmul.mubr.f32.gmra.mrb[0].mxu0 %v842
        %v1070 = vpop.f32.mrb[0].mxu0
        %v1071 = vadd.f32 %v697, %v1070
        %v1072 = vpop.f32.mrb[0].mxu0
        %v1073 = vadd.f32 %v699, %v1072
        %1074 = vdwg.mxu0
        %1075 = vmatprep.subr.mxu0 %v858
        %1076 = vmatpush1.msra.mxu0 %v856
        %1077 = vmatprep.subr.mxu0 0.0
        %1078 = vmatpush1.msra.mxu0 0.0
        %1079 = vmatprep.subr.mxu0 0.0
        %1080 = vmatpush1.msra.mxu0 0.0
        %1081 = vmatprep.subr.mxu0 0.0
        %1082 = vmatpush1.msra.mxu0 0.0
        %1083 = vmatprep.subr.mxu0 0.0
        %1084 = vmatpush1.msra.mxu0 0.0
        %1085 = vmatprep.subr.mxu0 0.0
        %1086 = vmatpush1.msra.mxu0 0.0
        %1087 = vmatprep.subr.mxu0 0.0
        %1088 = vmatpush1.msra.mxu0 0.0
        %1089 = vmatprep.subr.mxu0 0.0
        %1090 = vmatpush1.msra.mxu0 0.0
        %1091 = vmatprep.subr.mxu0 0.0
        %1092 = vmatpush1.msra.mxu0 0.0
        %1093 = vmatprep.subr.mxu0 0.0
        %1094 = vmatpush1.msra.mxu0 0.0
        %1095 = vmatprep.subr.mxu0 0.0
        %1096 = vmatpush1.msra.mxu0 0.0
        %1097 = vmatprep.subr.mxu0 0.0
        %1098 = vmatpush1.msra.mxu0 0.0
        %1099 = vmatprep.subr.mxu0 0.0
        %1100 = vmatpush1.msra.mxu0 0.0
        %1101 = vmatprep.subr.mxu0 0.0
        %1102 = vmatpush1.msra.mxu0 0.0
        %1103 = vmatprep.subr.mxu0 0.0
        %1104 = vmatpush1.msra.mxu0 0.0
        %1105 = vmatprep.subr.mxu0 0.0
        %1106 = vmatpush1.msra.mxu0 0.0
        %1107 = vmatprep.subr.mxu0 0.0
        %1108 = vmatpush1.msra.mxu0 0.0
        %1109 = vmatprep.subr.mxu0 0.0
        %1110 = vmatpush1.msra.mxu0 0.0
        %1111 = vmatprep.subr.mxu0 0.0
        %1112 = vmatpush1.msra.mxu0 0.0
        %1113 = vmatprep.subr.mxu0 0.0
        %1114 = vmatpush1.msra.mxu0 0.0
        %1115 = vmatprep.subr.mxu0 0.0
        %1116 = vmatpush1.msra.mxu0 0.0
        %1117 = vmatprep.subr.mxu0 0.0
        %1118 = vmatpush1.msra.mxu0 0.0
        %1119 = vmatprep.subr.mxu0 0.0
        %1120 = vmatpush1.msra.mxu0 0.0
        %1121 = vmatprep.subr.mxu0 0.0
        %1122 = vmatpush1.msra.mxu0 0.0
        %1123 = vmatprep.subr.mxu0 0.0
        %1124 = vmatpush1.msra.mxu0 0.0
        %1125 = vmatprep.subr.mxu0 0.0
        %1126 = vmatpush1.msra.mxu0 0.0
        %1127 = vmatprep.subr.mxu0 0.0
        %1128 = vmatpush1.msra.mxu0 0.0
        %1129 = vmatprep.subr.mxu0 0.0
        %1130 = vmatpush1.msra.mxu0 0.0
        %1131 = vmatprep.subr.mxu0 0.0
        %1132 = vmatpush1.msra.mxu0 0.0
        %1133 = vmatprep.subr.mxu0 0.0
        %1134 = vmatpush1.msra.mxu0 0.0
        %1135 = vmatprep.subr.mxu0 0.0
        %1136 = vmatpush1.msra.mxu0 0.0
        %1137 = vmatprep.subr.mxu0 0.0
        %1138 = vmatpush1.msra.mxu0 0.0
        %1139 = vmatprep.mubr.f32.mxu0 0.0
        %1140 = vmatmul.mubr.f32.gmra.mrb[0].mxu0 %v842
        %v1141 = vpop.f32.mrb[0].mxu0
        %v1142 = vadd.f32 %v768, %v1141
        %v1143 = vpop.f32.mrb[0].mxu0
        %v1144 = vadd.f32 %v770, %v1143
        %1145 = vdwg.mxu0
        %1146 = vmatprep.subr.mxu0 0.0
        %1147 = vmatpush1.msra.mxu0 %v860
        %1148 = vmatprep.subr.mxu0 0.0
        %1149 = vmatpush1.msra.mxu0 0.0
        %1150 = vmatprep.subr.mxu0 0.0
        %1151 = vmatpush1.msra.mxu0 0.0
        %1152 = vmatprep.subr.mxu0 0.0
        %1153 = vmatpush1.msra.mxu0 0.0
        %1154 = vmatprep.subr.mxu0 0.0
        %1155 = vmatpush1.msra.mxu0 0.0
        %1156 = vmatprep.subr.mxu0 0.0
        %1157 = vmatpush1.msra.mxu0 0.0
        %1158 = vmatprep.subr.mxu0 0.0
        %1159 = vmatpush1.msra.mxu0 0.0
        %1160 = vmatprep.subr.mxu0 0.0
        %1161 = vmatpush1.msra.mxu0 0.0
        %1162 = vmatprep.subr.mxu0 0.0
        %1163 = vmatpush1.msra.mxu0 0.0
        %1164 = vmatprep.subr.mxu0 0.0
        %1165 = vmatpush1.msra.mxu0 0.0
        %1166 = vmatprep.subr.mxu0 0.0
        %1167 = vmatpush1.msra.mxu0 0.0
        %1168 = vmatprep.subr.mxu0 0.0
        %1169 = vmatpush1.msra.mxu0 0.0
        %1170 = vmatprep.subr.mxu0 0.0
        %1171 = vmatpush1.msra.mxu0 0.0
        %1172 = vmatprep.subr.mxu0 0.0
        %1173 = vmatpush1.msra.mxu0 0.0
        %1174 = vmatprep.subr.mxu0 0.0
        %1175 = vmatpush1.msra.mxu0 0.0
        %1176 = vmatprep.subr.mxu0 0.0
        %1177 = vmatpush1.msra.mxu0 0.0
        %1178 = vmatprep.subr.mxu0 0.0
        %1179 = vmatpush1.msra.mxu0 0.0
        %1180 = vmatprep.subr.mxu0 0.0
        %1181 = vmatpush1.msra.mxu0 0.0
        %1182 = vmatprep.subr.mxu0 0.0
        %1183 = vmatpush1.msra.mxu0 0.0
        %1184 = vmatprep.subr.mxu0 0.0
        %1185 = vmatpush1.msra.mxu0 0.0
        %1186 = vmatprep.subr.mxu0 0.0
        %1187 = vmatpush1.msra.mxu0 0.0
        %1188 = vmatprep.subr.mxu0 0.0
        %1189 = vmatpush1.msra.mxu0 0.0
        %1190 = vmatprep.subr.mxu0 0.0
        %1191 = vmatpush1.msra.mxu0 0.0
        %1192 = vmatprep.subr.mxu0 0.0
        %1193 = vmatpush1.msra.mxu0 0.0
        %1194 = vmatprep.subr.mxu0 0.0
        %1195 = vmatpush1.msra.mxu0 0.0
        %1196 = vmatprep.subr.mxu0 0.0
        %1197 = vmatpush1.msra.mxu0 0.0
        %1198 = vmatprep.subr.mxu0 0.0
        %1199 = vmatpush1.msra.mxu0 0.0
        %1200 = vmatprep.subr.mxu0 0.0
        %1201 = vmatpush1.msra.mxu0 0.0
        %1202 = vmatprep.subr.mxu0 0.0
        %1203 = vmatpush1.msra.mxu0 0.0
        %1204 = vmatprep.subr.mxu0 0.0
        %1205 = vmatpush1.msra.mxu0 0.0
        %1206 = vmatprep.subr.mxu0 0.0
        %1207 = vmatpush1.msra.mxu0 0.0
        %1208 = vmatprep.subr.mxu0 0.0
        %1209 = vmatpush1.msra.mxu0 0.0
        %1210 = vmatprep.mubr.f32.mxu0 0.0
        %1211 = vmatmul.mubr.f32.gmra.mrb[0].mxu0 %v842
        %v1212 = vpop.f32.mrb[0].mxu0
        %v1213 = vadd.f32 %v839, %v1212
        %v1214 = vpop.f32.mrb[0].mxu0
        %1215 = vdwg.mxu0
        %1216 = vrot.lane.b32.xlu0 %v433, 120
        %v1217 = vpop.permute.xlu0 %1216
        %1218 = vrot.lane.b32.xlu0 %v431, 126
        %v1219 = vpop.permute.xlu0 %1218
        %1220 = vrot.lane.b32.xlu0 %v422, 126
        %v1221 = vpop.permute.xlu0 %1220
        %1222 = vrot.lane.b32.xlu0 %v423, 126
        %v1223 = vpop.permute.xlu0 %1222
        %1224 = vrot.lane.b32.xlu0 %v424, 126
        %v1225 = vpop.permute.xlu0 %1224
        %1226 = vrot.lane.b32.xlu0 %v425, 126
        %v1227 = vpop.permute.xlu0 %1226
        %1228 = vrot.lane.b32.xlu0 %v426, 126
        %v1229 = vpop.permute.xlu0 %1228
        %1230 = vrot.lane.b32.xlu0 %v427, 126
        %v1231 = vpop.permute.xlu0 %1230
        %1232 = vrot.lane.b32.xlu0 %v428, 126
        %v1233 = vpop.permute.xlu0 %1232
        %1234 = vrot.lane.b32.xlu0 %v432, 126
        %v1235 = vpop.permute.xlu0 %1234
        %vm1236 = vcmask 1031168
        %v1237 = vsel %vm1236, %v1219, %v1221
        %v1238 = vsel %vm1236, %v1221, %v1223
        %v1239 = vsel %vm1236, %v1223, %v1225
        %v1240 = vsel %vm1236, %v1225, %v1227
        %v1241 = vsel %vm1236, %v1227, %v1229
        %v1242 = vsel %vm1236, %v1229, %v1231
        %v1243 = vsel %vm1236, %v1231, %v1233
        %v1244 = vsel %vm1236, %v1233, %v1235
        %v1245 = vsel %vm466, %v1217, 0
        %v1247 = vsel %vm469, %v1237, 0
        %v1249 = vsel %vm469, %v1238, 0
        %v1251 = vsel %vm469, %v1239, 0
        %v1253 = vsel %vm469, %v1240, 0
        %v1255 = vsel %vm469, %v1241, 0
        %v1257 = vsel %vm469, %v1242, 0
        %v1259 = vsel %vm469, %v1243, 0
        %v1261 = vsel %vm469, %v1244, 0
        %v1263 = vsel %vm469, %v1235, 0
        %1265 = vmatprep.subr.mxu0 %v1249
        %1266 = vmatpush1.msra.mxu0 %v1247
        %1267 = vmatprep.subr.mxu0 0.0
        %1268 = vmatpush1.msra.mxu0 0.0
        %1269 = vmatprep.subr.mxu0 0.0
        %1270 = vmatpush1.msra.mxu0 0.0
        %1271 = vmatprep.subr.mxu0 0.0
        %1272 = vmatpush1.msra.mxu0 0.0
        %1273 = vmatprep.subr.mxu0 0.0
        %1274 = vmatpush1.msra.mxu0 0.0
        %1275 = vmatprep.subr.mxu0 0.0
        %1276 = vmatpush1.msra.mxu0 0.0
        %1277 = vmatprep.subr.mxu0 0.0
        %1278 = vmatpush1.msra.mxu0 0.0
        %1279 = vmatprep.subr.mxu0 0.0
        %1280 = vmatpush1.msra.mxu0 0.0
        %1281 = vmatprep.subr.mxu0 0.0
        %1282 = vmatpush1.msra.mxu0 0.0
        %1283 = vmatprep.subr.mxu0 0.0
        %1284 = vmatpush1.msra.mxu0 0.0
        %1285 = vmatprep.subr.mxu0 0.0
        %1286 = vmatpush1.msra.mxu0 0.0
        %1287 = vmatprep.subr.mxu0 0.0
        %1288 = vmatpush1.msra.mxu0 0.0
        %1289 = vmatprep.subr.mxu0 0.0
        %1290 = vmatpush1.msra.mxu0 0.0
        %1291 = vmatprep.subr.mxu0 0.0
        %1292 = vmatpush1.msra.mxu0 0.0
        %1293 = vmatprep.subr.mxu0 0.0
        %1294 = vmatpush1.msra.mxu0 0.0
        %1295 = vmatprep.subr.mxu0 0.0
        %1296 = vmatpush1.msra.mxu0 0.0
        %1297 = vmatprep.subr.mxu0 0.0
        %1298 = vmatpush1.msra.mxu0 0.0
        %1299 = vmatprep.subr.mxu0 0.0
        %1300 = vmatpush1.msra.mxu0 0.0
        %1301 = vmatprep.subr.mxu0 0.0
        %1302 = vmatpush1.msra.mxu0 0.0
        %1303 = vmatprep.subr.mxu0 0.0
        %1304 = vmatpush1.msra.mxu0 0.0
        %1305 = vmatprep.subr.mxu0 0.0
        %1306 = vmatpush1.msra.mxu0 0.0
        %1307 = vmatprep.subr.mxu0 0.0
        %1308 = vmatpush1.msra.mxu0 0.0
        %1309 = vmatprep.subr.mxu0 0.0
        %1310 = vmatpush1.msra.mxu0 0.0
        %1311 = vmatprep.subr.mxu0 0.0
        %1312 = vmatpush1.msra.mxu0 0.0
        %1313 = vmatprep.subr.mxu0 0.0
        %1314 = vmatpush1.msra.mxu0 0.0
        %1315 = vmatprep.subr.mxu0 0.0
        %1316 = vmatpush1.msra.mxu0 0.0
        %1317 = vmatprep.subr.mxu0 0.0
        %1318 = vmatpush1.msra.mxu0 0.0
        %1319 = vmatprep.subr.mxu0 0.0
        %1320 = vmatpush1.msra.mxu0 0.0
        %1321 = vmatprep.subr.mxu0 0.0
        %1322 = vmatpush1.msra.mxu0 0.0
        %1323 = vmatprep.subr.mxu0 0.0
        %1324 = vmatpush1.msra.mxu0 0.0
        %1325 = vmatprep.subr.mxu0 0.0
        %1326 = vmatpush1.msra.mxu0 0.0
        %1327 = vmatprep.subr.mxu0 0.0
        %1328 = vmatpush1.msra.mxu0 0.0
        %1329 = vmatprep.mubr.f32.mxu0 0.0
        %1330 = vmatmul.mubr.f32.gmra.mrb[0].mxu0 %v1245
        %v1331 = vpop.f32.mrb[0].mxu0
        %v1332 = vadd.f32 0.0, %v1331
        %v1333 = vpop.f32.mrb[0].mxu0
        %v1334 = vadd.f32 0.0, %v1333
        %1335 = vdwg.mxu0
        %1336 = vmatprep.subr.mxu0 %v1253
        %1337 = vmatpush1.msra.mxu0 %v1251
        %1338 = vmatprep.subr.mxu0 0.0
        %1339 = vmatpush1.msra.mxu0 0.0
        %1340 = vmatprep.subr.mxu0 0.0
        %1341 = vmatpush1.msra.mxu0 0.0
        %1342 = vmatprep.subr.mxu0 0.0
        %1343 = vmatpush1.msra.mxu0 0.0
        %1344 = vmatprep.subr.mxu0 0.0
        %1345 = vmatpush1.msra.mxu0 0.0
        %1346 = vmatprep.subr.mxu0 0.0
        %1347 = vmatpush1.msra.mxu0 0.0
        %1348 = vmatprep.subr.mxu0 0.0
        %1349 = vmatpush1.msra.mxu0 0.0
        %1350 = vmatprep.subr.mxu0 0.0
        %1351 = vmatpush1.msra.mxu0 0.0
        %1352 = vmatprep.subr.mxu0 0.0
        %1353 = vmatpush1.msra.mxu0 0.0
        %1354 = vmatprep.subr.mxu0 0.0
        %1355 = vmatpush1.msra.mxu0 0.0
        %1356 = vmatprep.subr.mxu0 0.0
        %1357 = vmatpush1.msra.mxu0 0.0
        %1358 = vmatprep.subr.mxu0 0.0
        %1359 = vmatpush1.msra.mxu0 0.0
        %1360 = vmatprep.subr.mxu0 0.0
        %1361 = vmatpush1.msra.mxu0 0.0
        %1362 = vmatprep.subr.mxu0 0.0
        %1363 = vmatpush1.msra.mxu0 0.0
        %1364 = vmatprep.subr.mxu0 0.0
        %1365 = vmatpush1.msra.mxu0 0.0
        %1366 = vmatprep.subr.mxu0 0.0
        %1367 = vmatpush1.msra.mxu0 0.0
        %1368 = vmatprep.subr.mxu0 0.0
        %1369 = vmatpush1.msra.mxu0 0.0
        %1370 = vmatprep.subr.mxu0 0.0
        %1371 = vmatpush1.msra.mxu0 0.0
        %1372 = vmatprep.subr.mxu0 0.0
        %1373 = vmatpush1.msra.mxu0 0.0
        %1374 = vmatprep.subr.mxu0 0.0
        %1375 = vmatpush1.msra.mxu0 0.0
        %1376 = vmatprep.subr.mxu0 0.0
        %1377 = vmatpush1.msra.mxu0 0.0
        %1378 = vmatprep.subr.mxu0 0.0
        %1379 = vmatpush1.msra.mxu0 0.0
        %1380 = vmatprep.subr.mxu0 0.0
        %1381 = vmatpush1.msra.mxu0 0.0
        %1382 = vmatprep.subr.mxu0 0.0
        %1383 = vmatpush1.msra.mxu0 0.0
        %1384 = vmatprep.subr.mxu0 0.0
        %1385 = vmatpush1.msra.mxu0 0.0
        %1386 = vmatprep.subr.mxu0 0.0
        %1387 = vmatpush1.msra.mxu0 0.0
        %1388 = vmatprep.subr.mxu0 0.0
        %1389 = vmatpush1.msra.mxu0 0.0
        %1390 = vmatprep.subr.mxu0 0.0
        %1391 = vmatpush1.msra.mxu0 0.0
        %1392 = vmatprep.subr.mxu0 0.0
        %1393 = vmatpush1.msra.mxu0 0.0
        %1394 = vmatprep.subr.mxu0 0.0
        %1395 = vmatpush1.msra.mxu0 0.0
        %1396 = vmatprep.subr.mxu0 0.0
        %1397 = vmatpush1.msra.mxu0 0.0
        %1398 = vmatprep.subr.mxu0 0.0
        %1399 = vmatpush1.msra.mxu0 0.0
        %1400 = vmatprep.mubr.f32.mxu0 0.0
        %1401 = vmatmul.mubr.f32.gmra.mrb[0].mxu0 %v1245
        %v1402 = vpop.f32.mrb[0].mxu0
        %v1403 = vadd.f32 0.0, %v1402
        %v1404 = vpop.f32.mrb[0].mxu0
        %v1405 = vadd.f32 0.0, %v1404
        %1406 = vdwg.mxu0
        %1407 = vmatprep.subr.mxu0 %v1257
        %1408 = vmatpush1.msra.mxu0 %v1255
        %1409 = vmatprep.subr.mxu0 0.0
        %1410 = vmatpush1.msra.mxu0 0.0
        %1411 = vmatprep.subr.mxu0 0.0
        %1412 = vmatpush1.msra.mxu0 0.0
        %1413 = vmatprep.subr.mxu0 0.0
        %1414 = vmatpush1.msra.mxu0 0.0
        %1415 = vmatprep.subr.mxu0 0.0
        %1416 = vmatpush1.msra.mxu0 0.0
        %1417 = vmatprep.subr.mxu0 0.0
        %1418 = vmatpush1.msra.mxu0 0.0
        %1419 = vmatprep.subr.mxu0 0.0
        %1420 = vmatpush1.msra.mxu0 0.0
        %1421 = vmatprep.subr.mxu0 0.0
        %1422 = vmatpush1.msra.mxu0 0.0
        %1423 = vmatprep.subr.mxu0 0.0
        %1424 = vmatpush1.msra.mxu0 0.0
        %1425 = vmatprep.subr.mxu0 0.0
        %1426 = vmatpush1.msra.mxu0 0.0
        %1427 = vmatprep.subr.mxu0 0.0
        %1428 = vmatpush1.msra.mxu0 0.0
        %1429 = vmatprep.subr.mxu0 0.0
        %1430 = vmatpush1.msra.mxu0 0.0
        %1431 = vmatprep.subr.mxu0 0.0
        %1432 = vmatpush1.msra.mxu0 0.0
        %1433 = vmatprep.subr.mxu0 0.0
        %1434 = vmatpush1.msra.mxu0 0.0
        %1435 = vmatprep.subr.mxu0 0.0
        %1436 = vmatpush1.msra.mxu0 0.0
        %1437 = vmatprep.subr.mxu0 0.0
        %1438 = vmatpush1.msra.mxu0 0.0
        %1439 = vmatprep.subr.mxu0 0.0
        %1440 = vmatpush1.msra.mxu0 0.0
        %1441 = vmatprep.subr.mxu0 0.0
        %1442 = vmatpush1.msra.mxu0 0.0
        %1443 = vmatprep.subr.mxu0 0.0
        %1444 = vmatpush1.msra.mxu0 0.0
        %1445 = vmatprep.subr.mxu0 0.0
        %1446 = vmatpush1.msra.mxu0 0.0
        %1447 = vmatprep.subr.mxu0 0.0
        %1448 = vmatpush1.msra.mxu0 0.0
        %1449 = vmatprep.subr.mxu0 0.0
        %1450 = vmatpush1.msra.mxu0 0.0
        %1451 = vmatprep.subr.mxu0 0.0
        %1452 = vmatpush1.msra.mxu0 0.0
        %1453 = vmatprep.subr.mxu0 0.0
        %1454 = vmatpush1.msra.mxu0 0.0
        %1455 = vmatprep.subr.mxu0 0.0
        %1456 = vmatpush1.msra.mxu0 0.0
        %1457 = vmatprep.subr.mxu0 0.0
        %1458 = vmatpush1.msra.mxu0 0.0
        %1459 = vmatprep.subr.mxu0 0.0
        %1460 = vmatpush1.msra.mxu0 0.0
        %1461 = vmatprep.subr.mxu0 0.0
        %1462 = vmatpush1.msra.mxu0 0.0
        %1463 = vmatprep.subr.mxu0 0.0
        %1464 = vmatpush1.msra.mxu0 0.0
        %1465 = vmatprep.subr.mxu0 0.0
        %1466 = vmatpush1.msra.mxu0 0.0
        %1467 = vmatprep.subr.mxu0 0.0
        %1468 = vmatpush1.msra.mxu0 0.0
        %1469 = vmatprep.subr.mxu0 0.0
        %1470 = vmatpush1.msra.mxu0 0.0
        %1471 = vmatprep.mubr.f32.mxu0 0.0
        %1472 = vmatmul.mubr.f32.gmra.mrb[0].mxu0 %v1245
        %v1473 = vpop.f32.mrb[0].mxu0
        %v1474 = vadd.f32 0.0, %v1473
        %v1475 = vpop.f32.mrb[0].mxu0
        %v1476 = vadd.f32 0.0, %v1475
        %1477 = vdwg.mxu0
        %1478 = vmatprep.subr.mxu0 %v1261
        %1479 = vmatpush1.msra.mxu0 %v1259
        %1480 = vmatprep.subr.mxu0 0.0
        %1481 = vmatpush1.msra.mxu0 0.0
        %1482 = vmatprep.subr.mxu0 0.0
        %1483 = vmatpush1.msra.mxu0 0.0
        %1484 = vmatprep.subr.mxu0 0.0
        %1485 = vmatpush1.msra.mxu0 0.0
        %1486 = vmatprep.subr.mxu0 0.0
        %1487 = vmatpush1.msra.mxu0 0.0
        %1488 = vmatprep.subr.mxu0 0.0
        %1489 = vmatpush1.msra.mxu0 0.0
        %1490 = vmatprep.subr.mxu0 0.0
        %1491 = vmatpush1.msra.mxu0 0.0
        %1492 = vmatprep.subr.mxu0 0.0
        %1493 = vmatpush1.msra.mxu0 0.0
        %1494 = vmatprep.subr.mxu0 0.0
        %1495 = vmatpush1.msra.mxu0 0.0
        %1496 = vmatprep.subr.mxu0 0.0
        %1497 = vmatpush1.msra.mxu0 0.0
        %1498 = vmatprep.subr.mxu0 0.0
        %1499 = vmatpush1.msra.mxu0 0.0
        %1500 = vmatprep.subr.mxu0 0.0
        %1501 = vmatpush1.msra.mxu0 0.0
        %1502 = vmatprep.subr.mxu0 0.0
        %1503 = vmatpush1.msra.mxu0 0.0
        %1504 = vmatprep.subr.mxu0 0.0
        %1505 = vmatpush1.msra.mxu0 0.0
        %1506 = vmatprep.subr.mxu0 0.0
        %1507 = vmatpush1.msra.mxu0 0.0
        %1508 = vmatprep.subr.mxu0 0.0
        %1509 = vmatpush1.msra.mxu0 0.0
        %1510 = vmatprep.subr.mxu0 0.0
        %1511 = vmatpush1.msra.mxu0 0.0
        %1512 = vmatprep.subr.mxu0 0.0
        %1513 = vmatpush1.msra.mxu0 0.0
        %1514 = vmatprep.subr.mxu0 0.0
        %1515 = vmatpush1.msra.mxu0 0.0
        %1516 = vmatprep.subr.mxu0 0.0
        %1517 = vmatpush1.msra.mxu0 0.0
        %1518 = vmatprep.subr.mxu0 0.0
        %1519 = vmatpush1.msra.mxu0 0.0
        %1520 = vmatprep.subr.mxu0 0.0
        %1521 = vmatpush1.msra.mxu0 0.0
        %1522 = vmatprep.subr.mxu0 0.0
        %1523 = vmatpush1.msra.mxu0 0.0
        %1524 = vmatprep.subr.mxu0 0.0
        %1525 = vmatpush1.msra.mxu0 0.0
        %1526 = vmatprep.subr.mxu0 0.0
        %1527 = vmatpush1.msra.mxu0 0.0
        %1528 = vmatprep.subr.mxu0 0.0
        %1529 = vmatpush1.msra.mxu0 0.0
        %1530 = vmatprep.subr.mxu0 0.0
        %1531 = vmatpush1.msra.mxu0 0.0
        %1532 = vmatprep.subr.mxu0 0.0
        %1533 = vmatpush1.msra.mxu0 0.0
        %1534 = vmatprep.subr.mxu0 0.0
        %1535 = vmatpush1.msra.mxu0 0.0
        %1536 = vmatprep.subr.mxu0 0.0
        %1537 = vmatpush1.msra.mxu0 0.0
        %1538 = vmatprep.subr.mxu0 0.0
        %1539 = vmatpush1.msra.mxu0 0.0
        %1540 = vmatprep.subr.mxu0 0.0
        %1541 = vmatpush1.msra.mxu0 0.0
        %1542 = vmatprep.mubr.f32.mxu0 0.0
        %1543 = vmatmul.mubr.f32.gmra.mrb[0].mxu0 %v1245
        %v1544 = vpop.f32.mrb[0].mxu0
        %v1545 = vadd.f32 0.0, %v1544
        %v1546 = vpop.f32.mrb[0].mxu0
        %v1547 = vadd.f32 0.0, %v1546
        %1548 = vdwg.mxu0
        %1549 = vmatprep.subr.mxu0 0.0
        %1550 = vmatpush1.msra.mxu0 %v1263
        %1551 = vmatprep.subr.mxu0 0.0
        %1552 = vmatpush1.msra.mxu0 0.0
        %1553 = vmatprep.subr.mxu0 0.0
        %1554 = vmatpush1.msra.mxu0 0.0
        %1555 = vmatprep.subr.mxu0 0.0
        %1556 = vmatpush1.msra.mxu0 0.0
        %1557 = vmatprep.subr.mxu0 0.0
        %1558 = vmatpush1.msra.mxu0 0.0
        %1559 = vmatprep.subr.mxu0 0.0
        %1560 = vmatpush1.msra.mxu0 0.0
        %1561 = vmatprep.subr.mxu0 0.0
        %1562 = vmatpush1.msra.mxu0 0.0
        %1563 = vmatprep.subr.mxu0 0.0
        %1564 = vmatpush1.msra.mxu0 0.0
        %1565 = vmatprep.subr.mxu0 0.0
        %1566 = vmatpush1.msra.mxu0 0.0
        %1567 = vmatprep.subr.mxu0 0.0
        %1568 = vmatpush1.msra.mxu0 0.0
        %1569 = vmatprep.subr.mxu0 0.0
        %1570 = vmatpush1.msra.mxu0 0.0
        %1571 = vmatprep.subr.mxu0 0.0
        %1572 = vmatpush1.msra.mxu0 0.0
        %1573 = vmatprep.subr.mxu0 0.0
        %1574 = vmatpush1.msra.mxu0 0.0
        %1575 = vmatprep.subr.mxu0 0.0
        %1576 = vmatpush1.msra.mxu0 0.0
        %1577 = vmatprep.subr.mxu0 0.0
        %1578 = vmatpush1.msra.mxu0 0.0
        %1579 = vmatprep.subr.mxu0 0.0
        %1580 = vmatpush1.msra.mxu0 0.0
        %1581 = vmatprep.subr.mxu0 0.0
        %1582 = vmatpush1.msra.mxu0 0.0
        %1583 = vmatprep.subr.mxu0 0.0
        %1584 = vmatpush1.msra.mxu0 0.0
        %1585 = vmatprep.subr.mxu0 0.0
        %1586 = vmatpush1.msra.mxu0 0.0
        %1587 = vmatprep.subr.mxu0 0.0
        %1588 = vmatpush1.msra.mxu0 0.0
        %1589 = vmatprep.subr.mxu0 0.0
        %1590 = vmatpush1.msra.mxu0 0.0
        %1591 = vmatprep.subr.mxu0 0.0
        %1592 = vmatpush1.msra.mxu0 0.0
        %1593 = vmatprep.subr.mxu0 0.0
        %1594 = vmatpush1.msra.mxu0 0.0
        %1595 = vmatprep.subr.mxu0 0.0
        %1596 = vmatpush1.msra.mxu0 0.0
        %1597 = vmatprep.subr.mxu0 0.0
        %1598 = vmatpush1.msra.mxu0 0.0
        %1599 = vmatprep.subr.mxu0 0.0
        %1600 = vmatpush1.msra.mxu0 0.0
        %1601 = vmatprep.subr.mxu0 0.0
        %1602 = vmatpush1.msra.mxu0 0.0
        %1603 = vmatprep.subr.mxu0 0.0
        %1604 = vmatpush1.msra.mxu0 0.0
        %1605 = vmatprep.subr.mxu0 0.0
        %1606 = vmatpush1.msra.mxu0 0.0
        %1607 = vmatprep.subr.mxu0 0.0
        %1608 = vmatpush1.msra.mxu0 0.0
        %1609 = vmatprep.subr.mxu0 0.0
        %1610 = vmatpush1.msra.mxu0 0.0
        %1611 = vmatprep.subr.mxu0 0.0
        %1612 = vmatpush1.msra.mxu0 0.0
        %1613 = vmatprep.mubr.f32.mxu0 0.0
        %1614 = vmatmul.mubr.f32.gmra.mrb[0].mxu0 %v1245
        %v1615 = vpop.f32.mrb[0].mxu0
        %v1616 = vadd.f32 0.0, %v1615
        %v1617 = vpop.f32.mrb[0].mxu0
        %1618 = vdwg.mxu0
        %v1619 = vadd.f32 %v929, %v1332
        %v1620 = vadd.f32 %v931, %v1334
        %v1621 = vadd.f32 %v1000, %v1403
        %v1622 = vadd.f32 %v1002, %v1405
        %v1623 = vadd.f32 %v1071, %v1474
        %v1624 = vadd.f32 %v1073, %v1476
        %v1625 = vadd.f32 %v1142, %v1545
        %v1626 = vadd.f32 %v1144, %v1547
        %v1627 = vadd.f32 %v1213, %v1616
        %v1628 = vld [vmem:[%s5] sm:$0xf]
        %1630 = vset.pattern.permute.xlu0 0
        %1631 = vperm.xlu0 %1630, %v1628
        %v1632 = vpop.permute.xlu0 %1631
        %v1634 = vadd.f32 %v1619, %v1632
        %v1635 = vadd.f32 %v1620, %v1632
        %v1636 = vadd.f32 %v1621, %v1632
        %v1637 = vadd.f32 %v1622, %v1632
        %v1638 = vadd.f32 %v1623, %v1632
        %v1639 = vadd.f32 %v1624, %v1632
        %v1640 = vadd.f32 %v1625, %v1632
        %v1641 = vadd.f32 %v1626, %v1632
        %v1642 = vadd.f32 %v1627, %v1632
        %v1643 = vld [vmem:[%s2] sm:$0xf]
        %1645 = vset.pattern.permute.xlu0 0
        %1646 = vperm.xlu0 %1645, %v1643
        %v1647 = vpop.permute.xlu0 %1646
        %v1649 = vmul.f32 %v1634, %v1647
        %v1650 = vmul.f32 %v1635, %v1647
        %v1651 = vmul.f32 %v1636, %v1647
        %v1652 = vmul.f32 %v1637, %v1647
        %v1653 = vmul.f32 %v1638, %v1647
        %v1654 = vmul.f32 %v1639, %v1647
        %v1655 = vmul.f32 %v1640, %v1647
        %v1656 = vmul.f32 %v1641, %v1647
        %v1657 = vmul.f32 %v1642, %v1647
        %v1658 = vld [vmem:[%s3] sm:$0xf]
        %1660 = vset.pattern.permute.xlu0 0
        %1661 = vperm.xlu0 %1660, %v1658
        %v1662 = vpop.permute.xlu0 %1661
        %v1664 = vadd.f32 %v1649, %v1662
        %v1665 = vadd.f32 %v1650, %v1662
        %v1666 = vadd.f32 %v1651, %v1662
        %v1667 = vadd.f32 %v1652, %v1662
        %v1668 = vadd.f32 %v1653, %v1662
        %v1669 = vadd.f32 %v1654, %v1662
        %v1670 = vadd.f32 %v1655, %v1662
        %v1671 = vadd.f32 %v1656, %v1662
        %v1672 = vadd.f32 %v1657, %v1662
        %v1673 = vmax.f32 %v1664, 0.0
        %v1674 = vmax.f32 %v1665, 0.0
        %v1675 = vmax.f32 %v1666, 0.0
        %v1676 = vmax.f32 %v1667, 0.0
        %v1677 = vmax.f32 %v1668, 0.0
        %v1678 = vmax.f32 %v1669, 0.0
        %v1679 = vmax.f32 %v1670, 0.0
        %v1680 = vmax.f32 %v1671, 0.0
        %v1681 = vmax.f32 %v1672, 0.0
        %v1691 = vadd.f32 %v1673, %v458
        %v1692 = vadd.f32 %v1674, %v459
        %v1693 = vadd.f32 %v1675, %v460
        %v1694 = vadd.f32 %v1676, %v461
        %v1695 = vadd.f32 %v1677, %v462
        %v1696 = vadd.f32 %v1678, %v463
        %v1697 = vadd.f32 %v1679, %v464
        %v1698 = vadd.f32 %v1680, %v465
        %v1699 = vadd.f32 %v1681, %v456
        %p1700 = scmp.eq.s32.totalorder %s29, 0
        %s1701 = scalar_select %p1700, 1, 0
        %v1702 = vstv %s1701
        %vm1703 = vcmp.eq.s32.totalorder %v1702, 1
        %1705 = vrot.lane.b32.xlu0 %v1691, 2
        %v1706 = vpop.permute.xlu0 %1705
        %v1708 = vsel %vm1703, %v1691, %v1706
        %1710 = vrot.lane.b32.xlu0 %v1699, 126
        %v1711 = vpop.permute.xlu0 %1710
        %v1713 = vsel %vm1703, %v1698, %v1711
        %1715 = vrot.lane.b32.xlu0 %v1708, 126
        %v1716 = vpop.permute.xlu0 %1715
        %1719 = vrot.lane.b32.xlu0 %v1713, 2
        %v1720 = vpop.permute.xlu0 %1719
        %vm1722 = vcmask 7168
        %v1723 = vsel %vm1722, %v1716, %v1691
        %v1724 = vsel %vm1722, %v1699, %v1720
        %v1725 = vld [vmem:[%s6] sm:$0xff]
        %1727 = vrot.lane.b32.xlu0 %v1725, 124
        %v1728 = vpop.permute.xlu0 %1727
        %1738 = vrot.lane.b32.xlu0 %v1723, 127
        %v1739 = vpop.permute.xlu0 %1738
        %1740 = vrot.lane.b32.xlu0 %v1692, 127
        %v1741 = vpop.permute.xlu0 %1740
        %1742 = vrot.lane.b32.xlu0 %v1693, 127
        %v1743 = vpop.permute.xlu0 %1742
        %1744 = vrot.lane.b32.xlu0 %v1694, 127
        %v1745 = vpop.permute.xlu0 %1744
        %1746 = vrot.lane.b32.xlu0 %v1695, 127
        %v1747 = vpop.permute.xlu0 %1746
        %1748 = vrot.lane.b32.xlu0 %v1696, 127
        %v1749 = vpop.permute.xlu0 %1748
        %1750 = vrot.lane.b32.xlu0 %v1697, 127
        %v1751 = vpop.permute.xlu0 %1750
        %1752 = vrot.lane.b32.xlu0 %v1698, 127
        %v1753 = vpop.permute.xlu0 %1752
        %1754 = vrot.lane.b32.xlu0 %v1724, 127
        %v1755 = vpop.permute.xlu0 %1754
        %v1756 = vsel %vm457, %v1739, %v1741
        %v1757 = vsel %vm457, %v1741, %v1743
        %v1758 = vsel %vm457, %v1743, %v1745
        %v1759 = vsel %vm457, %v1745, %v1747
        %v1760 = vsel %vm457, %v1747, %v1749
        %v1761 = vsel %vm457, %v1749, %v1751
        %v1762 = vsel %vm457, %v1751, %v1753
        %v1763 = vsel %vm457, %v1753, %v1755
        %v1764 = vsel %vm466, %v1728, 0
        %v1766 = vsel %vm469, %v1756, 0
        %v1768 = vsel %vm469, %v1757, 0
        %v1770 = vsel %vm469, %v1758, 0
        %v1772 = vsel %vm469, %v1759, 0
        %v1774 = vsel %vm469, %v1760, 0
        %v1776 = vsel %vm469, %v1761, 0
        %v1778 = vsel %vm469, %v1762, 0
        %v1780 = vsel %vm469, %v1763, 0
        %1782 = vmatprep.subr.mxu0 %v1768
        %1783 = vmatpush1.msra.mxu0 %v1766
        %1784 = vmatprep.subr.mxu0 0.0
        %1785 = vmatpush1.msra.mxu0 0.0
        %1786 = vmatprep.subr.mxu0 0.0
        %1787 = vmatpush1.msra.mxu0 0.0
        %1788 = vmatprep.subr.mxu0 0.0
        %1789 = vmatpush1.msra.mxu0 0.0
        %1790 = vmatprep.subr.mxu0 0.0
        %1791 = vmatpush1.msra.mxu0 0.0
        %1792 = vmatprep.subr.mxu0 0.0
        %1793 = vmatpush1.msra.mxu0 0.0
        %1794 = vmatprep.subr.mxu0 0.0
        %1795 = vmatpush1.msra.mxu0 0.0
        %1796 = vmatprep.subr.mxu0 0.0
        %1797 = vmatpush1.msra.mxu0 0.0
        %1798 = vmatprep.subr.mxu0 0.0
        %1799 = vmatpush1.msra.mxu0 0.0
        %1800 = vmatprep.subr.mxu0 0.0
        %1801 = vmatpush1.msra.mxu0 0.0
        %1802 = vmatprep.subr.mxu0 0.0
        %1803 = vmatpush1.msra.mxu0 0.0
        %1804 = vmatprep.subr.mxu0 0.0
        %1805 = vmatpush1.msra.mxu0 0.0
        %1806 = vmatprep.subr.mxu0 0.0
        %1807 = vmatpush1.msra.mxu0 0.0
        %1808 = vmatprep.subr.mxu0 0.0
        %1809 = vmatpush1.msra.mxu0 0.0
        %1810 = vmatprep.subr.mxu0 0.0
        %1811 = vmatpush1.msra.mxu0 0.0
        %1812 = vmatprep.subr.mxu0 0.0
        %1813 = vmatpush1.msra.mxu0 0.0
        %1814 = vmatprep.subr.mxu0 0.0
        %1815 = vmatpush1.msra.mxu0 0.0
        %1816 = vmatprep.subr.mxu0 0.0
        %1817 = vmatpush1.msra.mxu0 0.0
        %1818 = vmatprep.subr.mxu0 0.0
        %1819 = vmatpush1.msra.mxu0 0.0
        %1820 = vmatprep.subr.mxu0 0.0
        %1821 = vmatpush1.msra.mxu0 0.0
        %1822 = vmatprep.subr.mxu0 0.0
        %1823 = vmatpush1.msra.mxu0 0.0
        %1824 = vmatprep.subr.mxu0 0.0
        %1825 = vmatpush1.msra.mxu0 0.0
        %1826 = vmatprep.subr.mxu0 0.0
        %1827 = vmatpush1.msra.mxu0 0.0
        %1828 = vmatprep.subr.mxu0 0.0
        %1829 = vmatpush1.msra.mxu0 0.0
        %1830 = vmatprep.subr.mxu0 0.0
        %1831 = vmatpush1.msra.mxu0 0.0
        %1832 = vmatprep.subr.mxu0 0.0
        %1833 = vmatpush1.msra.mxu0 0.0
        %1834 = vmatprep.subr.mxu0 0.0
        %1835 = vmatpush1.msra.mxu0 0.0
        %1836 = vmatprep.subr.mxu0 0.0
        %1837 = vmatpush1.msra.mxu0 0.0
        %1838 = vmatprep.subr.mxu0 0.0
        %1839 = vmatpush1.msra.mxu0 0.0
        %1840 = vmatprep.subr.mxu0 0.0
        %1841 = vmatpush1.msra.mxu0 0.0
        %1842 = vmatprep.subr.mxu0 0.0
        %1843 = vmatpush1.msra.mxu0 0.0
        %1844 = vmatprep.subr.mxu0 0.0
        %1845 = vmatpush1.msra.mxu0 0.0
        %1846 = vmatprep.mubr.f32.mxu0 0.0
        %1847 = vmatmul.mubr.f32.gmra.mrb[0].mxu0 %v1764
        %v1848 = vpop.f32.mrb[0].mxu0
        %v1849 = vadd.f32 0.0, %v1848
        %v1850 = vpop.f32.mrb[0].mxu0
        %v1851 = vadd.f32 0.0, %v1850
        %1852 = vdwg.mxu0
        %1853 = vmatprep.subr.mxu0 %v1772
        %1854 = vmatpush1.msra.mxu0 %v1770
        %1855 = vmatprep.subr.mxu0 0.0
        %1856 = vmatpush1.msra.mxu0 0.0
        %1857 = vmatprep.subr.mxu0 0.0
        %1858 = vmatpush1.msra.mxu0 0.0
        %1859 = vmatprep.subr.mxu0 0.0
        %1860 = vmatpush1.msra.mxu0 0.0
        %1861 = vmatprep.subr.mxu0 0.0
        %1862 = vmatpush1.msra.mxu0 0.0
        %1863 = vmatprep.subr.mxu0 0.0
        %1864 = vmatpush1.msra.mxu0 0.0
        %1865 = vmatprep.subr.mxu0 0.0
        %1866 = vmatpush1.msra.mxu0 0.0
        %1867 = vmatprep.subr.mxu0 0.0
        %1868 = vmatpush1.msra.mxu0 0.0
        %1869 = vmatprep.subr.mxu0 0.0
        %1870 = vmatpush1.msra.mxu0 0.0
        %1871 = vmatprep.subr.mxu0 0.0
        %1872 = vmatpush1.msra.mxu0 0.0
        %1873 = vmatprep.subr.mxu0 0.0
        %1874 = vmatpush1.msra.mxu0 0.0
        %1875 = vmatprep.subr.mxu0 0.0
        %1876 = vmatpush1.msra.mxu0 0.0
        %1877 = vmatprep.subr.mxu0 0.0
        %1878 = vmatpush1.msra.mxu0 0.0
        %1879 = vmatprep.subr.mxu0 0.0
        %1880 = vmatpush1.msra.mxu0 0.0
        %1881 = vmatprep.subr.mxu0 0.0
        %1882 = vmatpush1.msra.mxu0 0.0
        %1883 = vmatprep.subr.mxu0 0.0
        %1884 = vmatpush1.msra.mxu0 0.0
        %1885 = vmatprep.subr.mxu0 0.0
        %1886 = vmatpush1.msra.mxu0 0.0
        %1887 = vmatprep.subr.mxu0 0.0
        %1888 = vmatpush1.msra.mxu0 0.0
        %1889 = vmatprep.subr.mxu0 0.0
        %1890 = vmatpush1.msra.mxu0 0.0
        %1891 = vmatprep.subr.mxu0 0.0
        %1892 = vmatpush1.msra.mxu0 0.0
        %1893 = vmatprep.subr.mxu0 0.0
        %1894 = vmatpush1.msra.mxu0 0.0
        %1895 = vmatprep.subr.mxu0 0.0
        %1896 = vmatpush1.msra.mxu0 0.0
        %1897 = vmatprep.subr.mxu0 0.0
        %1898 = vmatpush1.msra.mxu0 0.0
        %1899 = vmatprep.subr.mxu0 0.0
        %1900 = vmatpush1.msra.mxu0 0.0
        %1901 = vmatprep.subr.mxu0 0.0
        %1902 = vmatpush1.msra.mxu0 0.0
        %1903 = vmatprep.subr.mxu0 0.0
        %1904 = vmatpush1.msra.mxu0 0.0
        %1905 = vmatprep.subr.mxu0 0.0
        %1906 = vmatpush1.msra.mxu0 0.0
        %1907 = vmatprep.subr.mxu0 0.0
        %1908 = vmatpush1.msra.mxu0 0.0
        %1909 = vmatprep.subr.mxu0 0.0
        %1910 = vmatpush1.msra.mxu0 0.0
        %1911 = vmatprep.subr.mxu0 0.0
        %1912 = vmatpush1.msra.mxu0 0.0
        %1913 = vmatprep.subr.mxu0 0.0
        %1914 = vmatpush1.msra.mxu0 0.0
        %1915 = vmatprep.subr.mxu0 0.0
        %1916 = vmatpush1.msra.mxu0 0.0
        %1917 = vmatprep.mubr.f32.mxu0 0.0
        %1918 = vmatmul.mubr.f32.gmra.mrb[0].mxu0 %v1764
        %v1919 = vpop.f32.mrb[0].mxu0
        %v1920 = vadd.f32 0.0, %v1919
        %v1921 = vpop.f32.mrb[0].mxu0
        %v1922 = vadd.f32 0.0, %v1921
        %1923 = vdwg.mxu0
        %1924 = vmatprep.subr.mxu0 %v1776
        %1925 = vmatpush1.msra.mxu0 %v1774
        %1926 = vmatprep.subr.mxu0 0.0
        %1927 = vmatpush1.msra.mxu0 0.0
        %1928 = vmatprep.subr.mxu0 0.0
        %1929 = vmatpush1.msra.mxu0 0.0
        %1930 = vmatprep.subr.mxu0 0.0
        %1931 = vmatpush1.msra.mxu0 0.0
        %1932 = vmatprep.subr.mxu0 0.0
        %1933 = vmatpush1.msra.mxu0 0.0
        %1934 = vmatprep.subr.mxu0 0.0
        %1935 = vmatpush1.msra.mxu0 0.0
        %1936 = vmatprep.subr.mxu0 0.0
        %1937 = vmatpush1.msra.mxu0 0.0
        %1938 = vmatprep.subr.mxu0 0.0
        %1939 = vmatpush1.msra.mxu0 0.0
        %1940 = vmatprep.subr.mxu0 0.0
        %1941 = vmatpush1.msra.mxu0 0.0
        %1942 = vmatprep.subr.mxu0 0.0
        %1943 = vmatpush1.msra.mxu0 0.0
        %1944 = vmatprep.subr.mxu0 0.0
        %1945 = vmatpush1.msra.mxu0 0.0
        %1946 = vmatprep.subr.mxu0 0.0
        %1947 = vmatpush1.msra.mxu0 0.0
        %1948 = vmatprep.subr.mxu0 0.0
        %1949 = vmatpush1.msra.mxu0 0.0
        %1950 = vmatprep.subr.mxu0 0.0
        %1951 = vmatpush1.msra.mxu0 0.0
        %1952 = vmatprep.subr.mxu0 0.0
        %1953 = vmatpush1.msra.mxu0 0.0
        %1954 = vmatprep.subr.mxu0 0.0
        %1955 = vmatpush1.msra.mxu0 0.0
        %1956 = vmatprep.subr.mxu0 0.0
        %1957 = vmatpush1.msra.mxu0 0.0
        %1958 = vmatprep.subr.mxu0 0.0
        %1959 = vmatpush1.msra.mxu0 0.0
        %1960 = vmatprep.subr.mxu0 0.0
        %1961 = vmatpush1.msra.mxu0 0.0
        %1962 = vmatprep.subr.mxu0 0.0
        %1963 = vmatpush1.msra.mxu0 0.0
        %1964 = vmatprep.subr.mxu0 0.0
        %1965 = vmatpush1.msra.mxu0 0.0
        %1966 = vmatprep.subr.mxu0 0.0
        %1967 = vmatpush1.msra.mxu0 0.0
        %1968 = vmatprep.subr.mxu0 0.0
        %1969 = vmatpush1.msra.mxu0 0.0
        %1970 = vmatprep.subr.mxu0 0.0
        %1971 = vmatpush1.msra.mxu0 0.0
        %1972 = vmatprep.subr.mxu0 0.0
        %1973 = vmatpush1.msra.mxu0 0.0
        %1974 = vmatprep.subr.mxu0 0.0
        %1975 = vmatpush1.msra.mxu0 0.0
        %1976 = vmatprep.subr.mxu0 0.0
        %1977 = vmatpush1.msra.mxu0 0.0
        %1978 = vmatprep.subr.mxu0 0.0
        %1979 = vmatpush1.msra.mxu0 0.0
        %1980 = vmatprep.subr.mxu0 0.0
        %1981 = vmatpush1.msra.mxu0 0.0
        %1982 = vmatprep.subr.mxu0 0.0
        %1983 = vmatpush1.msra.mxu0 0.0
        %1984 = vmatprep.subr.mxu0 0.0
        %1985 = vmatpush1.msra.mxu0 0.0
        %1986 = vmatprep.subr.mxu0 0.0
        %1987 = vmatpush1.msra.mxu0 0.0
        %1988 = vmatprep.mubr.f32.mxu0 0.0
        %1989 = vmatmul.mubr.f32.gmra.mrb[0].mxu0 %v1764
        %v1990 = vpop.f32.mrb[0].mxu0
        %v1991 = vadd.f32 0.0, %v1990
        %v1992 = vpop.f32.mrb[0].mxu0
        %v1993 = vadd.f32 0.0, %v1992
        %1994 = vdwg.mxu0
        %1995 = vmatprep.subr.mxu0 %v1780
        %1996 = vmatpush1.msra.mxu0 %v1778
        %1997 = vmatprep.subr.mxu0 0.0
        %1998 = vmatpush1.msra.mxu0 0.0
        %1999 = vmatprep.subr.mxu0 0.0
        %2000 = vmatpush1.msra.mxu0 0.0
        %2001 = vmatprep.subr.mxu0 0.0
        %2002 = vmatpush1.msra.mxu0 0.0
        %2003 = vmatprep.subr.mxu0 0.0
        %2004 = vmatpush1.msra.mxu0 0.0
        %2005 = vmatprep.subr.mxu0 0.0
        %2006 = vmatpush1.msra.mxu0 0.0
        %2007 = vmatprep.subr.mxu0 0.0
        %2008 = vmatpush1.msra.mxu0 0.0
        %2009 = vmatprep.subr.mxu0 0.0
        %2010 = vmatpush1.msra.mxu0 0.0
        %2011 = vmatprep.subr.mxu0 0.0
        %2012 = vmatpush1.msra.mxu0 0.0
        %2013 = vmatprep.subr.mxu0 0.0
        %2014 = vmatpush1.msra.mxu0 0.0
        %2015 = vmatprep.subr.mxu0 0.0
        %2016 = vmatpush1.msra.mxu0 0.0
        %2017 = vmatprep.subr.mxu0 0.0
        %2018 = vmatpush1.msra.mxu0 0.0
        %2019 = vmatprep.subr.mxu0 0.0
        %2020 = vmatpush1.msra.mxu0 0.0
        %2021 = vmatprep.subr.mxu0 0.0
        %2022 = vmatpush1.msra.mxu0 0.0
        %2023 = vmatprep.subr.mxu0 0.0
        %2024 = vmatpush1.msra.mxu0 0.0
        %2025 = vmatprep.subr.mxu0 0.0
        %2026 = vmatpush1.msra.mxu0 0.0
        %2027 = vmatprep.subr.mxu0 0.0
        %2028 = vmatpush1.msra.mxu0 0.0
        %2029 = vmatprep.subr.mxu0 0.0
        %2030 = vmatpush1.msra.mxu0 0.0
        %2031 = vmatprep.subr.mxu0 0.0
        %2032 = vmatpush1.msra.mxu0 0.0
        %2033 = vmatprep.subr.mxu0 0.0
        %2034 = vmatpush1.msra.mxu0 0.0
        %2035 = vmatprep.subr.mxu0 0.0
        %2036 = vmatpush1.msra.mxu0 0.0
        %2037 = vmatprep.subr.mxu0 0.0
        %2038 = vmatpush1.msra.mxu0 0.0
        %2039 = vmatprep.subr.mxu0 0.0
        %2040 = vmatpush1.msra.mxu0 0.0
        %2041 = vmatprep.subr.mxu0 0.0
        %2042 = vmatpush1.msra.mxu0 0.0
        %2043 = vmatprep.subr.mxu0 0.0
        %2044 = vmatpush1.msra.mxu0 0.0
        %2045 = vmatprep.subr.mxu0 0.0
        %2046 = vmatpush1.msra.mxu0 0.0
        %2047 = vmatprep.subr.mxu0 0.0
        %2048 = vmatpush1.msra.mxu0 0.0
        %2049 = vmatprep.subr.mxu0 0.0
        %2050 = vmatpush1.msra.mxu0 0.0
        %2051 = vmatprep.subr.mxu0 0.0
        %2052 = vmatpush1.msra.mxu0 0.0
        %2053 = vmatprep.subr.mxu0 0.0
        %2054 = vmatpush1.msra.mxu0 0.0
        %2055 = vmatprep.subr.mxu0 0.0
        %2056 = vmatpush1.msra.mxu0 0.0
        %2057 = vmatprep.subr.mxu0 0.0
        %2058 = vmatpush1.msra.mxu0 0.0
        %2059 = vmatprep.mubr.f32.mxu0 0.0
        %2060 = vmatmul.mubr.f32.gmra.mrb[0].mxu0 %v1764
        %v2061 = vpop.f32.mrb[0].mxu0
        %v2062 = vadd.f32 0.0, %v2061
        %v2063 = vpop.f32.mrb[0].mxu0
        %v2064 = vadd.f32 0.0, %v2063
        %2065 = vdwg.mxu0
        %v2066 = vsel %vm466, %v1725, 0
        %v2068 = vsel %vm469, %v1723, 0
        %v2070 = vsel %vm469, %v1692, 0
        %v2072 = vsel %vm469, %v1693, 0
        %v2074 = vsel %vm469, %v1694, 0
        %v2076 = vsel %vm469, %v1695, 0
        %v2078 = vsel %vm469, %v1696, 0
        %v2080 = vsel %vm469, %v1697, 0
        %v2082 = vsel %vm469, %v1698, 0
        %2084 = vmatprep.subr.mxu0 %v2070
        %2085 = vmatpush1.msra.mxu0 %v2068
        %2086 = vmatprep.subr.mxu0 0.0
        %2087 = vmatpush1.msra.mxu0 0.0
        %2088 = vmatprep.subr.mxu0 0.0
        %2089 = vmatpush1.msra.mxu0 0.0
        %2090 = vmatprep.subr.mxu0 0.0
        %2091 = vmatpush1.msra.mxu0 0.0
        %2092 = vmatprep.subr.mxu0 0.0
        %2093 = vmatpush1.msra.mxu0 0.0
        %2094 = vmatprep.subr.mxu0 0.0
        %2095 = vmatpush1.msra.mxu0 0.0
        %2096 = vmatprep.subr.mxu0 0.0
        %2097 = vmatpush1.msra.mxu0 0.0
        %2098 = vmatprep.subr.mxu0 0.0
        %2099 = vmatpush1.msra.mxu0 0.0
        %2100 = vmatprep.subr.mxu0 0.0
        %2101 = vmatpush1.msra.mxu0 0.0
        %2102 = vmatprep.subr.mxu0 0.0
        %2103 = vmatpush1.msra.mxu0 0.0
        %2104 = vmatprep.subr.mxu0 0.0
        %2105 = vmatpush1.msra.mxu0 0.0
        %2106 = vmatprep.subr.mxu0 0.0
        %2107 = vmatpush1.msra.mxu0 0.0
        %2108 = vmatprep.subr.mxu0 0.0
        %2109 = vmatpush1.msra.mxu0 0.0
        %2110 = vmatprep.subr.mxu0 0.0
        %2111 = vmatpush1.msra.mxu0 0.0
        %2112 = vmatprep.subr.mxu0 0.0
        %2113 = vmatpush1.msra.mxu0 0.0
        %2114 = vmatprep.subr.mxu0 0.0
        %2115 = vmatpush1.msra.mxu0 0.0
        %2116 = vmatprep.subr.mxu0 0.0
        %2117 = vmatpush1.msra.mxu0 0.0
        %2118 = vmatprep.subr.mxu0 0.0
        %2119 = vmatpush1.msra.mxu0 0.0
        %2120 = vmatprep.subr.mxu0 0.0
        %2121 = vmatpush1.msra.mxu0 0.0
        %2122 = vmatprep.subr.mxu0 0.0
        %2123 = vmatpush1.msra.mxu0 0.0
        %2124 = vmatprep.subr.mxu0 0.0
        %2125 = vmatpush1.msra.mxu0 0.0
        %2126 = vmatprep.subr.mxu0 0.0
        %2127 = vmatpush1.msra.mxu0 0.0
        %2128 = vmatprep.subr.mxu0 0.0
        %2129 = vmatpush1.msra.mxu0 0.0
        %2130 = vmatprep.subr.mxu0 0.0
        %2131 = vmatpush1.msra.mxu0 0.0
        %2132 = vmatprep.subr.mxu0 0.0
        %2133 = vmatpush1.msra.mxu0 0.0
        %2134 = vmatprep.subr.mxu0 0.0
        %2135 = vmatpush1.msra.mxu0 0.0
        %2136 = vmatprep.subr.mxu0 0.0
        %2137 = vmatpush1.msra.mxu0 0.0
        %2138 = vmatprep.subr.mxu0 0.0
        %2139 = vmatpush1.msra.mxu0 0.0
        %2140 = vmatprep.subr.mxu0 0.0
        %2141 = vmatpush1.msra.mxu0 0.0
        %2142 = vmatprep.subr.mxu0 0.0
        %2143 = vmatpush1.msra.mxu0 0.0
        %2144 = vmatprep.subr.mxu0 0.0
        %2145 = vmatpush1.msra.mxu0 0.0
        %2146 = vmatprep.subr.mxu0 0.0
        %2147 = vmatpush1.msra.mxu0 0.0
        %2148 = vmatprep.mubr.f32.mxu0 0.0
        %2149 = vmatmul.mubr.f32.gmra.mrb[0].mxu0 %v2066
        %v2150 = vpop.f32.mrb[0].mxu0
        %v2151 = vadd.f32 %v1849, %v2150
        %v2152 = vpop.f32.mrb[0].mxu0
        %v2153 = vadd.f32 %v1851, %v2152
        %2154 = vdwg.mxu0
        %2155 = vmatprep.subr.mxu0 %v2074
        %2156 = vmatpush1.msra.mxu0 %v2072
        %2157 = vmatprep.subr.mxu0 0.0
        %2158 = vmatpush1.msra.mxu0 0.0
        %2159 = vmatprep.subr.mxu0 0.0
        %2160 = vmatpush1.msra.mxu0 0.0
        %2161 = vmatprep.subr.mxu0 0.0
        %2162 = vmatpush1.msra.mxu0 0.0
        %2163 = vmatprep.subr.mxu0 0.0
        %2164 = vmatpush1.msra.mxu0 0.0
        %2165 = vmatprep.subr.mxu0 0.0
        %2166 = vmatpush1.msra.mxu0 0.0
        %2167 = vmatprep.subr.mxu0 0.0
        %2168 = vmatpush1.msra.mxu0 0.0
        %2169 = vmatprep.subr.mxu0 0.0
        %2170 = vmatpush1.msra.mxu0 0.0
        %2171 = vmatprep.subr.mxu0 0.0
        %2172 = vmatpush1.msra.mxu0 0.0
        %2173 = vmatprep.subr.mxu0 0.0
        %2174 = vmatpush1.msra.mxu0 0.0
        %2175 = vmatprep.subr.mxu0 0.0
        %2176 = vmatpush1.msra.mxu0 0.0
        %2177 = vmatprep.subr.mxu0 0.0
        %2178 = vmatpush1.msra.mxu0 0.0
        %2179 = vmatprep.subr.mxu0 0.0
        %2180 = vmatpush1.msra.mxu0 0.0
        %2181 = vmatprep.subr.mxu0 0.0
        %2182 = vmatpush1.msra.mxu0 0.0
        %2183 = vmatprep.subr.mxu0 0.0
        %2184 = vmatpush1.msra.mxu0 0.0
        %2185 = vmatprep.subr.mxu0 0.0
        %2186 = vmatpush1.msra.mxu0 0.0
        %2187 = vmatprep.subr.mxu0 0.0
        %2188 = vmatpush1.msra.mxu0 0.0
        %2189 = vmatprep.subr.mxu0 0.0
        %2190 = vmatpush1.msra.mxu0 0.0
        %2191 = vmatprep.subr.mxu0 0.0
        %2192 = vmatpush1.msra.mxu0 0.0
        %2193 = vmatprep.subr.mxu0 0.0
        %2194 = vmatpush1.msra.mxu0 0.0
        %2195 = vmatprep.subr.mxu0 0.0
        %2196 = vmatpush1.msra.mxu0 0.0
        %2197 = vmatprep.subr.mxu0 0.0
        %2198 = vmatpush1.msra.mxu0 0.0
        %2199 = vmatprep.subr.mxu0 0.0
        %2200 = vmatpush1.msra.mxu0 0.0
        %2201 = vmatprep.subr.mxu0 0.0
        %2202 = vmatpush1.msra.mxu0 0.0
        %2203 = vmatprep.subr.mxu0 0.0
        %2204 = vmatpush1.msra.mxu0 0.0
        %2205 = vmatprep.subr.mxu0 0.0
        %2206 = vmatpush1.msra.mxu0 0.0
        %2207 = vmatprep.subr.mxu0 0.0
        %2208 = vmatpush1.msra.mxu0 0.0
        %2209 = vmatprep.subr.mxu0 0.0
        %2210 = vmatpush1.msra.mxu0 0.0
        %2211 = vmatprep.subr.mxu0 0.0
        %2212 = vmatpush1.msra.mxu0 0.0
        %2213 = vmatprep.subr.mxu0 0.0
        %2214 = vmatpush1.msra.mxu0 0.0
        %2215 = vmatprep.subr.mxu0 0.0
        %2216 = vmatpush1.msra.mxu0 0.0
        %2217 = vmatprep.subr.mxu0 0.0
        %2218 = vmatpush1.msra.mxu0 0.0
        %2219 = vmatprep.mubr.f32.mxu0 0.0
        %2220 = vmatmul.mubr.f32.gmra.mrb[0].mxu0 %v2066
        %v2221 = vpop.f32.mrb[0].mxu0
        %v2222 = vadd.f32 %v1920, %v2221
        %v2223 = vpop.f32.mrb[0].mxu0
        %v2224 = vadd.f32 %v1922, %v2223
        %2225 = vdwg.mxu0
        %2226 = vmatprep.subr.mxu0 %v2078
        %2227 = vmatpush1.msra.mxu0 %v2076
        %2228 = vmatprep.subr.mxu0 0.0
        %2229 = vmatpush1.msra.mxu0 0.0
        %2230 = vmatprep.subr.mxu0 0.0
        %2231 = vmatpush1.msra.mxu0 0.0
        %2232 = vmatprep.subr.mxu0 0.0
        %2233 = vmatpush1.msra.mxu0 0.0
        %2234 = vmatprep.subr.mxu0 0.0
        %2235 = vmatpush1.msra.mxu0 0.0
        %2236 = vmatprep.subr.mxu0 0.0
        %2237 = vmatpush1.msra.mxu0 0.0
        %2238 = vmatprep.subr.mxu0 0.0
        %2239 = vmatpush1.msra.mxu0 0.0
        %2240 = vmatprep.subr.mxu0 0.0
        %2241 = vmatpush1.msra.mxu0 0.0
        %2242 = vmatprep.subr.mxu0 0.0
        %2243 = vmatpush1.msra.mxu0 0.0
        %2244 = vmatprep.subr.mxu0 0.0
        %2245 = vmatpush1.msra.mxu0 0.0
        %2246 = vmatprep.subr.mxu0 0.0
        %2247 = vmatpush1.msra.mxu0 0.0
        %2248 = vmatprep.subr.mxu0 0.0
        %2249 = vmatpush1.msra.mxu0 0.0
        %2250 = vmatprep.subr.mxu0 0.0
        %2251 = vmatpush1.msra.mxu0 0.0
        %2252 = vmatprep.subr.mxu0 0.0
        %2253 = vmatpush1.msra.mxu0 0.0
        %2254 = vmatprep.subr.mxu0 0.0
        %2255 = vmatpush1.msra.mxu0 0.0
        %2256 = vmatprep.subr.mxu0 0.0
        %2257 = vmatpush1.msra.mxu0 0.0
        %2258 = vmatprep.subr.mxu0 0.0
        %2259 = vmatpush1.msra.mxu0 0.0
        %2260 = vmatprep.subr.mxu0 0.0
        %2261 = vmatpush1.msra.mxu0 0.0
        %2262 = vmatprep.subr.mxu0 0.0
        %2263 = vmatpush1.msra.mxu0 0.0
        %2264 = vmatprep.subr.mxu0 0.0
        %2265 = vmatpush1.msra.mxu0 0.0
        %2266 = vmatprep.subr.mxu0 0.0
        %2267 = vmatpush1.msra.mxu0 0.0
        %2268 = vmatprep.subr.mxu0 0.0
        %2269 = vmatpush1.msra.mxu0 0.0
        %2270 = vmatprep.subr.mxu0 0.0
        %2271 = vmatpush1.msra.mxu0 0.0
        %2272 = vmatprep.subr.mxu0 0.0
        %2273 = vmatpush1.msra.mxu0 0.0
        %2274 = vmatprep.subr.mxu0 0.0
        %2275 = vmatpush1.msra.mxu0 0.0
        %2276 = vmatprep.subr.mxu0 0.0
        %2277 = vmatpush1.msra.mxu0 0.0
        %2278 = vmatprep.subr.mxu0 0.0
        %2279 = vmatpush1.msra.mxu0 0.0
        %2280 = vmatprep.subr.mxu0 0.0
        %2281 = vmatpush1.msra.mxu0 0.0
        %2282 = vmatprep.subr.mxu0 0.0
        %2283 = vmatpush1.msra.mxu0 0.0
        %2284 = vmatprep.subr.mxu0 0.0
        %2285 = vmatpush1.msra.mxu0 0.0
        %2286 = vmatprep.subr.mxu0 0.0
        %2287 = vmatpush1.msra.mxu0 0.0
        %2288 = vmatprep.subr.mxu0 0.0
        %2289 = vmatpush1.msra.mxu0 0.0
        %2290 = vmatprep.mubr.f32.mxu0 0.0
        %2291 = vmatmul.mubr.f32.gmra.mrb[0].mxu0 %v2066
        %v2292 = vpop.f32.mrb[0].mxu0
        %v2293 = vadd.f32 %v1991, %v2292
        %v2294 = vpop.f32.mrb[0].mxu0
        %v2295 = vadd.f32 %v1993, %v2294
        %2296 = vdwg.mxu0
        %2297 = vmatprep.subr.mxu0 %v2082
        %2298 = vmatpush1.msra.mxu0 %v2080
        %2299 = vmatprep.subr.mxu0 0.0
        %2300 = vmatpush1.msra.mxu0 0.0
        %2301 = vmatprep.subr.mxu0 0.0
        %2302 = vmatpush1.msra.mxu0 0.0
        %2303 = vmatprep.subr.mxu0 0.0
        %2304 = vmatpush1.msra.mxu0 0.0
        %2305 = vmatprep.subr.mxu0 0.0
        %2306 = vmatpush1.msra.mxu0 0.0
        %2307 = vmatprep.subr.mxu0 0.0
        %2308 = vmatpush1.msra.mxu0 0.0
        %2309 = vmatprep.subr.mxu0 0.0
        %2310 = vmatpush1.msra.mxu0 0.0
        %2311 = vmatprep.subr.mxu0 0.0
        %2312 = vmatpush1.msra.mxu0 0.0
        %2313 = vmatprep.subr.mxu0 0.0
        %2314 = vmatpush1.msra.mxu0 0.0
        %2315 = vmatprep.subr.mxu0 0.0
        %2316 = vmatpush1.msra.mxu0 0.0
        %2317 = vmatprep.subr.mxu0 0.0
        %2318 = vmatpush1.msra.mxu0 0.0
        %2319 = vmatprep.subr.mxu0 0.0
        %2320 = vmatpush1.msra.mxu0 0.0
        %2321 = vmatprep.subr.mxu0 0.0
        %2322 = vmatpush1.msra.mxu0 0.0
        %2323 = vmatprep.subr.mxu0 0.0
        %2324 = vmatpush1.msra.mxu0 0.0
        %2325 = vmatprep.subr.mxu0 0.0
        %2326 = vmatpush1.msra.mxu0 0.0
        %2327 = vmatprep.subr.mxu0 0.0
        %2328 = vmatpush1.msra.mxu0 0.0
        %2329 = vmatprep.subr.mxu0 0.0
        %2330 = vmatpush1.msra.mxu0 0.0
        %2331 = vmatprep.subr.mxu0 0.0
        %2332 = vmatpush1.msra.mxu0 0.0
        %2333 = vmatprep.subr.mxu0 0.0
        %2334 = vmatpush1.msra.mxu0 0.0
        %2335 = vmatprep.subr.mxu0 0.0
        %2336 = vmatpush1.msra.mxu0 0.0
        %2337 = vmatprep.subr.mxu0 0.0
        %2338 = vmatpush1.msra.mxu0 0.0
        %2339 = vmatprep.subr.mxu0 0.0
        %2340 = vmatpush1.msra.mxu0 0.0
        %2341 = vmatprep.subr.mxu0 0.0
        %2342 = vmatpush1.msra.mxu0 0.0
        %2343 = vmatprep.subr.mxu0 0.0
        %2344 = vmatpush1.msra.mxu0 0.0
        %2345 = vmatprep.subr.mxu0 0.0
        %2346 = vmatpush1.msra.mxu0 0.0
        %2347 = vmatprep.subr.mxu0 0.0
        %2348 = vmatpush1.msra.mxu0 0.0
        %2349 = vmatprep.subr.mxu0 0.0
        %2350 = vmatpush1.msra.mxu0 0.0
        %2351 = vmatprep.subr.mxu0 0.0
        %2352 = vmatpush1.msra.mxu0 0.0
        %2353 = vmatprep.subr.mxu0 0.0
        %2354 = vmatpush1.msra.mxu0 0.0
        %2355 = vmatprep.subr.mxu0 0.0
        %2356 = vmatpush1.msra.mxu0 0.0
        %2357 = vmatprep.subr.mxu0 0.0
        %2358 = vmatpush1.msra.mxu0 0.0
        %2359 = vmatprep.subr.mxu0 0.0
        %2360 = vmatpush1.msra.mxu0 0.0
        %2361 = vmatprep.mubr.f32.mxu0 0.0
        %2362 = vmatmul.mubr.f32.gmra.mrb[0].mxu0 %v2066
        %v2363 = vpop.f32.mrb[0].mxu0
        %v2364 = vadd.f32 %v2062, %v2363
        %v2365 = vpop.f32.mrb[0].mxu0
        %v2366 = vadd.f32 %v2064, %v2365
        %2367 = vdwg.mxu0
        %2368 = vrot.lane.b32.xlu0 %v1725, 120
        %v2369 = vpop.permute.xlu0 %2368
        %2370 = vrot.lane.b32.xlu0 %v1723, 126
        %v2371 = vpop.permute.xlu0 %2370
        %2372 = vrot.lane.b32.xlu0 %v1692, 126
        %v2373 = vpop.permute.xlu0 %2372
        %2374 = vrot.lane.b32.xlu0 %v1693, 126
        %v2375 = vpop.permute.xlu0 %2374
        %2376 = vrot.lane.b32.xlu0 %v1694, 126
        %v2377 = vpop.permute.xlu0 %2376
        %2378 = vrot.lane.b32.xlu0 %v1695, 126
        %v2379 = vpop.permute.xlu0 %2378
        %2380 = vrot.lane.b32.xlu0 %v1696, 126
        %v2381 = vpop.permute.xlu0 %2380
        %2382 = vrot.lane.b32.xlu0 %v1697, 126
        %v2383 = vpop.permute.xlu0 %2382
        %2384 = vrot.lane.b32.xlu0 %v1698, 126
        %v2385 = vpop.permute.xlu0 %2384
        %2386 = vrot.lane.b32.xlu0 %v1724, 126
        %v2387 = vpop.permute.xlu0 %2386
        %v2388 = vsel %vm1236, %v2371, %v2373
        %v2389 = vsel %vm1236, %v2373, %v2375
        %v2390 = vsel %vm1236, %v2375, %v2377
        %v2391 = vsel %vm1236, %v2377, %v2379
        %v2392 = vsel %vm1236, %v2379, %v2381
        %v2393 = vsel %vm1236, %v2381, %v2383
        %v2394 = vsel %vm1236, %v2383, %v2385
        %v2395 = vsel %vm1236, %v2385, %v2387
        %v2396 = vsel %vm466, %v2369, 0
        %v2398 = vsel %vm469, %v2388, 0
        %v2400 = vsel %vm469, %v2389, 0
        %v2402 = vsel %vm469, %v2390, 0
        %v2404 = vsel %vm469, %v2391, 0
        %v2406 = vsel %vm469, %v2392, 0
        %v2408 = vsel %vm469, %v2393, 0
        %v2410 = vsel %vm469, %v2394, 0
        %v2412 = vsel %vm469, %v2395, 0
        %2414 = vmatprep.subr.mxu0 %v2400
        %2415 = vmatpush1.msra.mxu0 %v2398
        %2416 = vmatprep.subr.mxu0 0.0
        %2417 = vmatpush1.msra.mxu0 0.0
        %2418 = vmatprep.subr.mxu0 0.0
        %2419 = vmatpush1.msra.mxu0 0.0
        %2420 = vmatprep.subr.mxu0 0.0
        %2421 = vmatpush1.msra.mxu0 0.0
        %2422 = vmatprep.subr.mxu0 0.0
        %2423 = vmatpush1.msra.mxu0 0.0
        %2424 = vmatprep.subr.mxu0 0.0
        %2425 = vmatpush1.msra.mxu0 0.0
        %2426 = vmatprep.subr.mxu0 0.0
        %2427 = vmatpush1.msra.mxu0 0.0
        %2428 = vmatprep.subr.mxu0 0.0
        %2429 = vmatpush1.msra.mxu0 0.0
        %2430 = vmatprep.subr.mxu0 0.0
        %2431 = vmatpush1.msra.mxu0 0.0
        %2432 = vmatprep.subr.mxu0 0.0
        %2433 = vmatpush1.msra.mxu0 0.0
        %2434 = vmatprep.subr.mxu0 0.0
        %2435 = vmatpush1.msra.mxu0 0.0
        %2436 = vmatprep.subr.mxu0 0.0
        %2437 = vmatpush1.msra.mxu0 0.0
        %2438 = vmatprep.subr.mxu0 0.0
        %2439 = vmatpush1.msra.mxu0 0.0
        %2440 = vmatprep.subr.mxu0 0.0
        %2441 = vmatpush1.msra.mxu0 0.0
        %2442 = vmatprep.subr.mxu0 0.0
        %2443 = vmatpush1.msra.mxu0 0.0
        %2444 = vmatprep.subr.mxu0 0.0
        %2445 = vmatpush1.msra.mxu0 0.0
        %2446 = vmatprep.subr.mxu0 0.0
        %2447 = vmatpush1.msra.mxu0 0.0
        %2448 = vmatprep.subr.mxu0 0.0
        %2449 = vmatpush1.msra.mxu0 0.0
        %2450 = vmatprep.subr.mxu0 0.0
        %2451 = vmatpush1.msra.mxu0 0.0
        %2452 = vmatprep.subr.mxu0 0.0
        %2453 = vmatpush1.msra.mxu0 0.0
        %2454 = vmatprep.subr.mxu0 0.0
        %2455 = vmatpush1.msra.mxu0 0.0
        %2456 = vmatprep.subr.mxu0 0.0
        %2457 = vmatpush1.msra.mxu0 0.0
        %2458 = vmatprep.subr.mxu0 0.0
        %2459 = vmatpush1.msra.mxu0 0.0
        %2460 = vmatprep.subr.mxu0 0.0
        %2461 = vmatpush1.msra.mxu0 0.0
        %2462 = vmatprep.subr.mxu0 0.0
        %2463 = vmatpush1.msra.mxu0 0.0
        %2464 = vmatprep.subr.mxu0 0.0
        %2465 = vmatpush1.msra.mxu0 0.0
        %2466 = vmatprep.subr.mxu0 0.0
        %2467 = vmatpush1.msra.mxu0 0.0
        %2468 = vmatprep.subr.mxu0 0.0
        %2469 = vmatpush1.msra.mxu0 0.0
        %2470 = vmatprep.subr.mxu0 0.0
        %2471 = vmatpush1.msra.mxu0 0.0
        %2472 = vmatprep.subr.mxu0 0.0
        %2473 = vmatpush1.msra.mxu0 0.0
        %2474 = vmatprep.subr.mxu0 0.0
        %2475 = vmatpush1.msra.mxu0 0.0
        %2476 = vmatprep.subr.mxu0 0.0
        %2477 = vmatpush1.msra.mxu0 0.0
        %2478 = vmatprep.mubr.f32.mxu0 0.0
        %2479 = vmatmul.mubr.f32.gmra.mrb[0].mxu0 %v2396
        %v2480 = vpop.f32.mrb[0].mxu0
        %v2481 = vadd.f32 0.0, %v2480
        %v2482 = vpop.f32.mrb[0].mxu0
        %v2483 = vadd.f32 0.0, %v2482
        %2484 = vdwg.mxu0
        %2485 = vmatprep.subr.mxu0 %v2404
        %2486 = vmatpush1.msra.mxu0 %v2402
        %2487 = vmatprep.subr.mxu0 0.0
        %2488 = vmatpush1.msra.mxu0 0.0
        %2489 = vmatprep.subr.mxu0 0.0
        %2490 = vmatpush1.msra.mxu0 0.0
        %2491 = vmatprep.subr.mxu0 0.0
        %2492 = vmatpush1.msra.mxu0 0.0
        %2493 = vmatprep.subr.mxu0 0.0
        %2494 = vmatpush1.msra.mxu0 0.0
        %2495 = vmatprep.subr.mxu0 0.0
        %2496 = vmatpush1.msra.mxu0 0.0
        %2497 = vmatprep.subr.mxu0 0.0
        %2498 = vmatpush1.msra.mxu0 0.0
        %2499 = vmatprep.subr.mxu0 0.0
        %2500 = vmatpush1.msra.mxu0 0.0
        %2501 = vmatprep.subr.mxu0 0.0
        %2502 = vmatpush1.msra.mxu0 0.0
        %2503 = vmatprep.subr.mxu0 0.0
        %2504 = vmatpush1.msra.mxu0 0.0
        %2505 = vmatprep.subr.mxu0 0.0
        %2506 = vmatpush1.msra.mxu0 0.0
        %2507 = vmatprep.subr.mxu0 0.0
        %2508 = vmatpush1.msra.mxu0 0.0
        %2509 = vmatprep.subr.mxu0 0.0
        %2510 = vmatpush1.msra.mxu0 0.0
        %2511 = vmatprep.subr.mxu0 0.0
        %2512 = vmatpush1.msra.mxu0 0.0
        %2513 = vmatprep.subr.mxu0 0.0
        %2514 = vmatpush1.msra.mxu0 0.0
        %2515 = vmatprep.subr.mxu0 0.0
        %2516 = vmatpush1.msra.mxu0 0.0
        %2517 = vmatprep.subr.mxu0 0.0
        %2518 = vmatpush1.msra.mxu0 0.0
        %2519 = vmatprep.subr.mxu0 0.0
        %2520 = vmatpush1.msra.mxu0 0.0
        %2521 = vmatprep.subr.mxu0 0.0
        %2522 = vmatpush1.msra.mxu0 0.0
        %2523 = vmatprep.subr.mxu0 0.0
        %2524 = vmatpush1.msra.mxu0 0.0
        %2525 = vmatprep.subr.mxu0 0.0
        %2526 = vmatpush1.msra.mxu0 0.0
        %2527 = vmatprep.subr.mxu0 0.0
        %2528 = vmatpush1.msra.mxu0 0.0
        %2529 = vmatprep.subr.mxu0 0.0
        %2530 = vmatpush1.msra.mxu0 0.0
        %2531 = vmatprep.subr.mxu0 0.0
        %2532 = vmatpush1.msra.mxu0 0.0
        %2533 = vmatprep.subr.mxu0 0.0
        %2534 = vmatpush1.msra.mxu0 0.0
        %2535 = vmatprep.subr.mxu0 0.0
        %2536 = vmatpush1.msra.mxu0 0.0
        %2537 = vmatprep.subr.mxu0 0.0
        %2538 = vmatpush1.msra.mxu0 0.0
        %2539 = vmatprep.subr.mxu0 0.0
        %2540 = vmatpush1.msra.mxu0 0.0
        %2541 = vmatprep.subr.mxu0 0.0
        %2542 = vmatpush1.msra.mxu0 0.0
        %2543 = vmatprep.subr.mxu0 0.0
        %2544 = vmatpush1.msra.mxu0 0.0
        %2545 = vmatprep.subr.mxu0 0.0
        %2546 = vmatpush1.msra.mxu0 0.0
        %2547 = vmatprep.subr.mxu0 0.0
        %2548 = vmatpush1.msra.mxu0 0.0
        %2549 = vmatprep.mubr.f32.mxu0 0.0
        %2550 = vmatmul.mubr.f32.gmra.mrb[0].mxu0 %v2396
        %v2551 = vpop.f32.mrb[0].mxu0
        %v2552 = vadd.f32 0.0, %v2551
        %v2553 = vpop.f32.mrb[0].mxu0
        %v2554 = vadd.f32 0.0, %v2553
        %2555 = vdwg.mxu0
        %2556 = vmatprep.subr.mxu0 %v2408
        %2557 = vmatpush1.msra.mxu0 %v2406
        %2558 = vmatprep.subr.mxu0 0.0
        %2559 = vmatpush1.msra.mxu0 0.0
        %2560 = vmatprep.subr.mxu0 0.0
        %2561 = vmatpush1.msra.mxu0 0.0
        %2562 = vmatprep.subr.mxu0 0.0
        %2563 = vmatpush1.msra.mxu0 0.0
        %2564 = vmatprep.subr.mxu0 0.0
        %2565 = vmatpush1.msra.mxu0 0.0
        %2566 = vmatprep.subr.mxu0 0.0
        %2567 = vmatpush1.msra.mxu0 0.0
        %2568 = vmatprep.subr.mxu0 0.0
        %2569 = vmatpush1.msra.mxu0 0.0
        %2570 = vmatprep.subr.mxu0 0.0
        %2571 = vmatpush1.msra.mxu0 0.0
        %2572 = vmatprep.subr.mxu0 0.0
        %2573 = vmatpush1.msra.mxu0 0.0
        %2574 = vmatprep.subr.mxu0 0.0
        %2575 = vmatpush1.msra.mxu0 0.0
        %2576 = vmatprep.subr.mxu0 0.0
        %2577 = vmatpush1.msra.mxu0 0.0
        %2578 = vmatprep.subr.mxu0 0.0
        %2579 = vmatpush1.msra.mxu0 0.0
        %2580 = vmatprep.subr.mxu0 0.0
        %2581 = vmatpush1.msra.mxu0 0.0
        %2582 = vmatprep.subr.mxu0 0.0
        %2583 = vmatpush1.msra.mxu0 0.0
        %2584 = vmatprep.subr.mxu0 0.0
        %2585 = vmatpush1.msra.mxu0 0.0
        %2586 = vmatprep.subr.mxu0 0.0
        %2587 = vmatpush1.msra.mxu0 0.0
        %2588 = vmatprep.subr.mxu0 0.0
        %2589 = vmatpush1.msra.mxu0 0.0
        %2590 = vmatprep.subr.mxu0 0.0
        %2591 = vmatpush1.msra.mxu0 0.0
        %2592 = vmatprep.subr.mxu0 0.0
        %2593 = vmatpush1.msra.mxu0 0.0
        %2594 = vmatprep.subr.mxu0 0.0
        %2595 = vmatpush1.msra.mxu0 0.0
        %2596 = vmatprep.subr.mxu0 0.0
        %2597 = vmatpush1.msra.mxu0 0.0
        %2598 = vmatprep.subr.mxu0 0.0
        %2599 = vmatpush1.msra.mxu0 0.0
        %2600 = vmatprep.subr.mxu0 0.0
        %2601 = vmatpush1.msra.mxu0 0.0
        %2602 = vmatprep.subr.mxu0 0.0
        %2603 = vmatpush1.msra.mxu0 0.0
        %2604 = vmatprep.subr.mxu0 0.0
        %2605 = vmatpush1.msra.mxu0 0.0
        %2606 = vmatprep.subr.mxu0 0.0
        %2607 = vmatpush1.msra.mxu0 0.0
        %2608 = vmatprep.subr.mxu0 0.0
        %2609 = vmatpush1.msra.mxu0 0.0
        %2610 = vmatprep.subr.mxu0 0.0
        %2611 = vmatpush1.msra.mxu0 0.0
        %2612 = vmatprep.subr.mxu0 0.0
        %2613 = vmatpush1.msra.mxu0 0.0
        %2614 = vmatprep.subr.mxu0 0.0
        %2615 = vmatpush1.msra.mxu0 0.0
        %2616 = vmatprep.subr.mxu0 0.0
        %2617 = vmatpush1.msra.mxu0 0.0
        %2618 = vmatprep.subr.mxu0 0.0
        %2619 = vmatpush1.msra.mxu0 0.0
        %2620 = vmatprep.mubr.f32.mxu0 0.0
        %2621 = vmatmul.mubr.f32.gmra.mrb[0].mxu0 %v2396
        %v2622 = vpop.f32.mrb[0].mxu0
        %v2623 = vadd.f32 0.0, %v2622
        %v2624 = vpop.f32.mrb[0].mxu0
        %v2625 = vadd.f32 0.0, %v2624
        %2626 = vdwg.mxu0
        %2627 = vmatprep.subr.mxu0 %v2412
        %2628 = vmatpush1.msra.mxu0 %v2410
        %2629 = vmatprep.subr.mxu0 0.0
        %2630 = vmatpush1.msra.mxu0 0.0
        %2631 = vmatprep.subr.mxu0 0.0
        %2632 = vmatpush1.msra.mxu0 0.0
        %2633 = vmatprep.subr.mxu0 0.0
        %2634 = vmatpush1.msra.mxu0 0.0
        %2635 = vmatprep.subr.mxu0 0.0
        %2636 = vmatpush1.msra.mxu0 0.0
        %2637 = vmatprep.subr.mxu0 0.0
        %2638 = vmatpush1.msra.mxu0 0.0
        %2639 = vmatprep.subr.mxu0 0.0
        %2640 = vmatpush1.msra.mxu0 0.0
        %2641 = vmatprep.subr.mxu0 0.0
        %2642 = vmatpush1.msra.mxu0 0.0
        %2643 = vmatprep.subr.mxu0 0.0
        %2644 = vmatpush1.msra.mxu0 0.0
        %2645 = vmatprep.subr.mxu0 0.0
        %2646 = vmatpush1.msra.mxu0 0.0
        %2647 = vmatprep.subr.mxu0 0.0
        %2648 = vmatpush1.msra.mxu0 0.0
        %2649 = vmatprep.subr.mxu0 0.0
        %2650 = vmatpush1.msra.mxu0 0.0
        %2651 = vmatprep.subr.mxu0 0.0
        %2652 = vmatpush1.msra.mxu0 0.0
        %2653 = vmatprep.subr.mxu0 0.0
        %2654 = vmatpush1.msra.mxu0 0.0
        %2655 = vmatprep.subr.mxu0 0.0
        %2656 = vmatpush1.msra.mxu0 0.0
        %2657 = vmatprep.subr.mxu0 0.0
        %2658 = vmatpush1.msra.mxu0 0.0
        %2659 = vmatprep.subr.mxu0 0.0
        %2660 = vmatpush1.msra.mxu0 0.0
        %2661 = vmatprep.subr.mxu0 0.0
        %2662 = vmatpush1.msra.mxu0 0.0
        %2663 = vmatprep.subr.mxu0 0.0
        %2664 = vmatpush1.msra.mxu0 0.0
        %2665 = vmatprep.subr.mxu0 0.0
        %2666 = vmatpush1.msra.mxu0 0.0
        %2667 = vmatprep.subr.mxu0 0.0
        %2668 = vmatpush1.msra.mxu0 0.0
        %2669 = vmatprep.subr.mxu0 0.0
        %2670 = vmatpush1.msra.mxu0 0.0
        %2671 = vmatprep.subr.mxu0 0.0
        %2672 = vmatpush1.msra.mxu0 0.0
        %2673 = vmatprep.subr.mxu0 0.0
        %2674 = vmatpush1.msra.mxu0 0.0
        %2675 = vmatprep.subr.mxu0 0.0
        %2676 = vmatpush1.msra.mxu0 0.0
        %2677 = vmatprep.subr.mxu0 0.0
        %2678 = vmatpush1.msra.mxu0 0.0
        %2679 = vmatprep.subr.mxu0 0.0
        %2680 = vmatpush1.msra.mxu0 0.0
        %2681 = vmatprep.subr.mxu0 0.0
        %2682 = vmatpush1.msra.mxu0 0.0
        %2683 = vmatprep.subr.mxu0 0.0
        %2684 = vmatpush1.msra.mxu0 0.0
        %2685 = vmatprep.subr.mxu0 0.0
        %2686 = vmatpush1.msra.mxu0 0.0
        %2687 = vmatprep.subr.mxu0 0.0
        %2688 = vmatpush1.msra.mxu0 0.0
        %2689 = vmatprep.subr.mxu0 0.0
        %2690 = vmatpush1.msra.mxu0 0.0
        %2691 = vmatprep.mubr.f32.mxu0 0.0
        %2692 = vmatmul.mubr.f32.gmra.mrb[0].mxu0 %v2396
        %v2693 = vpop.f32.mrb[0].mxu0
        %v2694 = vadd.f32 0.0, %v2693
        %v2695 = vpop.f32.mrb[0].mxu0
        %v2696 = vadd.f32 0.0, %v2695
        %2697 = vdwg.mxu0
        %v2698 = vadd.f32 %v2151, %v2481
        %v2699 = vadd.f32 %v2153, %v2483
        %v2700 = vadd.f32 %v2222, %v2552
        %v2701 = vadd.f32 %v2224, %v2554
        %v2702 = vadd.f32 %v2293, %v2623
        %v2703 = vadd.f32 %v2295, %v2625
        %v2704 = vadd.f32 %v2364, %v2694
        %v2705 = vadd.f32 %v2366, %v2696
        %v2706 = vld [vmem:[%s7] sm:$0xff]
        %2708 = vset.pattern.permute.xlu0 0
        %2709 = vperm.xlu0 %2708, %v2706
        %v2710 = vpop.permute.xlu0 %2709
        %v2712 = vadd.f32 %v2698, %v2710
        %v2713 = vadd.f32 %v2699, %v2710
        %v2714 = vadd.f32 %v2700, %v2710
        %v2715 = vadd.f32 %v2701, %v2710
        %v2716 = vadd.f32 %v2702, %v2710
        %v2717 = vadd.f32 %v2703, %v2710
        %v2718 = vadd.f32 %v2704, %v2710
        %v2719 = vadd.f32 %v2705, %v2710
        %2720 = vst [vmem:[%s364] sm:$0xff] %v2712
        %2721 = vst [vmem:[%s364 + $0x8] sm:$0xff] %v2713
        %2722 = vst [vmem:[%s364 + $0x10] sm:$0xff] %v2714
        %2723 = vst [vmem:[%s364 + $0x18] sm:$0xff] %v2715
        %2724 = vst [vmem:[%s364 + $0x20] sm:$0xff] %v2716
        %2725 = vst [vmem:[%s364 + $0x28] sm:$0xff] %v2717
        %2726 = vst [vmem:[%s364 + $0x30] sm:$0xff] %v2718
        %2727 = vst [vmem:[%s364 + $0x38] sm:$0xff] %v2719
        %v2728 = vadd.f32 %v2712, %v2713
        %v2729 = vadd.f32 %v2728, %v2714
        %v2730 = vadd.f32 %v2729, %v2715
        %v2731 = vadd.f32 %v2730, %v2716
        %v2732 = vadd.f32 %v2731, %v2717
        %v2733 = vadd.f32 %v2732, %v2718
        %v2734 = vadd.f32 %v2733, %v2719
        %2735 = vadd.xlane.f32.xlu0 %v2734
        %v2736 = vpop.xlane.xlu0 %2735
        %v2737 = vmul.f32 %v2712, %v2712
        %v2738 = vmul.f32 %v2713, %v2713
        %v2739 = vmul.f32 %v2714, %v2714
        %v2740 = vmul.f32 %v2715, %v2715
        %v2741 = vmul.f32 %v2716, %v2716
        %v2742 = vmul.f32 %v2717, %v2717
        %v2743 = vmul.f32 %v2718, %v2718
        %v2744 = vmul.f32 %v2719, %v2719
        %v2745 = vadd.f32 %v2737, %v2738
        %v2746 = vadd.f32 %v2745, %v2739
        %v2747 = vadd.f32 %v2746, %v2740
        %v2748 = vadd.f32 %v2747, %v2741
        %v2749 = vadd.f32 %v2748, %v2742
        %v2750 = vadd.f32 %v2749, %v2743
        %v2751 = vadd.f32 %v2750, %v2744
        %2752 = vadd.xlane.f32.xlu0 %v2751
        %v2753 = vpop.xlane.xlu0 %2752
        %v2754 = vsel %vm1722, %v2736, %v2753
        // Predicated region
        $region53: #{res_convblock.4} parent=51 // pred_check
          %p2755 = pneg %p1700
        $region54: #{res_convblock.4} parent=51 // pred_check_branch
          %2757 = sbr.rel (%p2755) target = $region56
        $region55: #{res_convblock.4} parent=51 // pred_region
          %2758 = vst.msk [vmem:[%s389] sm:$0xff] %vm421, %v2754
        $region56: #{res_convblock.4} parent=51 // pred_fallthru
          _
        %p2759 = scmp.gt.s32.totalorder %s29, 0
        // Predicated region
        $region57: #{res_convblock.4} parent=51 // pred_check
          %p2760 = pneg %p2759
        $region58: #{res_convblock.4} parent=51 // pred_check_branch
          %2762 = sbr.rel (%p2760) target = $region60
        $region59: #{res_convblock.4} parent=51 // pred_region
          %v2763 = vld [vmem:[%s389] sm:$0xff]
          %v2764 = vadd.f32 %v2763, %v2754
          %2765 = vst.msk [vmem:[%s389] sm:$0xff] %vm421, %v2764
        $region60: #{res_convblock.4} parent=51 // pred_fallthru
          _
        %s2766 = sand.u32 %s226, 1
        %s2767 = scalar_lea.sflag [#allocation3], %s2766
        %s2768 = sand.u32 %s226, 1
        %s2769 = smul.addr %s2768, 64
        %s2770 = scalar_lea.vmem [#allocation2], %s2769
        %p2771 = scmp.lt.s32.totalorder %s28, 1
        %s2772 = scalar_select %p2771, %s28, 1
        %s2773 = smul.addr %s2772, 8
        %s2774 = scalar_lea.vmem %s9, %s2773
        // Predicated region
        $region61: #{res_convblock.4} parent=51 // pred_check
          %p2775 = pneg %p236
        $region62: #{res_convblock.4} parent=51 // pred_check_branch
          %2777 = sbr.rel (%p2775) target = $region64
        $region63: #{res_convblock.4} parent=51 // pred_region
          %s2778 = smul.u32 8, %s29
          %s2780 = ssub.s32 1024, 1024
          %2781 = vsyncadd %s2767, %s2780
          %s2782 = smul.addr %s28, 8
          %s2783 = sadd.s32 %s2778, %s2782
          %s2784 = smul.addr %s2783, 128
          %s2785 = scalar_lea.hbm %s8, %s2784
          %s2787 = sshll.u32 %s2770, 4
          %s2788 = int_to_ptr.vmem [resolvable:$true] %s2787
          %2790 = dma.vmem_to_hbm [thread:$0]  %s2788, 1024, %s2785, %s2767
        $region64: #{res_convblock.4} parent=51 // pred_fallthru
          _
        // Predicated region
        $region65: #{res_convblock.4} parent=51 // pred_check
          %p2791 = pneg %p262
        $region66: #{res_convblock.4} parent=51 // pred_check_branch
          %2793 = sbr.rel (%p2791) target = $region68
        $region67: #{res_convblock.4} parent=51 // pred_region
          _
        $region68: #{res_convblock.4} parent=51 // pred_fallthru
          _
      $region52: #{res_convblock.4} parent=5 // pred_fallthru
        _
      %p2794 = scmp.le.s32.totalorder 2, %s19
      // Predicated region
      $region69: #{res_convblock.4} parent=5 // pred_check
        %p2795 = pneg %p2794
      $region70: #{res_convblock.4} parent=5 // pred_check_branch
        %2797 = sbr.rel (%p2795) target = $region72
      $region71: #{res_convblock.4} parent=5 // pred_region
        %s2798 = ssub.s32 %s19, 2
        // Predicated region
        $region73: #{res_convblock.4} parent=71 // pred_check
          %p2799 = pneg %p242
        $region74: #{res_convblock.4} parent=71 // pred_check_branch
          %2801 = sbr.rel (%p2799) target = $region76
        $region75: #{res_convblock.4} parent=71 // pred_region
          %s2802 = sand.u32 %s227, 1
          %s2803 = scalar_lea.sflag [#allocation3], %s2802
          %s2804 = sand.u32 %s227, 1
          %s2805 = smul.addr %s2804, 64
          %s2806 = scalar_lea.vmem [#allocation2], %s2805
          %2807 = dma.done %s2803, 1024
        $region76: #{res_convblock.4} parent=71 // pred_fallthru
          _
        // Predicated region
        $region77: #{res_convblock.4} parent=71 // pred_check
          %p2808 = pneg %p268
        $region78: #{res_convblock.4} parent=71 // pred_check_branch
          %2810 = sbr.rel (%p2808) target = $region80
        $region79: #{res_convblock.4} parent=71 // pred_region
          %p2811 = scmp.lt.s32.totalorder %s30, 1
          %s2812 = scalar_select %p2811, %s30, 1
          %s2813 = smul.addr %s2812, 8
          %s2814 = scalar_lea.vmem %s9, %s2813
        $region80: #{res_convblock.4} parent=71 // pred_fallthru
          _
      $region72: #{res_convblock.4} parent=5 // pred_fallthru
        _
    $region6: #{res_convblock.4} parent=1 // loop_footer
      %s23 = sadd.s32 1, %s19
    $region7: #{res_convblock.4} parent=1 // loop_footer_branch
      %18 = sbr.rel target = $region3
    $region8: #{res_convblock.4} parent=1 // loop_exit
      _
    %2815 = vsyncpa [#allocation3], 1
    %s2816 = scalar_lea.sflag [#allocation3], 1
    %2817 = vsyncpa %s2816, 1

</llo_original>
